<compile_context>
chip_gen: v6e
topology: v6e:2x2x1
jax: 0.10.0
libtpu: 0.0.40
codegen_flags: <defaults>
</compile_context>

<pallas_src>
import jax
import jax.numpy as jnp
from jax import lax
from jax.experimental import pallas as pl
from jax.experimental.pallas import tpu as pltpu

START_TAG = "<START>"
STOP_TAG = "<STOP>"


def _vmem_specs(n):
    return [pl.BlockSpec(memory_space=pltpu.MemorySpace.VMEM) for _ in range(n)]


# ------------------------------ fused forward kernel ------------------------------
def bilstm_crf_kernel(
        # inputs (14)
        cols_ref, wconv_ref, bconv_ref, wemb_ref,
        wih_ref, whh_ref, b_ref,
        h0_ref, c0_ref,
        h2t_w_ref, h2t_b_ref,
        trans_ref, init_ref, stop_ref,
        # outputs (2)
        term_ref, path_ref,
        # scratch (2)
        xg_ref, out_ref):
    W, B, E = wemb_ref.shape
    H8 = wih_ref.shape[1]          # fused gate width = 8 * (hidden_dim // 2) = 128
    H = H8 // 8
    H2, H3, H4 = 2 * H, 3 * H, 4 * H
    Tp = trans_ref.shape[0]
    N = W * B
    C = cols_ref.shape[0] // N
    Cout = wconv_ref.shape[1]
    f32 = jnp.float32

    # ---- Stage 1: char CNN — one im2col matmul, fused ReLU + max over char positions ----
    conv = jnp.dot(cols_ref[...], wconv_ref[...], preferred_element_type=f32) + bconv_ref[...]
    conv = jnp.maximum(conv, 0.0)
    char_feat = jnp.max(conv.reshape(N, C, Cout), axis=1)            # (W*B, 32)
    x = wemb_ref[...] + char_feat.reshape(W, B, Cout)                # (W, B, E); E == 32

    # ---- Stage 2: input-gate contributions for BOTH directions / ALL timesteps in one
    #               (W*B, E) x (E, 8H) matmul; bias hoisted; lane-dense 128-wide store ----
    x2d = x.reshape(N, E)
    xg_ref[...] = (jnp.dot(x2d, wih_ref[...], preferred_element_type=f32)
                   + b_ref[...]).reshape(W, B, H8)

    # ---- Stage 3: fused bidirectional recurrence — ONE (B,2H)x(2H,8H) matmul per step ----
    whh_bd = whh_ref[...]                                             # block-diag (2H, 8H)

    def step(idx, carry):
        h_f, h_b, c_f, c_b = carry
        tf = idx
        tb = W - 1 - idx
        h2 = jnp.concatenate([h_f, h_b], axis=-1)                     # (B, 2H)
        g = jnp.dot(h2, whh_bd, preferred_element_type=f32)           # (B, 8H) = 128 lanes
        g_f = g[:, 0:H4] + xg_ref[tf, :, 0:H4]
        g_b = g[:, H4:H8] + xg_ref[tb, :, H4:H8]
        # gate order per direction: (i, f, o, g) -> one sigmoid over 3H + one tanh over H
        s_f = jax.nn.sigmoid(g_f[:, 0:H3])
        s_b = jax.nn.sigmoid(g_b[:, 0:H3])
        gg_f = jnp.tanh(g_f[:, H3:H4])
        gg_b = jnp.tanh(g_b[:, H3:H4])
        c_f = s_f[:, H:H2] * c_f + s_f[:, 0:H] * gg_f
        c_b = s_b[:, H:H2] * c_b + s_b[:, 0:H] * gg_b
        h_f = s_f[:, H2:H3] * jnp.tanh(c_f)
        h_b = s_b[:, H2:H3] * jnp.tanh(c_b)
        out_ref[tf, :, 0:H] = h_f                                     # forward half
        out_ref[tb, :, H:H2] = h_b                                    # backward half
        return (h_f, h_b, c_f, c_b)

    lax.fori_loop(0, W, step,
                  (h0_ref[0], h0_ref[1], c0_ref[0], c0_ref[1]), unroll=True)

    # ---- Stage 4: hidden2tag — single (W*B, 2H) x (2H, Tpad) matmul ---------------------
    feats = (jnp.dot(out_ref[...].reshape(N, H2), h2t_w_ref[...],
                     preferred_element_type=f32) + h2t_b_ref[...])
    feats3 = feats.reshape(W, B, Tp)

    # ---- Stage 5: Viterbi forward recursion, backpointers kept in vregs -----------------
    trans = trans_ref[...]
    idx3 = lax.broadcasted_iota(jnp.int32, (B, Tp, Tp), 2)            # hoisted out of loop
    fv = init_ref[...]
    bps = []
    for t in range(W):                                                # fully static / unrolled
        # ntv[b, next, prev] = fv[b, prev] + trans[next, prev]
        ntv = fv[:, None, :] + trans[None, :, :]                      # (B, Tp, Tp)
        m = jnp.max(ntv, axis=-1)                                     # (B, Tp)
        bp = jnp.min(jnp.where(ntv >= m[:, :, None], idx3, Tp),
                     axis=-1).astype(jnp.int32)                       # first-max index
        bps.append(bp)
        fv = m + feats3[t]
    term = fv + stop_ref[...]
    term_ref[...] = term

    # ---- Stage 6: terminal argmax + in-kernel backtrace (vreg-resident, static) ---------
    lane = lax.broadcasted_iota(jnp.int32, (B, Tp), 1)
    tmax = jnp.max(term, axis=-1, keepdims=True)
    bt = jnp.min(jnp.where(term >= tmax, lane, Tp),
                 axis=-1, keepdims=True).astype(jnp.int32)            # (B, 1) best terminal tag
    cols = [bt]                                                       # path[W] = terminal tag
    for t in range(W - 1, -1, -1):
        bt = jnp.sum(jnp.where(lane == bt, bps[t], 0),
                     axis=-1, keepdims=True).astype(jnp.int32)        # bt <- bp[t][bt]
        cols.append(bt)
    path_ref[...] = jnp.concatenate(cols[::-1], axis=-1)              # (B, W+1)


# ----------------------------------- parameters -----------------------------------
def init_params(key, vocab_size, char_vocab, emb_dim, hidden_dim, tagset_size,
                tagset_pad, batch_size, start_idx, stop_idx):
    H = hidden_dim // 2
    keys = jax.random.split(key, 12)

    def rnd(k, shape, scale=0.1):
        return jax.random.normal(k, shape, jnp.float32) * scale

    char_emb = rnd(keys[0], (char_vocab, 64)).at[0].set(0.0)          # padding_idx=0
    conv_w_torch = rnd(keys[1], (32, 64, 3))                          # torch (out, in, k)
    # im2col weight: W_col[k*Cin + ci, co] = w_torch[co, ci, k]
    conv_w_col = jnp.transpose(conv_w_torch, (2, 1, 0)).reshape(3 * 64, 32)
    conv_b = rnd(keys[2], (1, 32))
    word_emb = rnd(keys[3], (vocab_size, emb_dim)).at[0].set(0.0)     # padding_idx=0

    # torch gate-row order is (i, f, g, o); reorder blocks to (i, f, o, g) so the kernel
    # applies one sigmoid over a contiguous 3H slice and one tanh over the trailing H.
    perm = jnp.concatenate([jnp.arange(0, H), jnp.arange(H, 2 * H),
                            jnp.arange(3 * H, 4 * H), jnp.arange(2 * H, 3 * H)])

    def lstm_dir(k):
        k1, k2, k3, k4 = jax.random.split(k, 4)
        w_ih = rnd(k1, (4 * H, emb_dim))                              # torch layout (4H, E)
        w_hh = rnd(k2, (4 * H, H))
        b_ih = rnd(k3, (4 * H,))
        b_hh = rnd(k4, (4 * H,))
        w_ih = w_ih[perm]
        w_hh = w_hh[perm]
        b = (b_ih + b_hh)[perm]
        return w_ih.T, w_hh.T, b.reshape(1, 4 * H)                    # (E,4H), (H,4H), (1,4H)

    wih_f, whh_f, b_f = lstm_dir(keys[4])
    wih_b, whh_b, b_b = lstm_dir(keys[5])
    # fused input weight / bias: one (E, 8H) = (32, 128) matmul produces both directions
    wih_fused = jnp.concatenate([wih_f, wih_b], axis=1)               # (E, 8H)
    b_fused = jnp.concatenate([b_f, b_b], axis=1)                     # (1, 8H)
    # block-diagonal recurrent weight: (2H, 8H); forward rows feed fwd gates, backward rows
    # feed bwd gates -> one per-step matmul with a 128-lane result.
    whh_bd = jnp.zeros((2 * H, 8 * H), jnp.float32)
    whh_bd = whh_bd.at[0:H, 0:4 * H].set(whh_f)
    whh_bd = whh_bd.at[H:2 * H, 4 * H:8 * H].set(whh_b)

    # NOTE: torch's init_hidden() draws fresh randn per forward call; here drawn once.
    h0 = jax.random.normal(keys[6], (2, batch_size, H), jnp.float32)
    c0 = jax.random.normal(keys[7], (2, batch_size, H), jnp.float32)

    h2t_w_torch = rnd(keys[8], (tagset_size, hidden_dim))             # torch (out, in)
    h2t_w = jnp.zeros((hidden_dim, tagset_pad), jnp.float32).at[:, :tagset_size].set(h2t_w_torch.T)
    h2t_b = jnp.zeros((1, tagset_pad), jnp.float32).at[:, :tagset_size].set(
        rnd(keys[9], (1, tagset_size)))

    trans = jax.random.normal(keys[10], (tagset_size, tagset_size), jnp.float32)
    trans = trans.at[start_idx, :].set(-10000.0)
    trans = trans.at[:, stop_idx].set(-10000.0)
    # padded tags are unreachable: -1e4 into/out of them everywhere
    trans_pad = jnp.full((tagset_pad, tagset_pad), -10000.0,
                         jnp.float32).at[:tagset_size, :tagset_size].set(trans)

    return dict(char_emb=char_emb, conv_w_col=conv_w_col, conv_b=conv_b, word_emb=word_emb,
                wih_fused=wih_fused, whh_bd=whh_bd, b_fused=b_fused,
                h0=h0, c0=c0, h2t_w=h2t_w, h2t_b=h2t_b, trans_pad=trans_pad)


# ------------------------------------ forward ------------------------------------
def bilstm_crf_forward(params, sentence, chars, start_idx, stop_idx, tagset_size):
    B, W = sentence.shape
    C = chars.shape[-1]
    Tpad = params["trans_pad"].shape[0]
    H = params["whh_bd"].shape[0] // 2

    # --- XLA glue: embedding gathers + im2col layout (gathers stay outside Pallas) ---
    chars_tm = jnp.transpose(chars, (1, 0, 2)).reshape(W * B, C)          # time-major words
    ce = jnp.take(params["char_emb"], chars_tm, axis=0)                   # (W*B, C, 64)
    ce = jnp.pad(ce, ((0, 0), (1, 1), (0, 0)))                            # Conv1d padding=1
    cols = jnp.concatenate(
        [ce[:, 0:C, :], ce[:, 1:C + 1, :], ce[:, 2:C + 2, :]], axis=-1
    ).reshape(W * B * C, 3 * 64)                                          # im2col (W*B*C, 192)

    wemb_tm = jnp.take(params["word_emb"], jnp.transpose(sentence), axis=0)   # (W, B, E)

    init = jnp.full((B, Tpad), -10000.0, jnp.float32).at[:, start_idx].set(0.0)
    stop_row = params["trans_pad"][stop_idx][None, :]                     # (1, Tpad)

    term, path = pl.pallas_call(
        bilstm_crf_kernel,
        out_shape=(jax.ShapeDtypeStruct((B, Tpad), jnp.float32),
                   jax.ShapeDtypeStruct((B, W + 1), jnp.int32)),
        in_specs=_vmem_specs(14),
        out_specs=tuple(_vmem_specs(2)),
        scratch_shapes=[
            pltpu.VMEM((W, B, 8 * H), jnp.float32),   # xg: x@Wih_fused + b (128-lane rows)
            pltpu.VMEM((W, B, 2 * H), jnp.float32),   # merged fwd/bwd hidden states
        ],
    )(cols, params["conv_w_col"], params["conv_b"], wemb_tm,
      params["wih_fused"], params["whh_bd"], params["b_fused"],
      params["h0"], params["c0"],
      params["h2t_w"], params["h2t_b"],
      params["trans_pad"], init, stop_row)

    term = term[:, :tagset_size]
    best_tag = jnp.argmax(term, axis=-1)                # (B,)
    # torch does terminal_var[:, best_tag_id] -> (B, B); diag(path_score) = per-seq score.
    path_score = term[:, best_tag]
    start = path[:, 0]
    tag_seq = path[:, 1:]
    return path_score, tag_seq, start


# -------------------------------------- main --------------------------------------
if __name__ == "__main__":
    tag_to_ix = {"<PAD>": 0, "B": 1, "I": 2, "O": 3, START_TAG: 4, STOP_TAG: 5}
    T = len(tag_to_ix)
    TPAD = max(8, ((T + 7) // 8) * 8)                   # lane-friendlier padded tag dim
    vocab_size, char_vocab = 50, 30
    embedding_dim, hidden_dim = 32, 32                  # embedding_dim must equal 32 (char feat dim)
    B, W, C = 2, 8, 8

    key = jax.random.PRNGKey(0)
    k_params, k_sent, k_chars = jax.random.split(key, 3)
    params = init_params(k_params, vocab_size, char_vocab, embedding_dim, hidden_dim,
                         T, TPAD, B, tag_to_ix[START_TAG], tag_to_ix[STOP_TAG])

    sentence = jax.random.randint(k_sent, (B, W), 1, vocab_size, dtype=jnp.int32)
    chars = jax.random.randint(k_chars, (B, W, C), 0, char_vocab, dtype=jnp.int32)

    forward = jax.jit(bilstm_crf_forward, static_argnums=(3, 4, 5))
    score, tag_seq, start = forward(params, sentence, chars,
                                    tag_to_ix[START_TAG], tag_to_ix[STOP_TAG], T)
    jax.block_until_ready((score, tag_seq, start))

    assert score.shape == (B, B) and tag_seq.shape == (B, W)
    assert bool(jnp.all(tag_seq < T)) and bool(jnp.all(tag_seq >= 0))
    assert bool(jnp.all(start == tag_to_ix[START_TAG])), \
        "some sequences don't start with START_TAG!"
    print("KERNEL_OK")
</pallas_src>

<mosaic_0001>
module attributes {stable_mosaic.version = 11 : i64} {
  func.func @bilstm_crf_kernel(%arg0: memref<128x192xf32, #tpu.memory_space<vmem>>, %arg1: memref<192x32xf32, #tpu.memory_space<vmem>>, %arg2: memref<1x32xf32, #tpu.memory_space<vmem>>, %arg3: memref<8x2x32xf32, #tpu.memory_space<vmem>>, %arg4: memref<32x128xf32, #tpu.memory_space<vmem>>, %arg5: memref<32x128xf32, #tpu.memory_space<vmem>>, %arg6: memref<1x128xf32, #tpu.memory_space<vmem>>, %arg7: memref<2x2x16xf32, #tpu.memory_space<vmem>>, %arg8: memref<2x2x16xf32, #tpu.memory_space<vmem>>, %arg9: memref<32x8xf32, #tpu.memory_space<vmem>>, %arg10: memref<1x8xf32, #tpu.memory_space<vmem>>, %arg11: memref<8x8xf32, #tpu.memory_space<vmem>>, %arg12: memref<2x8xf32, #tpu.memory_space<vmem>>, %arg13: memref<1x8xf32, #tpu.memory_space<vmem>>, %arg14: memref<2x8xf32, #tpu.memory_space<vmem>>, %arg15: memref<2x9xi32, #tpu.memory_space<vmem>>, %arg16: memref<8x2x128xf32, #tpu.memory_space<vmem>>, %arg17: memref<8x2x32xf32, #tpu.memory_space<vmem>>) attributes {dimension_semantics = [], scalar_prefetch = 0 : i64, scratch_operands = 2 : i64, tpu.core_type = #tpu.core_type<tc>} {
    %c0 = arith.constant 0 : index
    %c0_0 = arith.constant 0 : index
    %0 = vector.load %arg0[%c0, %c0_0] : memref<128x192xf32, #tpu.memory_space<vmem>>, vector<128x192xf32>
    %c0_1 = arith.constant 0 : index
    %c0_2 = arith.constant 0 : index
    %1 = vector.load %arg1[%c0_1, %c0_2] : memref<192x32xf32, #tpu.memory_space<vmem>>, vector<192x32xf32>
    %cst = arith.constant dense<0.000000e+00> : vector<128x32xf32>
    %2 = tpu.matmul %0, %1, %cst {dimension_numbers = #tpu.dot_dimension_numbers<[1], [0], [0], [1], [0, 0, 1, 1], [], []>} : vector<128x192xf32>, vector<192x32xf32>, vector<128x32xf32> -> vector<128x32xf32>
    %c0_3 = arith.constant 0 : index
    %c0_4 = arith.constant 0 : index
    %3 = vector.load %arg2[%c0_3, %c0_4] : memref<1x32xf32, #tpu.memory_space<vmem>>, vector<1x32xf32>
    %4 = vector.broadcast %3 : vector<1x32xf32> to vector<128x32xf32>
    %5 = arith.addf %2, %4 : vector<128x32xf32>
    %cst_5 = arith.constant 0.000000e+00 : f32
    %6 = vector.broadcast %cst_5 : f32 to vector<128x32xf32>
    %7 = arith.maximumf %5, %6 : vector<128x32xf32>
    %8 = vector.shape_cast %7 : vector<128x32xf32> to vector<16x8x32xf32>
    %cst_6 = arith.constant dense<0xFF800000> : vector<16x32xf32>
    %9 = vector.multi_reduction <maximumf>, %8, %cst_6 [1] : vector<16x8x32xf32> to vector<16x32xf32>
    %c0_7 = arith.constant 0 : index
    %c0_8 = arith.constant 0 : index
    %c0_9 = arith.constant 0 : index
    %10 = vector.load %arg3[%c0_7, %c0_8, %c0_9] : memref<8x2x32xf32, #tpu.memory_space<vmem>>, vector<8x2x32xf32>
    %11 = vector.shape_cast %9 : vector<16x32xf32> to vector<8x2x32xf32>
    %12 = arith.addf %10, %11 : vector<8x2x32xf32>
    %13 = vector.shape_cast %12 : vector<8x2x32xf32> to vector<16x32xf32>
    %c0_10 = arith.constant 0 : index
    %c0_11 = arith.constant 0 : index
    %14 = vector.load %arg4[%c0_10, %c0_11] : memref<32x128xf32, #tpu.memory_space<vmem>>, vector<32x128xf32>
    %cst_12 = arith.constant dense<0.000000e+00> : vector<16x128xf32>
    %15 = tpu.matmul %13, %14, %cst_12 {dimension_numbers = #tpu.dot_dimension_numbers<[1], [0], [0], [1], [0, 0, 1, 1], [], []>} : vector<16x32xf32>, vector<32x128xf32>, vector<16x128xf32> -> vector<16x128xf32>
    %c0_13 = arith.constant 0 : index
    %c0_14 = arith.constant 0 : index
    %16 = vector.load %arg6[%c0_13, %c0_14] : memref<1x128xf32, #tpu.memory_space<vmem>>, vector<1x128xf32>
    %17 = vector.broadcast %16 : vector<1x128xf32> to vector<16x128xf32>
    %18 = arith.addf %15, %17 : vector<16x128xf32>
    %19 = vector.shape_cast %18 : vector<16x128xf32> to vector<8x2x128xf32>
    %c0_15 = arith.constant 0 : index
    %c0_16 = arith.constant 0 : index
    %c0_17 = arith.constant 0 : index
    %20 = vector.load %arg16[%c0_15, %c0_16, %c0_17] : memref<8x2x128xf32, #tpu.memory_space<vmem>>, vector<8x2x128xf32>
    tpu.vector_store %arg16[%c0_15, %c0_16, %c0_17], %19 {strides = array<i32>} : memref<8x2x128xf32, #tpu.memory_space<vmem>>, vector<8x2x128xf32>,
    %c0_18 = arith.constant 0 : index
    %c0_19 = arith.constant 0 : index
    %21 = vector.load %arg5[%c0_18, %c0_19] : memref<32x128xf32, #tpu.memory_space<vmem>>, vector<32x128xf32>
    %c0_20 = arith.constant 0 : index
    %c0_21 = arith.constant 0 : index
    %c0_22 = arith.constant 0 : index
    %22 = vector.load %arg7[%c0_20, %c0_21, %c0_22] : memref<2x2x16xf32, #tpu.memory_space<vmem>>, vector<1x2x16xf32>
    %23 = vector.shape_cast %22 : vector<1x2x16xf32> to vector<2x16xf32>
    %c1 = arith.constant 1 : index
    %c0_23 = arith.constant 0 : index
    %c0_24 = arith.constant 0 : index
    %24 = vector.load %arg7[%c1, %c0_23, %c0_24] : memref<2x2x16xf32, #tpu.memory_space<vmem>>, vector<1x2x16xf32>
    %25 = vector.shape_cast %24 : vector<1x2x16xf32> to vector<2x16xf32>
    %c0_25 = arith.constant 0 : index
    %c0_26 = arith.constant 0 : index
    %c0_27 = arith.constant 0 : index
    %26 = vector.load %arg8[%c0_25, %c0_26, %c0_27] : memref<2x2x16xf32, #tpu.memory_space<vmem>>, vector<1x2x16xf32>
    %27 = vector.shape_cast %26 : vector<1x2x16xf32> to vector<2x16xf32>
    %c1_28 = arith.constant 1 : index
    %c0_29 = arith.constant 0 : index
    %c0_30 = arith.constant 0 : index
    %28 = vector.load %arg8[%c1_28, %c0_29, %c0_30] : memref<2x2x16xf32, #tpu.memory_space<vmem>>, vector<1x2x16xf32>
    %29 = vector.shape_cast %28 : vector<1x2x16xf32> to vector<2x16xf32>
    %c0_i32 = arith.constant 0 : i32
    %c7_i32 = arith.constant 7 : i32
    %30 = arith.subi %c7_i32, %c0_i32 : i32
    %31 = tpu.concatenate %23, %25 in 1 : vector<2x16xf32>, vector<2x16xf32> -> vector<2x32xf32>
    %cst_31 = arith.constant dense<0.000000e+00> : vector<2x128xf32>
    %32 = tpu.matmul %31, %21, %cst_31 {dimension_numbers = #tpu.dot_dimension_numbers<[1], [0], [0], [1], [0, 0, 1, 1], [], []>} : vector<2x32xf32>, vector<32x128xf32>, vector<2x128xf32> -> vector<2x128xf32>
    %33 = vector.extract_strided_slice %32 {offsets = [0, 0], sizes = [2, 64], strides = [1, 1]} : vector<2x128xf32> to vector<2x64xf32>
    %34 = arith.index_cast %c0_i32 : i32 to index
    %c0_32 = arith.constant 0 : index
    %c0_33 = arith.constant 0 : index
    %35 = vector.load %arg16[%34, %c0_32, %c0_33] : memref<8x2x128xf32, #tpu.memory_space<vmem>>, vector<1x2x64xf32>
    %36 = vector.shape_cast %35 : vector<1x2x64xf32> to vector<2x64xf32>
    %37 = arith.addf %33, %36 : vector<2x64xf32>
    %38 = vector.extract_strided_slice %32 {offsets = [0, 64], sizes = [2, 64], strides = [1, 1]} : vector<2x128xf32> to vector<2x64xf32>
    %39 = arith.index_cast %30 : i32 to index
    %c0_34 = arith.constant 0 : index
    %c64 = arith.constant 64 : index
    %40 = vector.load %arg16[%39, %c0_34, %c64] : memref<8x2x128xf32, #tpu.memory_space<vmem>>, vector<1x2x64xf32>
    %41 = vector.shape_cast %40 : vector<1x2x64xf32> to vector<2x64xf32>
    %42 = arith.addf %38, %41 : vector<2x64xf32>
    %43 = vector.extract_strided_slice %37 {offsets = [0, 0], sizes = [2, 48], strides = [1, 1]} : vector<2x64xf32> to vector<2x48xf32>
    %44 = arith.negf %43 : vector<2x48xf32>
    %45 = math.exp %44 : vector<2x48xf32>
    %cst_35 = arith.constant 1.000000e+00 : f32
    %46 = vector.broadcast %cst_35 : f32 to vector<2x48xf32>
    %47 = arith.addf %46, %45 : vector<2x48xf32>
    %48 = arith.divf %46, %47 : vector<2x48xf32>
    %49 = vector.extract_strided_slice %42 {offsets = [0, 0], sizes = [2, 48], strides = [1, 1]} : vector<2x64xf32> to vector<2x48xf32>
    %50 = arith.negf %49 : vector<2x48xf32>
    %51 = math.exp %50 : vector<2x48xf32>
    %cst_36 = arith.constant 1.000000e+00 : f32
    %52 = vector.broadcast %cst_36 : f32 to vector<2x48xf32>
    %53 = arith.addf %52, %51 : vector<2x48xf32>
    %54 = arith.divf %52, %53 : vector<2x48xf32>
    %55 = vector.extract_strided_slice %37 {offsets = [0, 48], sizes = [2, 16], strides = [1, 1]} : vector<2x64xf32> to vector<2x16xf32>
    %56 = math.tanh %55 : vector<2x16xf32>
    %57 = vector.extract_strided_slice %42 {offsets = [0, 48], sizes = [2, 16], strides = [1, 1]} : vector<2x64xf32> to vector<2x16xf32>
    %58 = math.tanh %57 : vector<2x16xf32>
    %59 = vector.extract_strided_slice %48 {offsets = [0, 16], sizes = [2, 16], strides = [1, 1]} : vector<2x48xf32> to vector<2x16xf32>
    %60 = arith.mulf %59, %27 : vector<2x16xf32>
    %61 = vector.extract_strided_slice %48 {offsets = [0, 0], sizes = [2, 16], strides = [1, 1]} : vector<2x48xf32> to vector<2x16xf32>
    %62 = arith.mulf %61, %56 : vector<2x16xf32>
    %63 = arith.addf %60, %62 : vector<2x16xf32>
    %64 = vector.extract_strided_slice %54 {offsets = [0, 16], sizes = [2, 16], strides = [1, 1]} : vector<2x48xf32> to vector<2x16xf32>
    %65 = arith.mulf %64, %29 : vector<2x16xf32>
    %66 = vector.extract_strided_slice %54 {offsets = [0, 0], sizes = [2, 16], strides = [1, 1]} : vector<2x48xf32> to vector<2x16xf32>
    %67 = arith.mulf %66, %58 : vector<2x16xf32>
    %68 = arith.addf %65, %67 : vector<2x16xf32>
    %69 = vector.extract_strided_slice %48 {offsets = [0, 32], sizes = [2, 16], strides = [1, 1]} : vector<2x48xf32> to vector<2x16xf32>
    %70 = math.tanh %63 : vector<2x16xf32>
    %71 = arith.mulf %69, %70 : vector<2x16xf32>
    %72 = vector.extract_strided_slice %54 {offsets = [0, 32], sizes = [2, 16], strides = [1, 1]} : vector<2x48xf32> to vector<2x16xf32>
    %73 = math.tanh %68 : vector<2x16xf32>
    %74 = arith.mulf %72, %73 : vector<2x16xf32>
    %75 = arith.index_cast %c0_i32 : i32 to index
    %c0_37 = arith.constant 0 : index
    %c0_38 = arith.constant 0 : index
    %76 = vector.load %arg17[%75, %c0_37, %c0_38] : memref<8x2x32xf32, #tpu.memory_space<vmem>>, vector<1x2x16xf32>
    %77 = vector.shape_cast %76 : vector<1x2x16xf32> to vector<2x16xf32>
    %78 = vector.shape_cast %71 : vector<2x16xf32> to vector<1x2x16xf32>
    tpu.vector_store %arg17[%75, %c0_37, %c0_38], %78 {strides = array<i32>} : memref<8x2x32xf32, #tpu.memory_space<vmem>>, vector<1x2x16xf32>,
    %79 = arith.index_cast %30 : i32 to index
    %c0_39 = arith.constant 0 : index
    %c16 = arith.constant 16 : index
    %80 = vector.load %arg17[%79, %c0_39, %c16] : memref<8x2x32xf32, #tpu.memory_space<vmem>>, vector<1x2x16xf32>
    %81 = vector.shape_cast %80 : vector<1x2x16xf32> to vector<2x16xf32>
    %82 = vector.shape_cast %74 : vector<2x16xf32> to vector<1x2x16xf32>
    tpu.vector_store %arg17[%79, %c0_39, %c16], %82 {strides = array<i32>} : memref<8x2x32xf32, #tpu.memory_space<vmem>>, vector<1x2x16xf32>,
    %c1_i32 = arith.constant 1 : i32
    %c7_i32_40 = arith.constant 7 : i32
    %83 = arith.subi %c7_i32_40, %c1_i32 : i32
    %84 = tpu.concatenate %71, %74 in 1 : vector<2x16xf32>, vector<2x16xf32> -> vector<2x32xf32>
    %cst_41 = arith.constant dense<0.000000e+00> : vector<2x128xf32>
    %85 = tpu.matmul %84, %21, %cst_41 {dimension_numbers = #tpu.dot_dimension_numbers<[1], [0], [0], [1], [0, 0, 1, 1], [], []>} : vector<2x32xf32>, vector<32x128xf32>, vector<2x128xf32> -> vector<2x128xf32>
    %86 = vector.extract_strided_slice %85 {offsets = [0, 0], sizes = [2, 64], strides = [1, 1]} : vector<2x128xf32> to vector<2x64xf32>
    %87 = arith.index_cast %c1_i32 : i32 to index
    %c0_42 = arith.constant 0 : index
    %c0_43 = arith.constant 0 : index
    %88 = vector.load %arg16[%87, %c0_42, %c0_43] : memref<8x2x128xf32, #tpu.memory_space<vmem>>, vector<1x2x64xf32>
    %89 = vector.shape_cast %88 : vector<1x2x64xf32> to vector<2x64xf32>
    %90 = arith.addf %86, %89 : vector<2x64xf32>
    %91 = vector.extract_strided_slice %85 {offsets = [0, 64], sizes = [2, 64], strides = [1, 1]} : vector<2x128xf32> to vector<2x64xf32>
    %92 = arith.index_cast %83 : i32 to index
    %c0_44 = arith.constant 0 : index
    %c64_45 = arith.constant 64 : index
    %93 = vector.load %arg16[%92, %c0_44, %c64_45] : memref<8x2x128xf32, #tpu.memory_space<vmem>>, vector<1x2x64xf32>
    %94 = vector.shape_cast %93 : vector<1x2x64xf32> to vector<2x64xf32>
    %95 = arith.addf %91, %94 : vector<2x64xf32>
    %96 = vector.extract_strided_slice %90 {offsets = [0, 0], sizes = [2, 48], strides = [1, 1]} : vector<2x64xf32> to vector<2x48xf32>
    %97 = arith.negf %96 : vector<2x48xf32>
    %98 = math.exp %97 : vector<2x48xf32>
    %cst_46 = arith.constant 1.000000e+00 : f32
    %99 = vector.broadcast %cst_46 : f32 to vector<2x48xf32>
    %100 = arith.addf %99, %98 : vector<2x48xf32>
    %101 = arith.divf %99, %100 : vector<2x48xf32>
    %102 = vector.extract_strided_slice %95 {offsets = [0, 0], sizes = [2, 48], strides = [1, 1]} : vector<2x64xf32> to vector<2x48xf32>
    %103 = arith.negf %102 : vector<2x48xf32>
    %104 = math.exp %103 : vector<2x48xf32>
    %cst_47 = arith.constant 1.000000e+00 : f32
    %105 = vector.broadcast %cst_47 : f32 to vector<2x48xf32>
    %106 = arith.addf %105, %104 : vector<2x48xf32>
    %107 = arith.divf %105, %106 : vector<2x48xf32>
    %108 = vector.extract_strided_slice %90 {offsets = [0, 48], sizes = [2, 16], strides = [1, 1]} : vector<2x64xf32> to vector<2x16xf32>
    %109 = math.tanh %108 : vector<2x16xf32>
    %110 = vector.extract_strided_slice %95 {offsets = [0, 48], sizes = [2, 16], strides = [1, 1]} : vector<2x64xf32> to vector<2x16xf32>
    %111 = math.tanh %110 : vector<2x16xf32>
    %112 = vector.extract_strided_slice %101 {offsets = [0, 16], sizes = [2, 16], strides = [1, 1]} : vector<2x48xf32> to vector<2x16xf32>
    %113 = arith.mulf %112, %63 : vector<2x16xf32>
    %114 = vector.extract_strided_slice %101 {offsets = [0, 0], sizes = [2, 16], strides = [1, 1]} : vector<2x48xf32> to vector<2x16xf32>
    %115 = arith.mulf %114, %109 : vector<2x16xf32>
    %116 = arith.addf %113, %115 : vector<2x16xf32>
    %117 = vector.extract_strided_slice %107 {offsets = [0, 16], sizes = [2, 16], strides = [1, 1]} : vector<2x48xf32> to vector<2x16xf32>
    %118 = arith.mulf %117, %68 : vector<2x16xf32>
    %119 = vector.extract_strided_slice %107 {offsets = [0, 0], sizes = [2, 16], strides = [1, 1]} : vector<2x48xf32> to vector<2x16xf32>
    %120 = arith.mulf %119, %111 : vector<2x16xf32>
    %121 = arith.addf %118, %120 : vector<2x16xf32>
    %122 = vector.extract_strided_slice %101 {offsets = [0, 32], sizes = [2, 16], strides = [1, 1]} : vector<2x48xf32> to vector<2x16xf32>
    %123 = math.tanh %116 : vector<2x16xf32>
    %124 = arith.mulf %122, %123 : vector<2x16xf32>
    %125 = vector.extract_strided_slice %107 {offsets = [0, 32], sizes = [2, 16], strides = [1, 1]} : vector<2x48xf32> to vector<2x16xf32>
    %126 = math.tanh %121 : vector<2x16xf32>
    %127 = arith.mulf %125, %126 : vector<2x16xf32>
    %128 = arith.index_cast %c1_i32 : i32 to index
    %c0_48 = arith.constant 0 : index
    %c0_49 = arith.constant 0 : index
    %129 = vector.load %arg17[%128, %c0_48, %c0_49] : memref<8x2x32xf32, #tpu.memory_space<vmem>>, vector<1x2x16xf32>
    %130 = vector.shape_cast %129 : vector<1x2x16xf32> to vector<2x16xf32>
    %131 = vector.shape_cast %124 : vector<2x16xf32> to vector<1x2x16xf32>
    tpu.vector_store %arg17[%128, %c0_48, %c0_49], %131 {strides = array<i32>} : memref<8x2x32xf32, #tpu.memory_space<vmem>>, vector<1x2x16xf32>,
    %132 = arith.index_cast %83 : i32 to index
    %c0_50 = arith.constant 0 : index
    %c16_51 = arith.constant 16 : index
    %133 = vector.load %arg17[%132, %c0_50, %c16_51] : memref<8x2x32xf32, #tpu.memory_space<vmem>>, vector<1x2x16xf32>
    %134 = vector.shape_cast %133 : vector<1x2x16xf32> to vector<2x16xf32>
    %135 = vector.shape_cast %127 : vector<2x16xf32> to vector<1x2x16xf32>
    tpu.vector_store %arg17[%132, %c0_50, %c16_51], %135 {strides = array<i32>} : memref<8x2x32xf32, #tpu.memory_space<vmem>>, vector<1x2x16xf32>,
    %c2_i32 = arith.constant 2 : i32
    %c7_i32_52 = arith.constant 7 : i32
    %136 = arith.subi %c7_i32_52, %c2_i32 : i32
    %137 = tpu.concatenate %124, %127 in 1 : vector<2x16xf32>, vector<2x16xf32> -> vector<2x32xf32>
    %cst_53 = arith.constant dense<0.000000e+00> : vector<2x128xf32>
    %138 = tpu.matmul %137, %21, %cst_53 {dimension_numbers = #tpu.dot_dimension_numbers<[1], [0], [0], [1], [0, 0, 1, 1], [], []>} : vector<2x32xf32>, vector<32x128xf32>, vector<2x128xf32> -> vector<2x128xf32>
    %139 = vector.extract_strided_slice %138 {offsets = [0, 0], sizes = [2, 64], strides = [1, 1]} : vector<2x128xf32> to vector<2x64xf32>
    %140 = arith.index_cast %c2_i32 : i32 to index
    %c0_54 = arith.constant 0 : index
    %c0_55 = arith.constant 0 : index
    %141 = vector.load %arg16[%140, %c0_54, %c0_55] : memref<8x2x128xf32, #tpu.memory_space<vmem>>, vector<1x2x64xf32>
    %142 = vector.shape_cast %141 : vector<1x2x64xf32> to vector<2x64xf32>
    %143 = arith.addf %139, %142 : vector<2x64xf32>
    %144 = vector.extract_strided_slice %138 {offsets = [0, 64], sizes = [2, 64], strides = [1, 1]} : vector<2x128xf32> to vector<2x64xf32>
    %145 = arith.index_cast %136 : i32 to index
    %c0_56 = arith.constant 0 : index
    %c64_57 = arith.constant 64 : index
    %146 = vector.load %arg16[%145, %c0_56, %c64_57] : memref<8x2x128xf32, #tpu.memory_space<vmem>>, vector<1x2x64xf32>
    %147 = vector.shape_cast %146 : vector<1x2x64xf32> to vector<2x64xf32>
    %148 = arith.addf %144, %147 : vector<2x64xf32>
    %149 = vector.extract_strided_slice %143 {offsets = [0, 0], sizes = [2, 48], strides = [1, 1]} : vector<2x64xf32> to vector<2x48xf32>
    %150 = arith.negf %149 : vector<2x48xf32>
    %151 = math.exp %150 : vector<2x48xf32>
    %cst_58 = arith.constant 1.000000e+00 : f32
    %152 = vector.broadcast %cst_58 : f32 to vector<2x48xf32>
    %153 = arith.addf %152, %151 : vector<2x48xf32>
    %154 = arith.divf %152, %153 : vector<2x48xf32>
    %155 = vector.extract_strided_slice %148 {offsets = [0, 0], sizes = [2, 48], strides = [1, 1]} : vector<2x64xf32> to vector<2x48xf32>
    %156 = arith.negf %155 : vector<2x48xf32>
    %157 = math.exp %156 : vector<2x48xf32>
    %cst_59 = arith.constant 1.000000e+00 : f32
    %158 = vector.broadcast %cst_59 : f32 to vector<2x48xf32>
    %159 = arith.addf %158, %157 : vector<2x48xf32>
    %160 = arith.divf %158, %159 : vector<2x48xf32>
    %161 = vector.extract_strided_slice %143 {offsets = [0, 48], sizes = [2, 16], strides = [1, 1]} : vector<2x64xf32> to vector<2x16xf32>
    %162 = math.tanh %161 : vector<2x16xf32>
    %163 = vector.extract_strided_slice %148 {offsets = [0, 48], sizes = [2, 16], strides = [1, 1]} : vector<2x64xf32> to vector<2x16xf32>
    %164 = math.tanh %163 : vector<2x16xf32>
    %165 = vector.extract_strided_slice %154 {offsets = [0, 16], sizes = [2, 16], strides = [1, 1]} : vector<2x48xf32> to vector<2x16xf32>
    %166 = arith.mulf %165, %116 : vector<2x16xf32>
    %167 = vector.extract_strided_slice %154 {offsets = [0, 0], sizes = [2, 16], strides = [1, 1]} : vector<2x48xf32> to vector<2x16xf32>
    %168 = arith.mulf %167, %162 : vector<2x16xf32>
    %169 = arith.addf %166, %168 : vector<2x16xf32>
    %170 = vector.extract_strided_slice %160 {offsets = [0, 16], sizes = [2, 16], strides = [1, 1]} : vector<2x48xf32> to vector<2x16xf32>
    %171 = arith.mulf %170, %121 : vector<2x16xf32>
    %172 = vector.extract_strided_slice %160 {offsets = [0, 0], sizes = [2, 16], strides = [1, 1]} : vector<2x48xf32> to vector<2x16xf32>
    %173 = arith.mulf %172, %164 : vector<2x16xf32>
    %174 = arith.addf %171, %173 : vector<2x16xf32>
    %175 = vector.extract_strided_slice %154 {offsets = [0, 32], sizes = [2, 16], strides = [1, 1]} : vector<2x48xf32> to vector<2x16xf32>
    %176 = math.tanh %169 : vector<2x16xf32>
    %177 = arith.mulf %175, %176 : vector<2x16xf32>
    %178 = vector.extract_strided_slice %160 {offsets = [0, 32], sizes = [2, 16], strides = [1, 1]} : vector<2x48xf32> to vector<2x16xf32>
    %179 = math.tanh %174 : vector<2x16xf32>
    %180 = arith.mulf %178, %179 : vector<2x16xf32>
    %181 = arith.index_cast %c2_i32 : i32 to index
    %c0_60 = arith.constant 0 : index
    %c0_61 = arith.constant 0 : index
    %182 = vector.load %arg17[%181, %c0_60, %c0_61] : memref<8x2x32xf32, #tpu.memory_space<vmem>>, vector<1x2x16xf32>
    %183 = vector.shape_cast %182 : vector<1x2x16xf32> to vector<2x16xf32>
    %184 = vector.shape_cast %177 : vector<2x16xf32> to vector<1x2x16xf32>
    tpu.vector_store %arg17[%181, %c0_60, %c0_61], %184 {strides = array<i32>} : memref<8x2x32xf32, #tpu.memory_space<vmem>>, vector<1x2x16xf32>,
    %185 = arith.index_cast %136 : i32 to index
    %c0_62 = arith.constant 0 : index
    %c16_63 = arith.constant 16 : index
    %186 = vector.load %arg17[%185, %c0_62, %c16_63] : memref<8x2x32xf32, #tpu.memory_space<vmem>>, vector<1x2x16xf32>
    %187 = vector.shape_cast %186 : vector<1x2x16xf32> to vector<2x16xf32>
    %188 = vector.shape_cast %180 : vector<2x16xf32> to vector<1x2x16xf32>
    tpu.vector_store %arg17[%185, %c0_62, %c16_63], %188 {strides = array<i32>} : memref<8x2x32xf32, #tpu.memory_space<vmem>>, vector<1x2x16xf32>,
    %c3_i32 = arith.constant 3 : i32
    %c7_i32_64 = arith.constant 7 : i32
    %189 = arith.subi %c7_i32_64, %c3_i32 : i32
    %190 = tpu.concatenate %177, %180 in 1 : vector<2x16xf32>, vector<2x16xf32> -> vector<2x32xf32>
    %cst_65 = arith.constant dense<0.000000e+00> : vector<2x128xf32>
    %191 = tpu.matmul %190, %21, %cst_65 {dimension_numbers = #tpu.dot_dimension_numbers<[1], [0], [0], [1], [0, 0, 1, 1], [], []>} : vector<2x32xf32>, vector<32x128xf32>, vector<2x128xf32> -> vector<2x128xf32>
    %192 = vector.extract_strided_slice %191 {offsets = [0, 0], sizes = [2, 64], strides = [1, 1]} : vector<2x128xf32> to vector<2x64xf32>
    %193 = arith.index_cast %c3_i32 : i32 to index
    %c0_66 = arith.constant 0 : index
    %c0_67 = arith.constant 0 : index
    %194 = vector.load %arg16[%193, %c0_66, %c0_67] : memref<8x2x128xf32, #tpu.memory_space<vmem>>, vector<1x2x64xf32>
    %195 = vector.shape_cast %194 : vector<1x2x64xf32> to vector<2x64xf32>
    %196 = arith.addf %192, %195 : vector<2x64xf32>
    %197 = vector.extract_strided_slice %191 {offsets = [0, 64], sizes = [2, 64], strides = [1, 1]} : vector<2x128xf32> to vector<2x64xf32>
    %198 = arith.index_cast %189 : i32 to index
    %c0_68 = arith.constant 0 : index
    %c64_69 = arith.constant 64 : index
    %199 = vector.load %arg16[%198, %c0_68, %c64_69] : memref<8x2x128xf32, #tpu.memory_space<vmem>>, vector<1x2x64xf32>
    %200 = vector.shape_cast %199 : vector<1x2x64xf32> to vector<2x64xf32>
    %201 = arith.addf %197, %200 : vector<2x64xf32>
    %202 = vector.extract_strided_slice %196 {offsets = [0, 0], sizes = [2, 48], strides = [1, 1]} : vector<2x64xf32> to vector<2x48xf32>
    %203 = arith.negf %202 : vector<2x48xf32>
    %204 = math.exp %203 : vector<2x48xf32>
    %cst_70 = arith.constant 1.000000e+00 : f32
    %205 = vector.broadcast %cst_70 : f32 to vector<2x48xf32>
    %206 = arith.addf %205, %204 : vector<2x48xf32>
    %207 = arith.divf %205, %206 : vector<2x48xf32>
    %208 = vector.extract_strided_slice %201 {offsets = [0, 0], sizes = [2, 48], strides = [1, 1]} : vector<2x64xf32> to vector<2x48xf32>
    %209 = arith.negf %208 : vector<2x48xf32>
    %210 = math.exp %209 : vector<2x48xf32>
    %cst_71 = arith.constant 1.000000e+00 : f32
    %211 = vector.broadcast %cst_71 : f32 to vector<2x48xf32>
    %212 = arith.addf %211, %210 : vector<2x48xf32>
    %213 = arith.divf %211, %212 : vector<2x48xf32>
    %214 = vector.extract_strided_slice %196 {offsets = [0, 48], sizes = [2, 16], strides = [1, 1]} : vector<2x64xf32> to vector<2x16xf32>
    %215 = math.tanh %214 : vector<2x16xf32>
    %216 = vector.extract_strided_slice %201 {offsets = [0, 48], sizes = [2, 16], strides = [1, 1]} : vector<2x64xf32> to vector<2x16xf32>
    %217 = math.tanh %216 : vector<2x16xf32>
    %218 = vector.extract_strided_slice %207 {offsets = [0, 16], sizes = [2, 16], strides = [1, 1]} : vector<2x48xf32> to vector<2x16xf32>
    %219 = arith.mulf %218, %169 : vector<2x16xf32>
    %220 = vector.extract_strided_slice %207 {offsets = [0, 0], sizes = [2, 16], strides = [1, 1]} : vector<2x48xf32> to vector<2x16xf32>
    %221 = arith.mulf %220, %215 : vector<2x16xf32>
    %222 = arith.addf %219, %221 : vector<2x16xf32>
    %223 = vector.extract_strided_slice %213 {offsets = [0, 16], sizes = [2, 16], strides = [1, 1]} : vector<2x48xf32> to vector<2x16xf32>
    %224 = arith.mulf %223, %174 : vector<2x16xf32>
    %225 = vector.extract_strided_slice %213 {offsets = [0, 0], sizes = [2, 16], strides = [1, 1]} : vector<2x48xf32> to vector<2x16xf32>
    %226 = arith.mulf %225, %217 : vector<2x16xf32>
    %227 = arith.addf %224, %226 : vector<2x16xf32>
    %228 = vector.extract_strided_slice %207 {offsets = [0, 32], sizes = [2, 16], strides = [1, 1]} : vector<2x48xf32> to vector<2x16xf32>
    %229 = math.tanh %222 : vector<2x16xf32>
    %230 = arith.mulf %228, %229 : vector<2x16xf32>
    %231 = vector.extract_strided_slice %213 {offsets = [0, 32], sizes = [2, 16], strides = [1, 1]} : vector<2x48xf32> to vector<2x16xf32>
    %232 = math.tanh %227 : vector<2x16xf32>
    %233 = arith.mulf %231, %232 : vector<2x16xf32>
    %234 = arith.index_cast %c3_i32 : i32 to index
    %c0_72 = arith.constant 0 : index
    %c0_73 = arith.constant 0 : index
    %235 = vector.load %arg17[%234, %c0_72, %c0_73] : memref<8x2x32xf32, #tpu.memory_space<vmem>>, vector<1x2x16xf32>
    %236 = vector.shape_cast %235 : vector<1x2x16xf32> to vector<2x16xf32>
    %237 = vector.shape_cast %230 : vector<2x16xf32> to vector<1x2x16xf32>
    tpu.vector_store %arg17[%234, %c0_72, %c0_73], %237 {strides = array<i32>} : memref<8x2x32xf32, #tpu.memory_space<vmem>>, vector<1x2x16xf32>,
    %238 = arith.index_cast %189 : i32 to index
    %c0_74 = arith.constant 0 : index
    %c16_75 = arith.constant 16 : index
    %239 = vector.load %arg17[%238, %c0_74, %c16_75] : memref<8x2x32xf32, #tpu.memory_space<vmem>>, vector<1x2x16xf32>
    %240 = vector.shape_cast %239 : vector<1x2x16xf32> to vector<2x16xf32>
    %241 = vector.shape_cast %233 : vector<2x16xf32> to vector<1x2x16xf32>
    tpu.vector_store %arg17[%238, %c0_74, %c16_75], %241 {strides = array<i32>} : memref<8x2x32xf32, #tpu.memory_space<vmem>>, vector<1x2x16xf32>,
    %c4_i32 = arith.constant 4 : i32
    %c7_i32_76 = arith.constant 7 : i32
    %242 = arith.subi %c7_i32_76, %c4_i32 : i32
    %243 = tpu.concatenate %230, %233 in 1 : vector<2x16xf32>, vector<2x16xf32> -> vector<2x32xf32>
    %cst_77 = arith.constant dense<0.000000e+00> : vector<2x128xf32>
    %244 = tpu.matmul %243, %21, %cst_77 {dimension_numbers = #tpu.dot_dimension_numbers<[1], [0], [0], [1], [0, 0, 1, 1], [], []>} : vector<2x32xf32>, vector<32x128xf32>, vector<2x128xf32> -> vector<2x128xf32>
    %245 = vector.extract_strided_slice %244 {offsets = [0, 0], sizes = [2, 64], strides = [1, 1]} : vector<2x128xf32> to vector<2x64xf32>
    %246 = arith.index_cast %c4_i32 : i32 to index
    %c0_78 = arith.constant 0 : index
    %c0_79 = arith.constant 0 : index
    %247 = vector.load %arg16[%246, %c0_78, %c0_79] : memref<8x2x128xf32, #tpu.memory_space<vmem>>, vector<1x2x64xf32>
    %248 = vector.shape_cast %247 : vector<1x2x64xf32> to vector<2x64xf32>
    %249 = arith.addf %245, %248 : vector<2x64xf32>
    %250 = vector.extract_strided_slice %244 {offsets = [0, 64], sizes = [2, 64], strides = [1, 1]} : vector<2x128xf32> to vector<2x64xf32>
    %251 = arith.index_cast %242 : i32 to index
    %c0_80 = arith.constant 0 : index
    %c64_81 = arith.constant 64 : index
    %252 = vector.load %arg16[%251, %c0_80, %c64_81] : memref<8x2x128xf32, #tpu.memory_space<vmem>>, vector<1x2x64xf32>
    %253 = vector.shape_cast %252 : vector<1x2x64xf32> to vector<2x64xf32>
    %254 = arith.addf %250, %253 : vector<2x64xf32>
    %255 = vector.extract_strided_slice %249 {offsets = [0, 0], sizes = [2, 48], strides = [1, 1]} : vector<2x64xf32> to vector<2x48xf32>
    %256 = arith.negf %255 : vector<2x48xf32>
    %257 = math.exp %256 : vector<2x48xf32>
    %cst_82 = arith.constant 1.000000e+00 : f32
    %258 = vector.broadcast %cst_82 : f32 to vector<2x48xf32>
    %259 = arith.addf %258, %257 : vector<2x48xf32>
    %260 = arith.divf %258, %259 : vector<2x48xf32>
    %261 = vector.extract_strided_slice %254 {offsets = [0, 0], sizes = [2, 48], strides = [1, 1]} : vector<2x64xf32> to vector<2x48xf32>
    %262 = arith.negf %261 : vector<2x48xf32>
    %263 = math.exp %262 : vector<2x48xf32>
    %cst_83 = arith.constant 1.000000e+00 : f32
    %264 = vector.broadcast %cst_83 : f32 to vector<2x48xf32>
    %265 = arith.addf %264, %263 : vector<2x48xf32>
    %266 = arith.divf %264, %265 : vector<2x48xf32>
    %267 = vector.extract_strided_slice %249 {offsets = [0, 48], sizes = [2, 16], strides = [1, 1]} : vector<2x64xf32> to vector<2x16xf32>
    %268 = math.tanh %267 : vector<2x16xf32>
    %269 = vector.extract_strided_slice %254 {offsets = [0, 48], sizes = [2, 16], strides = [1, 1]} : vector<2x64xf32> to vector<2x16xf32>
    %270 = math.tanh %269 : vector<2x16xf32>
    %271 = vector.extract_strided_slice %260 {offsets = [0, 16], sizes = [2, 16], strides = [1, 1]} : vector<2x48xf32> to vector<2x16xf32>
    %272 = arith.mulf %271, %222 : vector<2x16xf32>
    %273 = vector.extract_strided_slice %260 {offsets = [0, 0], sizes = [2, 16], strides = [1, 1]} : vector<2x48xf32> to vector<2x16xf32>
    %274 = arith.mulf %273, %268 : vector<2x16xf32>
    %275 = arith.addf %272, %274 : vector<2x16xf32>
    %276 = vector.extract_strided_slice %266 {offsets = [0, 16], sizes = [2, 16], strides = [1, 1]} : vector<2x48xf32> to vector<2x16xf32>
    %277 = arith.mulf %276, %227 : vector<2x16xf32>
    %278 = vector.extract_strided_slice %266 {offsets = [0, 0], sizes = [2, 16], strides = [1, 1]} : vector<2x48xf32> to vector<2x16xf32>
    %279 = arith.mulf %278, %270 : vector<2x16xf32>
    %280 = arith.addf %277, %279 : vector<2x16xf32>
    %281 = vector.extract_strided_slice %260 {offsets = [0, 32], sizes = [2, 16], strides = [1, 1]} : vector<2x48xf32> to vector<2x16xf32>
    %282 = math.tanh %275 : vector<2x16xf32>
    %283 = arith.mulf %281, %282 : vector<2x16xf32>
    %284 = vector.extract_strided_slice %266 {offsets = [0, 32], sizes = [2, 16], strides = [1, 1]} : vector<2x48xf32> to vector<2x16xf32>
    %285 = math.tanh %280 : vector<2x16xf32>
    %286 = arith.mulf %284, %285 : vector<2x16xf32>
    %287 = arith.index_cast %c4_i32 : i32 to index
    %c0_84 = arith.constant 0 : index
    %c0_85 = arith.constant 0 : index
    %288 = vector.load %arg17[%287, %c0_84, %c0_85] : memref<8x2x32xf32, #tpu.memory_space<vmem>>, vector<1x2x16xf32>
    %289 = vector.shape_cast %288 : vector<1x2x16xf32> to vector<2x16xf32>
    %290 = vector.shape_cast %283 : vector<2x16xf32> to vector<1x2x16xf32>
    tpu.vector_store %arg17[%287, %c0_84, %c0_85], %290 {strides = array<i32>} : memref<8x2x32xf32, #tpu.memory_space<vmem>>, vector<1x2x16xf32>,
    %291 = arith.index_cast %242 : i32 to index
    %c0_86 = arith.constant 0 : index
    %c16_87 = arith.constant 16 : index
    %292 = vector.load %arg17[%291, %c0_86, %c16_87] : memref<8x2x32xf32, #tpu.memory_space<vmem>>, vector<1x2x16xf32>
    %293 = vector.shape_cast %292 : vector<1x2x16xf32> to vector<2x16xf32>
    %294 = vector.shape_cast %286 : vector<2x16xf32> to vector<1x2x16xf32>
    tpu.vector_store %arg17[%291, %c0_86, %c16_87], %294 {strides = array<i32>} : memref<8x2x32xf32, #tpu.memory_space<vmem>>, vector<1x2x16xf32>,
    %c5_i32 = arith.constant 5 : i32
    %c7_i32_88 = arith.constant 7 : i32
    %295 = arith.subi %c7_i32_88, %c5_i32 : i32
    %296 = tpu.concatenate %283, %286 in 1 : vector<2x16xf32>, vector<2x16xf32> -> vector<2x32xf32>
    %cst_89 = arith.constant dense<0.000000e+00> : vector<2x128xf32>
    %297 = tpu.matmul %296, %21, %cst_89 {dimension_numbers = #tpu.dot_dimension_numbers<[1], [0], [0], [1], [0, 0, 1, 1], [], []>} : vector<2x32xf32>, vector<32x128xf32>, vector<2x128xf32> -> vector<2x128xf32>
    %298 = vector.extract_strided_slice %297 {offsets = [0, 0], sizes = [2, 64], strides = [1, 1]} : vector<2x128xf32> to vector<2x64xf32>
    %299 = arith.index_cast %c5_i32 : i32 to index
    %c0_90 = arith.constant 0 : index
    %c0_91 = arith.constant 0 : index
    %300 = vector.load %arg16[%299, %c0_90, %c0_91] : memref<8x2x128xf32, #tpu.memory_space<vmem>>, vector<1x2x64xf32>
    %301 = vector.shape_cast %300 : vector<1x2x64xf32> to vector<2x64xf32>
    %302 = arith.addf %298, %301 : vector<2x64xf32>
    %303 = vector.extract_strided_slice %297 {offsets = [0, 64], sizes = [2, 64], strides = [1, 1]} : vector<2x128xf32> to vector<2x64xf32>
    %304 = arith.index_cast %295 : i32 to index
    %c0_92 = arith.constant 0 : index
    %c64_93 = arith.constant 64 : index
    %305 = vector.load %arg16[%304, %c0_92, %c64_93] : memref<8x2x128xf32, #tpu.memory_space<vmem>>, vector<1x2x64xf32>
    %306 = vector.shape_cast %305 : vector<1x2x64xf32> to vector<2x64xf32>
    %307 = arith.addf %303, %306 : vector<2x64xf32>
    %308 = vector.extract_strided_slice %302 {offsets = [0, 0], sizes = [2, 48], strides = [1, 1]} : vector<2x64xf32> to vector<2x48xf32>
    %309 = arith.negf %308 : vector<2x48xf32>
    %310 = math.exp %309 : vector<2x48xf32>
    %cst_94 = arith.constant 1.000000e+00 : f32
    %311 = vector.broadcast %cst_94 : f32 to vector<2x48xf32>
    %312 = arith.addf %311, %310 : vector<2x48xf32>
    %313 = arith.divf %311, %312 : vector<2x48xf32>
    %314 = vector.extract_strided_slice %307 {offsets = [0, 0], sizes = [2, 48], strides = [1, 1]} : vector<2x64xf32> to vector<2x48xf32>
    %315 = arith.negf %314 : vector<2x48xf32>
    %316 = math.exp %315 : vector<2x48xf32>
    %cst_95 = arith.constant 1.000000e+00 : f32
    %317 = vector.broadcast %cst_95 : f32 to vector<2x48xf32>
    %318 = arith.addf %317, %316 : vector<2x48xf32>
    %319 = arith.divf %317, %318 : vector<2x48xf32>
    %320 = vector.extract_strided_slice %302 {offsets = [0, 48], sizes = [2, 16], strides = [1, 1]} : vector<2x64xf32> to vector<2x16xf32>
    %321 = math.tanh %320 : vector<2x16xf32>
    %322 = vector.extract_strided_slice %307 {offsets = [0, 48], sizes = [2, 16], strides = [1, 1]} : vector<2x64xf32> to vector<2x16xf32>
    %323 = math.tanh %322 : vector<2x16xf32>
    %324 = vector.extract_strided_slice %313 {offsets = [0, 16], sizes = [2, 16], strides = [1, 1]} : vector<2x48xf32> to vector<2x16xf32>
    %325 = arith.mulf %324, %275 : vector<2x16xf32>
    %326 = vector.extract_strided_slice %313 {offsets = [0, 0], sizes = [2, 16], strides = [1, 1]} : vector<2x48xf32> to vector<2x16xf32>
    %327 = arith.mulf %326, %321 : vector<2x16xf32>
    %328 = arith.addf %325, %327 : vector<2x16xf32>
    %329 = vector.extract_strided_slice %319 {offsets = [0, 16], sizes = [2, 16], strides = [1, 1]} : vector<2x48xf32> to vector<2x16xf32>
    %330 = arith.mulf %329, %280 : vector<2x16xf32>
    %331 = vector.extract_strided_slice %319 {offsets = [0, 0], sizes = [2, 16], strides = [1, 1]} : vector<2x48xf32> to vector<2x16xf32>
    %332 = arith.mulf %331, %323 : vector<2x16xf32>
    %333 = arith.addf %330, %332 : vector<2x16xf32>
    %334 = vector.extract_strided_slice %313 {offsets = [0, 32], sizes = [2, 16], strides = [1, 1]} : vector<2x48xf32> to vector<2x16xf32>
    %335 = math.tanh %328 : vector<2x16xf32>
    %336 = arith.mulf %334, %335 : vector<2x16xf32>
    %337 = vector.extract_strided_slice %319 {offsets = [0, 32], sizes = [2, 16], strides = [1, 1]} : vector<2x48xf32> to vector<2x16xf32>
    %338 = math.tanh %333 : vector<2x16xf32>
    %339 = arith.mulf %337, %338 : vector<2x16xf32>
    %340 = arith.index_cast %c5_i32 : i32 to index
    %c0_96 = arith.constant 0 : index
    %c0_97 = arith.constant 0 : index
    %341 = vector.load %arg17[%340, %c0_96, %c0_97] : memref<8x2x32xf32, #tpu.memory_space<vmem>>, vector<1x2x16xf32>
    %342 = vector.shape_cast %341 : vector<1x2x16xf32> to vector<2x16xf32>
    %343 = vector.shape_cast %336 : vector<2x16xf32> to vector<1x2x16xf32>
    tpu.vector_store %arg17[%340, %c0_96, %c0_97], %343 {strides = array<i32>} : memref<8x2x32xf32, #tpu.memory_space<vmem>>, vector<1x2x16xf32>,
    %344 = arith.index_cast %295 : i32 to index
    %c0_98 = arith.constant 0 : index
    %c16_99 = arith.constant 16 : index
    %345 = vector.load %arg17[%344, %c0_98, %c16_99] : memref<8x2x32xf32, #tpu.memory_space<vmem>>, vector<1x2x16xf32>
    %346 = vector.shape_cast %345 : vector<1x2x16xf32> to vector<2x16xf32>
    %347 = vector.shape_cast %339 : vector<2x16xf32> to vector<1x2x16xf32>
    tpu.vector_store %arg17[%344, %c0_98, %c16_99], %347 {strides = array<i32>} : memref<8x2x32xf32, #tpu.memory_space<vmem>>, vector<1x2x16xf32>,
    %c6_i32 = arith.constant 6 : i32
    %c7_i32_100 = arith.constant 7 : i32
    %348 = arith.subi %c7_i32_100, %c6_i32 : i32
    %349 = tpu.concatenate %336, %339 in 1 : vector<2x16xf32>, vector<2x16xf32> -> vector<2x32xf32>
    %cst_101 = arith.constant dense<0.000000e+00> : vector<2x128xf32>
    %350 = tpu.matmul %349, %21, %cst_101 {dimension_numbers = #tpu.dot_dimension_numbers<[1], [0], [0], [1], [0, 0, 1, 1], [], []>} : vector<2x32xf32>, vector<32x128xf32>, vector<2x128xf32> -> vector<2x128xf32>
    %351 = vector.extract_strided_slice %350 {offsets = [0, 0], sizes = [2, 64], strides = [1, 1]} : vector<2x128xf32> to vector<2x64xf32>
    %352 = arith.index_cast %c6_i32 : i32 to index
    %c0_102 = arith.constant 0 : index
    %c0_103 = arith.constant 0 : index
    %353 = vector.load %arg16[%352, %c0_102, %c0_103] : memref<8x2x128xf32, #tpu.memory_space<vmem>>, vector<1x2x64xf32>
    %354 = vector.shape_cast %353 : vector<1x2x64xf32> to vector<2x64xf32>
    %355 = arith.addf %351, %354 : vector<2x64xf32>
    %356 = vector.extract_strided_slice %350 {offsets = [0, 64], sizes = [2, 64], strides = [1, 1]} : vector<2x128xf32> to vector<2x64xf32>
    %357 = arith.index_cast %348 : i32 to index
    %c0_104 = arith.constant 0 : index
    %c64_105 = arith.constant 64 : index
    %358 = vector.load %arg16[%357, %c0_104, %c64_105] : memref<8x2x128xf32, #tpu.memory_space<vmem>>, vector<1x2x64xf32>
    %359 = vector.shape_cast %358 : vector<1x2x64xf32> to vector<2x64xf32>
    %360 = arith.addf %356, %359 : vector<2x64xf32>
    %361 = vector.extract_strided_slice %355 {offsets = [0, 0], sizes = [2, 48], strides = [1, 1]} : vector<2x64xf32> to vector<2x48xf32>
    %362 = arith.negf %361 : vector<2x48xf32>
    %363 = math.exp %362 : vector<2x48xf32>
    %cst_106 = arith.constant 1.000000e+00 : f32
    %364 = vector.broadcast %cst_106 : f32 to vector<2x48xf32>
    %365 = arith.addf %364, %363 : vector<2x48xf32>
    %366 = arith.divf %364, %365 : vector<2x48xf32>
    %367 = vector.extract_strided_slice %360 {offsets = [0, 0], sizes = [2, 48], strides = [1, 1]} : vector<2x64xf32> to vector<2x48xf32>
    %368 = arith.negf %367 : vector<2x48xf32>
    %369 = math.exp %368 : vector<2x48xf32>
    %cst_107 = arith.constant 1.000000e+00 : f32
    %370 = vector.broadcast %cst_107 : f32 to vector<2x48xf32>
    %371 = arith.addf %370, %369 : vector<2x48xf32>
    %372 = arith.divf %370, %371 : vector<2x48xf32>
    %373 = vector.extract_strided_slice %355 {offsets = [0, 48], sizes = [2, 16], strides = [1, 1]} : vector<2x64xf32> to vector<2x16xf32>
    %374 = math.tanh %373 : vector<2x16xf32>
    %375 = vector.extract_strided_slice %360 {offsets = [0, 48], sizes = [2, 16], strides = [1, 1]} : vector<2x64xf32> to vector<2x16xf32>
    %376 = math.tanh %375 : vector<2x16xf32>
    %377 = vector.extract_strided_slice %366 {offsets = [0, 16], sizes = [2, 16], strides = [1, 1]} : vector<2x48xf32> to vector<2x16xf32>
    %378 = arith.mulf %377, %328 : vector<2x16xf32>
    %379 = vector.extract_strided_slice %366 {offsets = [0, 0], sizes = [2, 16], strides = [1, 1]} : vector<2x48xf32> to vector<2x16xf32>
    %380 = arith.mulf %379, %374 : vector<2x16xf32>
    %381 = arith.addf %378, %380 : vector<2x16xf32>
    %382 = vector.extract_strided_slice %372 {offsets = [0, 16], sizes = [2, 16], strides = [1, 1]} : vector<2x48xf32> to vector<2x16xf32>
    %383 = arith.mulf %382, %333 : vector<2x16xf32>
    %384 = vector.extract_strided_slice %372 {offsets = [0, 0], sizes = [2, 16], strides = [1, 1]} : vector<2x48xf32> to vector<2x16xf32>
    %385 = arith.mulf %384, %376 : vector<2x16xf32>
    %386 = arith.addf %383, %385 : vector<2x16xf32>
    %387 = vector.extract_strided_slice %366 {offsets = [0, 32], sizes = [2, 16], strides = [1, 1]} : vector<2x48xf32> to vector<2x16xf32>
    %388 = math.tanh %381 : vector<2x16xf32>
    %389 = arith.mulf %387, %388 : vector<2x16xf32>
    %390 = vector.extract_strided_slice %372 {offsets = [0, 32], sizes = [2, 16], strides = [1, 1]} : vector<2x48xf32> to vector<2x16xf32>
    %391 = math.tanh %386 : vector<2x16xf32>
    %392 = arith.mulf %390, %391 : vector<2x16xf32>
    %393 = arith.index_cast %c6_i32 : i32 to index
    %c0_108 = arith.constant 0 : index
    %c0_109 = arith.constant 0 : index
    %394 = vector.load %arg17[%393, %c0_108, %c0_109] : memref<8x2x32xf32, #tpu.memory_space<vmem>>, vector<1x2x16xf32>
    %395 = vector.shape_cast %394 : vector<1x2x16xf32> to vector<2x16xf32>
    %396 = vector.shape_cast %389 : vector<2x16xf32> to vector<1x2x16xf32>
    tpu.vector_store %arg17[%393, %c0_108, %c0_109], %396 {strides = array<i32>} : memref<8x2x32xf32, #tpu.memory_space<vmem>>, vector<1x2x16xf32>,
    %397 = arith.index_cast %348 : i32 to index
    %c0_110 = arith.constant 0 : index
    %c16_111 = arith.constant 16 : index
    %398 = vector.load %arg17[%397, %c0_110, %c16_111] : memref<8x2x32xf32, #tpu.memory_space<vmem>>, vector<1x2x16xf32>
    %399 = vector.shape_cast %398 : vector<1x2x16xf32> to vector<2x16xf32>
    %400 = vector.shape_cast %392 : vector<2x16xf32> to vector<1x2x16xf32>
    tpu.vector_store %arg17[%397, %c0_110, %c16_111], %400 {strides = array<i32>} : memref<8x2x32xf32, #tpu.memory_space<vmem>>, vector<1x2x16xf32>,
    %c7_i32_112 = arith.constant 7 : i32
    %c7_i32_113 = arith.constant 7 : i32
    %401 = arith.subi %c7_i32_113, %c7_i32_112 : i32
    %402 = tpu.concatenate %389, %392 in 1 : vector<2x16xf32>, vector<2x16xf32> -> vector<2x32xf32>
    %cst_114 = arith.constant dense<0.000000e+00> : vector<2x128xf32>
    %403 = tpu.matmul %402, %21, %cst_114 {dimension_numbers = #tpu.dot_dimension_numbers<[1], [0], [0], [1], [0, 0, 1, 1], [], []>} : vector<2x32xf32>, vector<32x128xf32>, vector<2x128xf32> -> vector<2x128xf32>
    %404 = vector.extract_strided_slice %403 {offsets = [0, 0], sizes = [2, 64], strides = [1, 1]} : vector<2x128xf32> to vector<2x64xf32>
    %405 = arith.index_cast %c7_i32_112 : i32 to index
    %c0_115 = arith.constant 0 : index
    %c0_116 = arith.constant 0 : index
    %406 = vector.load %arg16[%405, %c0_115, %c0_116] : memref<8x2x128xf32, #tpu.memory_space<vmem>>, vector<1x2x64xf32>
    %407 = vector.shape_cast %406 : vector<1x2x64xf32> to vector<2x64xf32>
    %408 = arith.addf %404, %407 : vector<2x64xf32>
    %409 = vector.extract_strided_slice %403 {offsets = [0, 64], sizes = [2, 64], strides = [1, 1]} : vector<2x128xf32> to vector<2x64xf32>
    %410 = arith.index_cast %401 : i32 to index
    %c0_117 = arith.constant 0 : index
    %c64_118 = arith.constant 64 : index
    %411 = vector.load %arg16[%410, %c0_117, %c64_118] : memref<8x2x128xf32, #tpu.memory_space<vmem>>, vector<1x2x64xf32>
    %412 = vector.shape_cast %411 : vector<1x2x64xf32> to vector<2x64xf32>
    %413 = arith.addf %409, %412 : vector<2x64xf32>
    %414 = vector.extract_strided_slice %408 {offsets = [0, 0], sizes = [2, 48], strides = [1, 1]} : vector<2x64xf32> to vector<2x48xf32>
    %415 = arith.negf %414 : vector<2x48xf32>
    %416 = math.exp %415 : vector<2x48xf32>
    %cst_119 = arith.constant 1.000000e+00 : f32
    %417 = vector.broadcast %cst_119 : f32 to vector<2x48xf32>
    %418 = arith.addf %417, %416 : vector<2x48xf32>
    %419 = arith.divf %417, %418 : vector<2x48xf32>
    %420 = vector.extract_strided_slice %413 {offsets = [0, 0], sizes = [2, 48], strides = [1, 1]} : vector<2x64xf32> to vector<2x48xf32>
    %421 = arith.negf %420 : vector<2x48xf32>
    %422 = math.exp %421 : vector<2x48xf32>
    %cst_120 = arith.constant 1.000000e+00 : f32
    %423 = vector.broadcast %cst_120 : f32 to vector<2x48xf32>
    %424 = arith.addf %423, %422 : vector<2x48xf32>
    %425 = arith.divf %423, %424 : vector<2x48xf32>
    %426 = vector.extract_strided_slice %408 {offsets = [0, 48], sizes = [2, 16], strides = [1, 1]} : vector<2x64xf32> to vector<2x16xf32>
    %427 = math.tanh %426 : vector<2x16xf32>
    %428 = vector.extract_strided_slice %413 {offsets = [0, 48], sizes = [2, 16], strides = [1, 1]} : vector<2x64xf32> to vector<2x16xf32>
    %429 = math.tanh %428 : vector<2x16xf32>
    %430 = vector.extract_strided_slice %419 {offsets = [0, 16], sizes = [2, 16], strides = [1, 1]} : vector<2x48xf32> to vector<2x16xf32>
    %431 = arith.mulf %430, %381 : vector<2x16xf32>
    %432 = vector.extract_strided_slice %419 {offsets = [0, 0], sizes = [2, 16], strides = [1, 1]} : vector<2x48xf32> to vector<2x16xf32>
    %433 = arith.mulf %432, %427 : vector<2x16xf32>
    %434 = arith.addf %431, %433 : vector<2x16xf32>
    %435 = vector.extract_strided_slice %425 {offsets = [0, 16], sizes = [2, 16], strides = [1, 1]} : vector<2x48xf32> to vector<2x16xf32>
    %436 = arith.mulf %435, %386 : vector<2x16xf32>
    %437 = vector.extract_strided_slice %425 {offsets = [0, 0], sizes = [2, 16], strides = [1, 1]} : vector<2x48xf32> to vector<2x16xf32>
    %438 = arith.mulf %437, %429 : vector<2x16xf32>
    %439 = arith.addf %436, %438 : vector<2x16xf32>
    %440 = vector.extract_strided_slice %419 {offsets = [0, 32], sizes = [2, 16], strides = [1, 1]} : vector<2x48xf32> to vector<2x16xf32>
    %441 = math.tanh %434 : vector<2x16xf32>
    %442 = arith.mulf %440, %441 : vector<2x16xf32>
    %443 = vector.extract_strided_slice %425 {offsets = [0, 32], sizes = [2, 16], strides = [1, 1]} : vector<2x48xf32> to vector<2x16xf32>
    %444 = math.tanh %439 : vector<2x16xf32>
    %445 = arith.mulf %443, %444 : vector<2x16xf32>
    %446 = arith.index_cast %c7_i32_112 : i32 to index
    %c0_121 = arith.constant 0 : index
    %c0_122 = arith.constant 0 : index
    %447 = vector.load %arg17[%446, %c0_121, %c0_122] : memref<8x2x32xf32, #tpu.memory_space<vmem>>, vector<1x2x16xf32>
    %448 = vector.shape_cast %447 : vector<1x2x16xf32> to vector<2x16xf32>
    %449 = vector.shape_cast %442 : vector<2x16xf32> to vector<1x2x16xf32>
    tpu.vector_store %arg17[%446, %c0_121, %c0_122], %449 {strides = array<i32>} : memref<8x2x32xf32, #tpu.memory_space<vmem>>, vector<1x2x16xf32>,
    %450 = arith.index_cast %401 : i32 to index
    %c0_123 = arith.constant 0 : index
    %c16_124 = arith.constant 16 : index
    %451 = vector.load %arg17[%450, %c0_123, %c16_124] : memref<8x2x32xf32, #tpu.memory_space<vmem>>, vector<1x2x16xf32>
    %452 = vector.shape_cast %451 : vector<1x2x16xf32> to vector<2x16xf32>
    %453 = vector.shape_cast %445 : vector<2x16xf32> to vector<1x2x16xf32>
    tpu.vector_store %arg17[%450, %c0_123, %c16_124], %453 {strides = array<i32>} : memref<8x2x32xf32, #tpu.memory_space<vmem>>, vector<1x2x16xf32>,
    %c8_i32 = arith.constant 8 : i32
    %c0_125 = arith.constant 0 : index
    %c0_126 = arith.constant 0 : index
    %c0_127 = arith.constant 0 : index
    %454 = vector.load %arg17[%c0_125, %c0_126, %c0_127] : memref<8x2x32xf32, #tpu.memory_space<vmem>>, vector<8x2x32xf32>
    %455 = vector.shape_cast %454 : vector<8x2x32xf32> to vector<16x32xf32>
    %c0_128 = arith.constant 0 : index
    %c0_129 = arith.constant 0 : index
    %456 = vector.load %arg9[%c0_128, %c0_129] : memref<32x8xf32, #tpu.memory_space<vmem>>, vector<32x8xf32>
    %cst_130 = arith.constant dense<0.000000e+00> : vector<16x8xf32>
    %457 = tpu.matmul %455, %456, %cst_130 {dimension_numbers = #tpu.dot_dimension_numbers<[1], [0], [0], [1], [0, 0, 1, 1], [], []>} : vector<16x32xf32>, vector<32x8xf32>, vector<16x8xf32> -> vector<16x8xf32>
    %c0_131 = arith.constant 0 : index
    %c0_132 = arith.constant 0 : index
    %458 = vector.load %arg10[%c0_131, %c0_132] : memref<1x8xf32, #tpu.memory_space<vmem>>, vector<1x8xf32>
    %459 = vector.broadcast %458 : vector<1x8xf32> to vector<16x8xf32>
    %460 = arith.addf %457, %459 : vector<16x8xf32>
    %461 = vector.shape_cast %460 : vector<16x8xf32> to vector<8x2x8xf32>
    %c0_133 = arith.constant 0 : index
    %c0_134 = arith.constant 0 : index
    %462 = vector.load %arg11[%c0_133, %c0_134] : memref<8x8xf32, #tpu.memory_space<vmem>>, vector<8x8xf32>
    %463 = tpu.iota {dimensions = array<i32: 2>} : vector<2x8x8xi32>
    %c0_135 = arith.constant 0 : index
    %c0_136 = arith.constant 0 : index
    %464 = vector.load %arg12[%c0_135, %c0_136] : memref<2x8xf32, #tpu.memory_space<vmem>>, vector<2x8xf32>
    %465 = vector.shape_cast %464 : vector<2x8xf32> to vector<2x1x8xf32>
    %466 = vector.shape_cast %462 : vector<8x8xf32> to vector<1x8x8xf32>
    %467 = vector.broadcast %465 : vector<2x1x8xf32> to vector<2x8x8xf32>
    %468 = vector.broadcast %466 : vector<1x8x8xf32> to vector<2x8x8xf32>
    %469 = arith.addf %467, %468 : vector<2x8x8xf32>
    %cst_137 = arith.constant dense<0xFF800000> : vector<2x8xf32>
    %470 = vector.multi_reduction <maximumf>, %469, %cst_137 [2] : vector<2x8x8xf32> to vector<2x8xf32>
    %471 = vector.shape_cast %470 : vector<2x8xf32> to vector<2x8x1xf32>
    %472 = vector.broadcast %471 : vector<2x8x1xf32> to vector<2x8x8xf32>
    %473 = arith.cmpf oge, %469, %472 : vector<2x8x8xf32>
    %c8_i32_138 = arith.constant 8 : i32
    %474 = vector.broadcast %c8_i32_138 : i32 to vector<2x8x8xi32>
    %475 = arith.select %473, %463, %474 : vector<2x8x8xi1>, vector<2x8x8xi32>
    %cst_139 = arith.constant dense<2147483647> : vector<2x8xi32>
    %476 = vector.multi_reduction <minsi>, %475, %cst_139 [2] : vector<2x8x8xi32> to vector<2x8xi32>
    %477 = vector.extract_strided_slice %461 {offsets = [0, 0, 0], sizes = [1, 2, 8], strides = [1, 1, 1]} : vector<8x2x8xf32> to vector<1x2x8xf32>
    %478 = vector.shape_cast %477 : vector<1x2x8xf32> to vector<2x8xf32>
    %479 = arith.addf %470, %478 : vector<2x8xf32>
    %480 = vector.shape_cast %479 : vector<2x8xf32> to vector<2x1x8xf32>
    %481 = vector.shape_cast %462 : vector<8x8xf32> to vector<1x8x8xf32>
    %482 = vector.broadcast %480 : vector<2x1x8xf32> to vector<2x8x8xf32>
    %483 = vector.broadcast %481 : vector<1x8x8xf32> to vector<2x8x8xf32>
    %484 = arith.addf %482, %483 : vector<2x8x8xf32>
    %cst_140 = arith.constant dense<0xFF800000> : vector<2x8xf32>
    %485 = vector.multi_reduction <maximumf>, %484, %cst_140 [2] : vector<2x8x8xf32> to vector<2x8xf32>
    %486 = vector.shape_cast %485 : vector<2x8xf32> to vector<2x8x1xf32>
    %487 = vector.broadcast %486 : vector<2x8x1xf32> to vector<2x8x8xf32>
    %488 = arith.cmpf oge, %484, %487 : vector<2x8x8xf32>
    %c8_i32_141 = arith.constant 8 : i32
    %489 = vector.broadcast %c8_i32_141 : i32 to vector<2x8x8xi32>
    %490 = arith.select %488, %463, %489 : vector<2x8x8xi1>, vector<2x8x8xi32>
    %cst_142 = arith.constant dense<2147483647> : vector<2x8xi32>
    %491 = vector.multi_reduction <minsi>, %490, %cst_142 [2] : vector<2x8x8xi32> to vector<2x8xi32>
    %492 = vector.extract_strided_slice %461 {offsets = [1, 0, 0], sizes = [1, 2, 8], strides = [1, 1, 1]} : vector<8x2x8xf32> to vector<1x2x8xf32>
    %493 = vector.shape_cast %492 : vector<1x2x8xf32> to vector<2x8xf32>
    %494 = arith.addf %485, %493 : vector<2x8xf32>
    %495 = vector.shape_cast %494 : vector<2x8xf32> to vector<2x1x8xf32>
    %496 = vector.shape_cast %462 : vector<8x8xf32> to vector<1x8x8xf32>
    %497 = vector.broadcast %495 : vector<2x1x8xf32> to vector<2x8x8xf32>
    %498 = vector.broadcast %496 : vector<1x8x8xf32> to vector<2x8x8xf32>
    %499 = arith.addf %497, %498 : vector<2x8x8xf32>
    %cst_143 = arith.constant dense<0xFF800000> : vector<2x8xf32>
    %500 = vector.multi_reduction <maximumf>, %499, %cst_143 [2] : vector<2x8x8xf32> to vector<2x8xf32>
    %501 = vector.shape_cast %500 : vector<2x8xf32> to vector<2x8x1xf32>
    %502 = vector.broadcast %501 : vector<2x8x1xf32> to vector<2x8x8xf32>
    %503 = arith.cmpf oge, %499, %502 : vector<2x8x8xf32>
    %c8_i32_144 = arith.constant 8 : i32
    %504 = vector.broadcast %c8_i32_144 : i32 to vector<2x8x8xi32>
    %505 = arith.select %503, %463, %504 : vector<2x8x8xi1>, vector<2x8x8xi32>
    %cst_145 = arith.constant dense<2147483647> : vector<2x8xi32>
    %506 = vector.multi_reduction <minsi>, %505, %cst_145 [2] : vector<2x8x8xi32> to vector<2x8xi32>
    %507 = vector.extract_strided_slice %461 {offsets = [2, 0, 0], sizes = [1, 2, 8], strides = [1, 1, 1]} : vector<8x2x8xf32> to vector<1x2x8xf32>
    %508 = vector.shape_cast %507 : vector<1x2x8xf32> to vector<2x8xf32>
    %509 = arith.addf %500, %508 : vector<2x8xf32>
    %510 = vector.shape_cast %509 : vector<2x8xf32> to vector<2x1x8xf32>
    %511 = vector.shape_cast %462 : vector<8x8xf32> to vector<1x8x8xf32>
    %512 = vector.broadcast %510 : vector<2x1x8xf32> to vector<2x8x8xf32>
    %513 = vector.broadcast %511 : vector<1x8x8xf32> to vector<2x8x8xf32>
    %514 = arith.addf %512, %513 : vector<2x8x8xf32>
    %cst_146 = arith.constant dense<0xFF800000> : vector<2x8xf32>
    %515 = vector.multi_reduction <maximumf>, %514, %cst_146 [2] : vector<2x8x8xf32> to vector<2x8xf32>
    %516 = vector.shape_cast %515 : vector<2x8xf32> to vector<2x8x1xf32>
    %517 = vector.broadcast %516 : vector<2x8x1xf32> to vector<2x8x8xf32>
    %518 = arith.cmpf oge, %514, %517 : vector<2x8x8xf32>
    %c8_i32_147 = arith.constant 8 : i32
    %519 = vector.broadcast %c8_i32_147 : i32 to vector<2x8x8xi32>
    %520 = arith.select %518, %463, %519 : vector<2x8x8xi1>, vector<2x8x8xi32>
    %cst_148 = arith.constant dense<2147483647> : vector<2x8xi32>
    %521 = vector.multi_reduction <minsi>, %520, %cst_148 [2] : vector<2x8x8xi32> to vector<2x8xi32>
    %522 = vector.extract_strided_slice %461 {offsets = [3, 0, 0], sizes = [1, 2, 8], strides = [1, 1, 1]} : vector<8x2x8xf32> to vector<1x2x8xf32>
    %523 = vector.shape_cast %522 : vector<1x2x8xf32> to vector<2x8xf32>
    %524 = arith.addf %515, %523 : vector<2x8xf32>
    %525 = vector.shape_cast %524 : vector<2x8xf32> to vector<2x1x8xf32>
    %526 = vector.shape_cast %462 : vector<8x8xf32> to vector<1x8x8xf32>
    %527 = vector.broadcast %525 : vector<2x1x8xf32> to vector<2x8x8xf32>
    %528 = vector.broadcast %526 : vector<1x8x8xf32> to vector<2x8x8xf32>
    %529 = arith.addf %527, %528 : vector<2x8x8xf32>
    %cst_149 = arith.constant dense<0xFF800000> : vector<2x8xf32>
    %530 = vector.multi_reduction <maximumf>, %529, %cst_149 [2] : vector<2x8x8xf32> to vector<2x8xf32>
    %531 = vector.shape_cast %530 : vector<2x8xf32> to vector<2x8x1xf32>
    %532 = vector.broadcast %531 : vector<2x8x1xf32> to vector<2x8x8xf32>
    %533 = arith.cmpf oge, %529, %532 : vector<2x8x8xf32>
    %c8_i32_150 = arith.constant 8 : i32
    %534 = vector.broadcast %c8_i32_150 : i32 to vector<2x8x8xi32>
    %535 = arith.select %533, %463, %534 : vector<2x8x8xi1>, vector<2x8x8xi32>
    %cst_151 = arith.constant dense<2147483647> : vector<2x8xi32>
    %536 = vector.multi_reduction <minsi>, %535, %cst_151 [2] : vector<2x8x8xi32> to vector<2x8xi32>
    %537 = vector.extract_strided_slice %461 {offsets = [4, 0, 0], sizes = [1, 2, 8], strides = [1, 1, 1]} : vector<8x2x8xf32> to vector<1x2x8xf32>
    %538 = vector.shape_cast %537 : vector<1x2x8xf32> to vector<2x8xf32>
    %539 = arith.addf %530, %538 : vector<2x8xf32>
    %540 = vector.shape_cast %539 : vector<2x8xf32> to vector<2x1x8xf32>
    %541 = vector.shape_cast %462 : vector<8x8xf32> to vector<1x8x8xf32>
    %542 = vector.broadcast %540 : vector<2x1x8xf32> to vector<2x8x8xf32>
    %543 = vector.broadcast %541 : vector<1x8x8xf32> to vector<2x8x8xf32>
    %544 = arith.addf %542, %543 : vector<2x8x8xf32>
    %cst_152 = arith.constant dense<0xFF800000> : vector<2x8xf32>
    %545 = vector.multi_reduction <maximumf>, %544, %cst_152 [2] : vector<2x8x8xf32> to vector<2x8xf32>
    %546 = vector.shape_cast %545 : vector<2x8xf32> to vector<2x8x1xf32>
    %547 = vector.broadcast %546 : vector<2x8x1xf32> to vector<2x8x8xf32>
    %548 = arith.cmpf oge, %544, %547 : vector<2x8x8xf32>
    %c8_i32_153 = arith.constant 8 : i32
    %549 = vector.broadcast %c8_i32_153 : i32 to vector<2x8x8xi32>
    %550 = arith.select %548, %463, %549 : vector<2x8x8xi1>, vector<2x8x8xi32>
    %cst_154 = arith.constant dense<2147483647> : vector<2x8xi32>
    %551 = vector.multi_reduction <minsi>, %550, %cst_154 [2] : vector<2x8x8xi32> to vector<2x8xi32>
    %552 = vector.extract_strided_slice %461 {offsets = [5, 0, 0], sizes = [1, 2, 8], strides = [1, 1, 1]} : vector<8x2x8xf32> to vector<1x2x8xf32>
    %553 = vector.shape_cast %552 : vector<1x2x8xf32> to vector<2x8xf32>
    %554 = arith.addf %545, %553 : vector<2x8xf32>
    %555 = vector.shape_cast %554 : vector<2x8xf32> to vector<2x1x8xf32>
    %556 = vector.shape_cast %462 : vector<8x8xf32> to vector<1x8x8xf32>
    %557 = vector.broadcast %555 : vector<2x1x8xf32> to vector<2x8x8xf32>
    %558 = vector.broadcast %556 : vector<1x8x8xf32> to vector<2x8x8xf32>
    %559 = arith.addf %557, %558 : vector<2x8x8xf32>
    %cst_155 = arith.constant dense<0xFF800000> : vector<2x8xf32>
    %560 = vector.multi_reduction <maximumf>, %559, %cst_155 [2] : vector<2x8x8xf32> to vector<2x8xf32>
    %561 = vector.shape_cast %560 : vector<2x8xf32> to vector<2x8x1xf32>
    %562 = vector.broadcast %561 : vector<2x8x1xf32> to vector<2x8x8xf32>
    %563 = arith.cmpf oge, %559, %562 : vector<2x8x8xf32>
    %c8_i32_156 = arith.constant 8 : i32
    %564 = vector.broadcast %c8_i32_156 : i32 to vector<2x8x8xi32>
    %565 = arith.select %563, %463, %564 : vector<2x8x8xi1>, vector<2x8x8xi32>
    %cst_157 = arith.constant dense<2147483647> : vector<2x8xi32>
    %566 = vector.multi_reduction <minsi>, %565, %cst_157 [2] : vector<2x8x8xi32> to vector<2x8xi32>
    %567 = vector.extract_strided_slice %461 {offsets = [6, 0, 0], sizes = [1, 2, 8], strides = [1, 1, 1]} : vector<8x2x8xf32> to vector<1x2x8xf32>
    %568 = vector.shape_cast %567 : vector<1x2x8xf32> to vector<2x8xf32>
    %569 = arith.addf %560, %568 : vector<2x8xf32>
    %570 = vector.shape_cast %569 : vector<2x8xf32> to vector<2x1x8xf32>
    %571 = vector.shape_cast %462 : vector<8x8xf32> to vector<1x8x8xf32>
    %572 = vector.broadcast %570 : vector<2x1x8xf32> to vector<2x8x8xf32>
    %573 = vector.broadcast %571 : vector<1x8x8xf32> to vector<2x8x8xf32>
    %574 = arith.addf %572, %573 : vector<2x8x8xf32>
    %cst_158 = arith.constant dense<0xFF800000> : vector<2x8xf32>
    %575 = vector.multi_reduction <maximumf>, %574, %cst_158 [2] : vector<2x8x8xf32> to vector<2x8xf32>
    %576 = vector.shape_cast %575 : vector<2x8xf32> to vector<2x8x1xf32>
    %577 = vector.broadcast %576 : vector<2x8x1xf32> to vector<2x8x8xf32>
    %578 = arith.cmpf oge, %574, %577 : vector<2x8x8xf32>
    %c8_i32_159 = arith.constant 8 : i32
    %579 = vector.broadcast %c8_i32_159 : i32 to vector<2x8x8xi32>
    %580 = arith.select %578, %463, %579 : vector<2x8x8xi1>, vector<2x8x8xi32>
    %cst_160 = arith.constant dense<2147483647> : vector<2x8xi32>
    %581 = vector.multi_reduction <minsi>, %580, %cst_160 [2] : vector<2x8x8xi32> to vector<2x8xi32>
    %582 = vector.extract_strided_slice %461 {offsets = [7, 0, 0], sizes = [1, 2, 8], strides = [1, 1, 1]} : vector<8x2x8xf32> to vector<1x2x8xf32>
    %583 = vector.shape_cast %582 : vector<1x2x8xf32> to vector<2x8xf32>
    %584 = arith.addf %575, %583 : vector<2x8xf32>
    %c0_161 = arith.constant 0 : index
    %c0_162 = arith.constant 0 : index
    %585 = vector.load %arg13[%c0_161, %c0_162] : memref<1x8xf32, #tpu.memory_space<vmem>>, vector<1x8xf32>
    %586 = vector.broadcast %585 : vector<1x8xf32> to vector<2x8xf32>
    %587 = arith.addf %584, %586 : vector<2x8xf32>
    %c0_163 = arith.constant 0 : index
    %c0_164 = arith.constant 0 : index
    %588 = vector.load %arg14[%c0_163, %c0_164] : memref<2x8xf32, #tpu.memory_space<vmem>>, vector<2x8xf32>
    tpu.vector_store %arg14[%c0_163, %c0_164], %587 {strides = array<i32>} : memref<2x8xf32, #tpu.memory_space<vmem>>, vector<2x8xf32>,
    %589 = tpu.iota {dimensions = array<i32: 1>} : vector<2x8xi32>
    %cst_165 = arith.constant dense<0xFF800000> : vector<2xf32>
    %590 = vector.multi_reduction <maximumf>, %587, %cst_165 [1] : vector<2x8xf32> to vector<2xf32>
    %591 = vector.shape_cast %590 : vector<2xf32> to vector<2x1xf32>
    %592 = vector.broadcast %591 : vector<2x1xf32> to vector<2x8xf32>
    %593 = arith.cmpf oge, %587, %592 : vector<2x8xf32>
    %c8_i32_166 = arith.constant 8 : i32
    %594 = vector.broadcast %c8_i32_166 : i32 to vector<2x8xi32>
    %595 = arith.select %593, %589, %594 : vector<2x8xi1>, vector<2x8xi32>
    %cst_167 = arith.constant dense<2147483647> : vector<2xi32>
    %596 = vector.multi_reduction <minsi>, %595, %cst_167 [1] : vector<2x8xi32> to vector<2xi32>
    %597 = vector.shape_cast %596 : vector<2xi32> to vector<2x1xi32>
    %598 = vector.broadcast %597 : vector<2x1xi32> to vector<2x8xi32>
    %599 = arith.cmpi eq, %589, %598 : vector<2x8xi32>
    %c0_i32_168 = arith.constant 0 : i32
    %600 = vector.broadcast %c0_i32_168 : i32 to vector<2x8xi32>
    %601 = arith.select %599, %581, %600 : vector<2x8xi1>, vector<2x8xi32>
    %cst_169 = arith.constant dense<0> : vector<2xi32>
    %602 = vector.multi_reduction <add>, %601, %cst_169 [1] : vector<2x8xi32> to vector<2xi32>
    %603 = vector.shape_cast %602 : vector<2xi32> to vector<2x1xi32>
    %604 = vector.broadcast %603 : vector<2x1xi32> to vector<2x8xi32>
    %605 = arith.cmpi eq, %589, %604 : vector<2x8xi32>
    %c0_i32_170 = arith.constant 0 : i32
    %606 = vector.broadcast %c0_i32_170 : i32 to vector<2x8xi32>
    %607 = arith.select %605, %566, %606 : vector<2x8xi1>, vector<2x8xi32>
    %cst_171 = arith.constant dense<0> : vector<2xi32>
    %608 = vector.multi_reduction <add>, %607, %cst_171 [1] : vector<2x8xi32> to vector<2xi32>
    %609 = vector.shape_cast %608 : vector<2xi32> to vector<2x1xi32>
    %610 = vector.broadcast %609 : vector<2x1xi32> to vector<2x8xi32>
    %611 = arith.cmpi eq, %589, %610 : vector<2x8xi32>
    %c0_i32_172 = arith.constant 0 : i32
    %612 = vector.broadcast %c0_i32_172 : i32 to vector<2x8xi32>
    %613 = arith.select %611, %551, %612 : vector<2x8xi1>, vector<2x8xi32>
    %cst_173 = arith.constant dense<0> : vector<2xi32>
    %614 = vector.multi_reduction <add>, %613, %cst_173 [1] : vector<2x8xi32> to vector<2xi32>
    %615 = vector.shape_cast %614 : vector<2xi32> to vector<2x1xi32>
    %616 = vector.broadcast %615 : vector<2x1xi32> to vector<2x8xi32>
    %617 = arith.cmpi eq, %589, %616 : vector<2x8xi32>
    %c0_i32_174 = arith.constant 0 : i32
    %618 = vector.broadcast %c0_i32_174 : i32 to vector<2x8xi32>
    %619 = arith.select %617, %536, %618 : vector<2x8xi1>, vector<2x8xi32>
    %cst_175 = arith.constant dense<0> : vector<2xi32>
    %620 = vector.multi_reduction <add>, %619, %cst_175 [1] : vector<2x8xi32> to vector<2xi32>
    %621 = vector.shape_cast %620 : vector<2xi32> to vector<2x1xi32>
    %622 = vector.broadcast %621 : vector<2x1xi32> to vector<2x8xi32>
    %623 = arith.cmpi eq, %589, %622 : vector<2x8xi32>
    %c0_i32_176 = arith.constant 0 : i32
    %624 = vector.broadcast %c0_i32_176 : i32 to vector<2x8xi32>
    %625 = arith.select %623, %521, %624 : vector<2x8xi1>, vector<2x8xi32>
    %cst_177 = arith.constant dense<0> : vector<2xi32>
    %626 = vector.multi_reduction <add>, %625, %cst_177 [1] : vector<2x8xi32> to vector<2xi32>
    %627 = vector.shape_cast %626 : vector<2xi32> to vector<2x1xi32>
    %628 = vector.broadcast %627 : vector<2x1xi32> to vector<2x8xi32>
    %629 = arith.cmpi eq, %589, %628 : vector<2x8xi32>
    %c0_i32_178 = arith.constant 0 : i32
    %630 = vector.broadcast %c0_i32_178 : i32 to vector<2x8xi32>
    %631 = arith.select %629, %506, %630 : vector<2x8xi1>, vector<2x8xi32>
    %cst_179 = arith.constant dense<0> : vector<2xi32>
    %632 = vector.multi_reduction <add>, %631, %cst_179 [1] : vector<2x8xi32> to vector<2xi32>
    %633 = vector.shape_cast %632 : vector<2xi32> to vector<2x1xi32>
    %634 = vector.broadcast %633 : vector<2x1xi32> to vector<2x8xi32>
    %635 = arith.cmpi eq, %589, %634 : vector<2x8xi32>
    %c0_i32_180 = arith.constant 0 : i32
    %636 = vector.broadcast %c0_i32_180 : i32 to vector<2x8xi32>
    %637 = arith.select %635, %491, %636 : vector<2x8xi1>, vector<2x8xi32>
    %cst_181 = arith.constant dense<0> : vector<2xi32>
    %638 = vector.multi_reduction <add>, %637, %cst_181 [1] : vector<2x8xi32> to vector<2xi32>
    %639 = vector.shape_cast %638 : vector<2xi32> to vector<2x1xi32>
    %640 = vector.broadcast %639 : vector<2x1xi32> to vector<2x8xi32>
    %641 = arith.cmpi eq, %589, %640 : vector<2x8xi32>
    %c0_i32_182 = arith.constant 0 : i32
    %642 = vector.broadcast %c0_i32_182 : i32 to vector<2x8xi32>
    %643 = arith.select %641, %476, %642 : vector<2x8xi1>, vector<2x8xi32>
    %cst_183 = arith.constant dense<0> : vector<2xi32>
    %644 = vector.multi_reduction <add>, %643, %cst_183 [1] : vector<2x8xi32> to vector<2xi32>
    %645 = vector.shape_cast %644 : vector<2xi32> to vector<2x1xi32>
    %646 = tpu.concatenate %645, %639, %633, %627, %621, %615, %609, %603, %597 in 1 : vector<2x1xi32>, vector<2x1xi32>, vector<2x1xi32>, vector<2x1xi32>, vector<2x1xi32>, vector<2x1xi32>, vector<2x1xi32>, vector<2x1xi32>, vector<2x1xi32> -> vector<2x9xi32>
    %c0_184 = arith.constant 0 : index
    %c0_185 = arith.constant 0 : index
    %647 = vector.load %arg15[%c0_184, %c0_185] : memref<2x9xi32, #tpu.memory_space<vmem>>, vector<2x9xi32>
    tpu.vector_store %arg15[%c0_184, %c0_185], %646 {strides = array<i32>} : memref<2x9xi32, #tpu.memory_space<vmem>>, vector<2x9xi32>,
    return
  }
}

</mosaic_0001>

<llo_original>
// kernel: bilstm_crf_forward.1
$region0: #{bilstm_crf_forward.1}
  #allocation0 [shape = 'u32[]', space=smem, size = 0x4, offset = 0x4, fixed_abs, tag = 'smem constant byte address 0x4 - core index']
  #allocation1 [shape = 'u32[144,128]{1,0:T(1,128)}', space=vmem, size = 0x12000, scoped, tag = 'internal scratch']
  #allocation2 [shape = 'f32[8,2,128]{2,1,0:T(2,128)}', space=vmem, size = 0x2000, scoped, tag = 'scratch operand']
  #allocation3 [shape = 'f32[8,2,32]{2,1,0:T(2,128)}', space=vmem, size = 0x2000, scoped, tag = 'scratch operand']
  %s0 = inlined_call_operand.vmem [shape: f32[128,192], index: 0, kind: input, shape index: {}]
  %s1 = inlined_call_operand.vmem [shape: f32[192,32], index: 1, kind: input, shape index: {}]
  %s2 = inlined_call_operand.vmem [shape: f32[1,32], index: 2, kind: input, shape index: {}]
  %s3 = inlined_call_operand.vmem [shape: f32[8,2,32], index: 3, kind: input, shape index: {}]
  %s4 = inlined_call_operand.vmem [shape: f32[32,128], index: 4, kind: input, shape index: {}]
  %s5 = inlined_call_operand.vmem [shape: f32[32,128], index: 5, kind: input, shape index: {}]
  %s6 = inlined_call_operand.vmem [shape: f32[1,128], index: 6, kind: input, shape index: {}]
  %s7 = inlined_call_operand.vmem [shape: f32[2,2,16], index: 7, kind: input, shape index: {}]
  %s8 = inlined_call_operand.vmem [shape: f32[2,2,16], index: 8, kind: input, shape index: {}]
  %s9 = inlined_call_operand.vmem [shape: f32[32,8], index: 9, kind: input, shape index: {}]
  %s10 = inlined_call_operand.vmem [shape: f32[1,8], index: 10, kind: input, shape index: {}]
  %s11 = inlined_call_operand.vmem [shape: f32[8,8], index: 11, kind: input, shape index: {}]
  %s12 = inlined_call_operand.vmem [shape: f32[2,8], index: 12, kind: input, shape index: {}]
  %s13 = inlined_call_operand.vmem [shape: f32[1,8], index: 13, kind: input, shape index: {}]
  %s14 = inlined_call_operand.vmem [shape: f32[2,8], index: 14, kind: output, shape index: {0}]
  %s15 = inlined_call_operand.vmem [shape: s32[2,9], index: 15, kind: output, shape index: {1}]
  %16 = xla_tuple %s14, %s15
  %s17 = sld [smem:[#allocation0]]
  $region74: #{bilstm_crf_forward.1} parent=0
    _
  %s19 = ssub.s32 1, %s17
  %s20 = scalar_select 0, %s19, %s17
  // Predicated region
  $region2: #{bilstm_crf_forward.1} parent=0 // pred_check
    _
  $region3: #{bilstm_crf_forward.1} parent=0 // pred_check_branch
    %22 = sbr.rel (0) target = $region5
  $region4: #{bilstm_crf_forward.1} parent=0 // pred_region
    _
  $region5: #{bilstm_crf_forward.1} parent=0 // pred_fallthru
    _
  // Predicated region
  $region6: #{bilstm_crf_forward.1} parent=0 // pred_check
    _
  $region7: #{bilstm_crf_forward.1} parent=0 // pred_check_branch
    %24 = sbr.rel (0) target = $region9
  $region8: #{bilstm_crf_forward.1} parent=0 // pred_region
    _
  $region9: #{bilstm_crf_forward.1} parent=0 // pred_fallthru
    _
  // Predicated region
  $region10: #{bilstm_crf_forward.1} parent=0 // pred_check
    _
  $region11: #{bilstm_crf_forward.1} parent=0 // pred_check_branch
    %26 = sbr.rel (0) target = $region13
  $region12: #{bilstm_crf_forward.1} parent=0 // pred_region
    _
  $region13: #{bilstm_crf_forward.1} parent=0 // pred_fallthru
    _
  // Predicated region
  $region14: #{bilstm_crf_forward.1} parent=0 // pred_check
    _
  $region15: #{bilstm_crf_forward.1} parent=0 // pred_check_branch
    %28 = sbr.rel (0) target = $region17
  $region16: #{bilstm_crf_forward.1} parent=0 // pred_region
    _
  $region17: #{bilstm_crf_forward.1} parent=0 // pred_fallthru
    _
  // Predicated region
  $region18: #{bilstm_crf_forward.1} parent=0 // pred_check
    _
  $region19: #{bilstm_crf_forward.1} parent=0 // pred_check_branch
    %30 = sbr.rel (0) target = $region21
  $region20: #{bilstm_crf_forward.1} parent=0 // pred_region
    _
  $region21: #{bilstm_crf_forward.1} parent=0 // pred_fallthru
    _
  // Predicated region
  $region22: #{bilstm_crf_forward.1} parent=0 // pred_check
    _
  $region23: #{bilstm_crf_forward.1} parent=0 // pred_check_branch
    %32 = sbr.rel (0) target = $region25
  $region24: #{bilstm_crf_forward.1} parent=0 // pred_region
    _
  $region25: #{bilstm_crf_forward.1} parent=0 // pred_fallthru
    _
  // Predicated region
  $region26: #{bilstm_crf_forward.1} parent=0 // pred_check
    _
  $region27: #{bilstm_crf_forward.1} parent=0 // pred_check_branch
    %34 = sbr.rel (0) target = $region29
  $region28: #{bilstm_crf_forward.1} parent=0 // pred_region
    _
  $region29: #{bilstm_crf_forward.1} parent=0 // pred_fallthru
    _
  // Predicated region
  $region30: #{bilstm_crf_forward.1} parent=0 // pred_check
    _
  $region31: #{bilstm_crf_forward.1} parent=0 // pred_check_branch
    %36 = sbr.rel (0) target = $region33
  $region32: #{bilstm_crf_forward.1} parent=0 // pred_region
    _
  $region33: #{bilstm_crf_forward.1} parent=0 // pred_fallthru
    _
  // Predicated region
  $region34: #{bilstm_crf_forward.1} parent=0 // pred_check
    _
  $region35: #{bilstm_crf_forward.1} parent=0 // pred_check_branch
    %38 = sbr.rel (0) target = $region37
  $region36: #{bilstm_crf_forward.1} parent=0 // pred_region
    _
  $region37: #{bilstm_crf_forward.1} parent=0 // pred_fallthru
    _
  // Predicated region
  $region38: #{bilstm_crf_forward.1} parent=0 // pred_check
    _
  $region39: #{bilstm_crf_forward.1} parent=0 // pred_check_branch
    %40 = sbr.rel (0) target = $region41
  $region40: #{bilstm_crf_forward.1} parent=0 // pred_region
    _
  $region41: #{bilstm_crf_forward.1} parent=0 // pred_fallthru
    _
  // Predicated region
  $region42: #{bilstm_crf_forward.1} parent=0 // pred_check
    _
  $region43: #{bilstm_crf_forward.1} parent=0 // pred_check_branch
    %42 = sbr.rel (0) target = $region45
  $region44: #{bilstm_crf_forward.1} parent=0 // pred_region
    _
  $region45: #{bilstm_crf_forward.1} parent=0 // pred_fallthru
    _
  // Predicated region
  $region46: #{bilstm_crf_forward.1} parent=0 // pred_check
    _
  $region47: #{bilstm_crf_forward.1} parent=0 // pred_check_branch
    %44 = sbr.rel (0) target = $region49
  $region48: #{bilstm_crf_forward.1} parent=0 // pred_region
    _
  $region49: #{bilstm_crf_forward.1} parent=0 // pred_fallthru
    _
  // Predicated region
  $region50: #{bilstm_crf_forward.1} parent=0 // pred_check
    _
  $region51: #{bilstm_crf_forward.1} parent=0 // pred_check_branch
    %46 = sbr.rel (0) target = $region53
  $region52: #{bilstm_crf_forward.1} parent=0 // pred_region
    _
  $region53: #{bilstm_crf_forward.1} parent=0 // pred_fallthru
    _
  // Predicated region
  $region54: #{bilstm_crf_forward.1} parent=0 // pred_check
    _
  $region55: #{bilstm_crf_forward.1} parent=0 // pred_check_branch
    %48 = sbr.rel (0) target = $region57
  $region56: #{bilstm_crf_forward.1} parent=0 // pred_region
    _
  $region57: #{bilstm_crf_forward.1} parent=0 // pred_fallthru
    _
  %v49 = vld [vmem:[%s0] sm:$0xff]
  %v50 = vld [vmem:[%s0 + $0x8] sm:$0xff]
  %v51 = vld [vmem:[%s0 + $0x10] sm:$0xff]
  %v52 = vld [vmem:[%s0 + $0x18] sm:$0xff]
  %v53 = vld [vmem:[%s0 + $0x20] sm:$0xff]
  %v54 = vld [vmem:[%s0 + $0x28] sm:$0xff]
  %v55 = vld [vmem:[%s0 + $0x30] sm:$0xff]
  %v56 = vld [vmem:[%s0 + $0x38] sm:$0xff]
  %v57 = vld [vmem:[%s0 + $0x40] sm:$0xff]
  %v58 = vld [vmem:[%s0 + $0x48] sm:$0xff]
  %v59 = vld [vmem:[%s0 + $0x50] sm:$0xff]
  %v60 = vld [vmem:[%s0 + $0x58] sm:$0xff]
  %v61 = vld [vmem:[%s0 + $0x60] sm:$0xff]
  %v62 = vld [vmem:[%s0 + $0x68] sm:$0xff]
  %v63 = vld [vmem:[%s0 + $0x70] sm:$0xff]
  %v64 = vld [vmem:[%s0 + $0x78] sm:$0xff]
  %v65 = vld [vmem:[%s0 + $0x80] sm:$0xff]
  %v66 = vld [vmem:[%s0 + $0x88] sm:$0xff]
  %v67 = vld [vmem:[%s0 + $0x90] sm:$0xff]
  %v68 = vld [vmem:[%s0 + $0x98] sm:$0xff]
  %v69 = vld [vmem:[%s0 + $0xa0] sm:$0xff]
  %v70 = vld [vmem:[%s0 + $0xa8] sm:$0xff]
  %v71 = vld [vmem:[%s0 + $0xb0] sm:$0xff]
  %v72 = vld [vmem:[%s0 + $0xb8] sm:$0xff]
  %v73 = vld [vmem:[%s0 + $0xc0] sm:$0xff]
  %v74 = vld [vmem:[%s0 + $0xc8] sm:$0xff]
  %v75 = vld [vmem:[%s0 + $0xd0] sm:$0xff]
  %v76 = vld [vmem:[%s0 + $0xd8] sm:$0xff]
  %v77 = vld [vmem:[%s0 + $0xe0] sm:$0xff]
  %v78 = vld [vmem:[%s0 + $0xe8] sm:$0xff]
  %v79 = vld [vmem:[%s0 + $0xf0] sm:$0xff]
  %v80 = vld [vmem:[%s0 + $0xf8] sm:$0xff]
  %v81 = vld [vmem:[%s1] sm:$0xff]
  %v82 = vld [vmem:[%s1 + $0x8] sm:$0xff]
  %v83 = vld [vmem:[%s1 + $0x10] sm:$0xff]
  %v84 = vld [vmem:[%s1 + $0x18] sm:$0xff]
  %v85 = vld [vmem:[%s1 + $0x20] sm:$0xff]
  %v86 = vld [vmem:[%s1 + $0x28] sm:$0xff]
  %v87 = vld [vmem:[%s1 + $0x30] sm:$0xff]
  %v88 = vld [vmem:[%s1 + $0x38] sm:$0xff]
  %v89 = vld [vmem:[%s1 + $0x40] sm:$0xff]
  %v90 = vld [vmem:[%s1 + $0x48] sm:$0xff]
  %v91 = vld [vmem:[%s1 + $0x50] sm:$0xff]
  %v92 = vld [vmem:[%s1 + $0x58] sm:$0xff]
  %v93 = vld [vmem:[%s1 + $0x60] sm:$0xff]
  %v94 = vld [vmem:[%s1 + $0x68] sm:$0xff]
  %v95 = vld [vmem:[%s1 + $0x70] sm:$0xff]
  %v96 = vld [vmem:[%s1 + $0x78] sm:$0xff]
  %v97 = vld [vmem:[%s1 + $0x80] sm:$0xff]
  %v98 = vld [vmem:[%s1 + $0x88] sm:$0xff]
  %v99 = vld [vmem:[%s1 + $0x90] sm:$0xff]
  %v100 = vld [vmem:[%s1 + $0x98] sm:$0xff]
  %v101 = vld [vmem:[%s1 + $0xa0] sm:$0xff]
  %v102 = vld [vmem:[%s1 + $0xa8] sm:$0xff]
  %v103 = vld [vmem:[%s1 + $0xb0] sm:$0xff]
  %v104 = vld [vmem:[%s1 + $0xb8] sm:$0xff]
  %v105 = vld [vmem:[%s2] sm:$0x1]
  %v107 = vlaneseq
  %v108 = vshrl.u32 %v107, 7
  %v109 = vsub.s32 0, %v108
  %v110 = vrot.slane %v105, %v109
  %vm112 = vcmask 523264
  %v114 = vsel %vm112, %v50, 0
  %v117 = vsel %vm112, %v52, 0
  %v120 = vsel %vm112, %v54, 0
  %v123 = vsel %vm112, %v56, 0
  %v126 = vsel %vm112, %v58, 0
  %v129 = vsel %vm112, %v60, 0
  %v132 = vsel %vm112, %v62, 0
  %v135 = vsel %vm112, %v64, 0
  %v138 = vsel %vm112, %v66, 0
  %v141 = vsel %vm112, %v68, 0
  %v144 = vsel %vm112, %v70, 0
  %v147 = vsel %vm112, %v72, 0
  %v150 = vsel %vm112, %v74, 0
  %v153 = vsel %vm112, %v76, 0
  %v156 = vsel %vm112, %v78, 0
  %v159 = vsel %vm112, %v80, 0
  %161 = vmatprep.subr.mxu0 0.0
  %162 = vmatpush1.msra.mxu0 %v96
  %163 = vmatprep.subr.mxu0 0.0
  %164 = vmatpush1.msra.mxu0 %v95
  %165 = vmatprep.subr.mxu0 0.0
  %166 = vmatpush1.msra.mxu0 %v94
  %167 = vmatprep.subr.mxu0 0.0
  %168 = vmatpush1.msra.mxu0 %v93
  %169 = vmatprep.subr.mxu0 0.0
  %170 = vmatpush1.msra.mxu0 %v92
  %171 = vmatprep.subr.mxu0 0.0
  %172 = vmatpush1.msra.mxu0 %v91
  %173 = vmatprep.subr.mxu0 0.0
  %174 = vmatpush1.msra.mxu0 %v90
  %175 = vmatprep.subr.mxu0 0.0
  %176 = vmatpush1.msra.mxu0 %v89
  %177 = vmatprep.subr.mxu0 0.0
  %178 = vmatpush1.msra.mxu0 %v88
  %179 = vmatprep.subr.mxu0 0.0
  %180 = vmatpush1.msra.mxu0 %v87
  %181 = vmatprep.subr.mxu0 0.0
  %182 = vmatpush1.msra.mxu0 %v86
  %183 = vmatprep.subr.mxu0 0.0
  %184 = vmatpush1.msra.mxu0 %v85
  %185 = vmatprep.subr.mxu0 0.0
  %186 = vmatpush1.msra.mxu0 %v84
  %187 = vmatprep.subr.mxu0 0.0
  %188 = vmatpush1.msra.mxu0 %v83
  %189 = vmatprep.subr.mxu0 0.0
  %190 = vmatpush1.msra.mxu0 %v82
  %191 = vmatprep.subr.mxu0 0.0
  %192 = vmatpush1.msra.mxu0 %v81
  %193 = vmatprep.subr.mxu0 0.0
  %194 = vmatpush2.msra.mxu0 0.0
  %195 = vmatprep.subr.mxu0 0.0
  %196 = vmatpush2.msra.mxu0 0.0
  %197 = vmatprep.subr.mxu0 0.0
  %198 = vmatpush2.msra.mxu0 0.0
  %199 = vmatprep.subr.mxu0 0.0
  %200 = vmatpush2.msra.mxu0 0.0
  %201 = vmatprep.subr.mxu0 0.0
  %202 = vmatpush2.msra.mxu0 0.0
  %203 = vmatprep.subr.mxu0 0.0
  %204 = vmatpush2.msra.mxu0 0.0
  %205 = vmatprep.subr.mxu0 0.0
  %206 = vmatpush2.msra.mxu0 0.0
  %207 = vmatprep.subr.mxu0 0.0
  %208 = vmatpush2.msra.mxu0 0.0
  %209 = vmatprep.subr.mxu0 0.0
  %210 = vmatpush2.msra.mxu0 %v104
  %211 = vmatprep.subr.mxu0 0.0
  %212 = vmatpush2.msra.mxu0 %v103
  %213 = vmatprep.subr.mxu0 0.0
  %214 = vmatpush2.msra.mxu0 %v102
  %215 = vmatprep.subr.mxu0 0.0
  %216 = vmatpush2.msra.mxu0 %v101
  %217 = vmatprep.subr.mxu0 0.0
  %218 = vmatpush2.msra.mxu0 %v100
  %219 = vmatprep.subr.mxu0 0.0
  %220 = vmatpush2.msra.mxu0 %v99
  %221 = vmatprep.subr.mxu0 0.0
  %222 = vmatpush2.msra.mxu0 %v98
  %223 = vmatprep.subr.mxu0 0.0
  %224 = vmatpush2.msra.mxu0 %v97
  %225 = vmatprep.mubr.f32.mxu0 %v114
  %226 = vmatmul.mubr.f32.gmra.mxu0 %v49
  %v227 = vpop.f32.mrf.mxu0
  %v228 = vadd.f32 %v110, %v227
  %v229 = vpop.f32.mrf.mxu0
  %230 = vmatprep.mubr.f32.mxu0 %v117
  %231 = vmatmul.mubr.f32.gmra.mxu0 %v51
  %v232 = vpop.f32.mrf.mxu0
  %v233 = vadd.f32 %v110, %v232
  %v234 = vpop.f32.mrf.mxu0
  %235 = vmatprep.mubr.f32.mxu0 %v120
  %236 = vmatmul.mubr.f32.gmra.mxu0 %v53
  %v237 = vpop.f32.mrf.mxu0
  %v238 = vadd.f32 %v110, %v237
  %v239 = vpop.f32.mrf.mxu0
  %240 = vmatprep.mubr.f32.mxu0 %v123
  %241 = vmatmul.mubr.f32.gmra.mxu0 %v55
  %v242 = vpop.f32.mrf.mxu0
  %v243 = vadd.f32 %v110, %v242
  %v244 = vpop.f32.mrf.mxu0
  %245 = vmatprep.mubr.f32.mxu0 %v126
  %246 = vmatmul.mubr.f32.gmra.mxu0 %v57
  %v247 = vpop.f32.mrf.mxu0
  %v248 = vadd.f32 %v110, %v247
  %v249 = vpop.f32.mrf.mxu0
  %250 = vmatprep.mubr.f32.mxu0 %v129
  %251 = vmatmul.mubr.f32.gmra.mxu0 %v59
  %v252 = vpop.f32.mrf.mxu0
  %v253 = vadd.f32 %v110, %v252
  %v254 = vpop.f32.mrf.mxu0
  %255 = vmatprep.mubr.f32.mxu0 %v132
  %256 = vmatmul.mubr.f32.gmra.mxu0 %v61
  %v257 = vpop.f32.mrf.mxu0
  %v258 = vadd.f32 %v110, %v257
  %v259 = vpop.f32.mrf.mxu0
  %260 = vmatprep.mubr.f32.mxu0 %v135
  %261 = vmatmul.mubr.f32.gmra.mxu0 %v63
  %v262 = vpop.f32.mrf.mxu0
  %v263 = vadd.f32 %v110, %v262
  %v264 = vpop.f32.mrf.mxu0
  %265 = vmatprep.mubr.f32.mxu0 %v138
  %266 = vmatmul.mubr.f32.gmra.mxu0 %v65
  %v267 = vpop.f32.mrf.mxu0
  %v268 = vadd.f32 %v110, %v267
  %v269 = vpop.f32.mrf.mxu0
  %270 = vmatprep.mubr.f32.mxu0 %v141
  %271 = vmatmul.mubr.f32.gmra.mxu0 %v67
  %v272 = vpop.f32.mrf.mxu0
  %v273 = vadd.f32 %v110, %v272
  %v274 = vpop.f32.mrf.mxu0
  %275 = vmatprep.mubr.f32.mxu0 %v144
  %276 = vmatmul.mubr.f32.gmra.mxu0 %v69
  %v277 = vpop.f32.mrf.mxu0
  %v278 = vadd.f32 %v110, %v277
  %v279 = vpop.f32.mrf.mxu0
  %280 = vmatprep.mubr.f32.mxu0 %v147
  %281 = vmatmul.mubr.f32.gmra.mxu0 %v71
  %v282 = vpop.f32.mrf.mxu0
  %v283 = vadd.f32 %v110, %v282
  %v284 = vpop.f32.mrf.mxu0
  %285 = vmatprep.mubr.f32.mxu0 %v150
  %286 = vmatmul.mubr.f32.gmra.mxu0 %v73
  %v287 = vpop.f32.mrf.mxu0
  %v288 = vadd.f32 %v110, %v287
  %v289 = vpop.f32.mrf.mxu0
  %290 = vmatprep.mubr.f32.mxu0 %v153
  %291 = vmatmul.mubr.f32.gmra.mxu0 %v75
  %v292 = vpop.f32.mrf.mxu0
  %v293 = vadd.f32 %v110, %v292
  %v294 = vpop.f32.mrf.mxu0
  %295 = vmatprep.mubr.f32.mxu0 %v156
  %296 = vmatmul.mubr.f32.gmra.mxu0 %v77
  %v297 = vpop.f32.mrf.mxu0
  %v298 = vadd.f32 %v110, %v297
  %v299 = vpop.f32.mrf.mxu0
  %300 = vmatprep.mubr.f32.mxu0 %v159
  %301 = vmatmul.mubr.f32.gmra.mxu0 %v79
  %v302 = vpop.f32.mrf.mxu0
  %v303 = vadd.f32 %v110, %v302
  %v304 = vpop.f32.mrf.mxu0
  %305 = vdwg.mxu0
  %v306 = vmax.f32 %v228, 0.0
  %v307 = vmax.f32 %v233, 0.0
  %v308 = vmax.f32 %v238, 0.0
  %v309 = vmax.f32 %v243, 0.0
  %v310 = vmax.f32 %v248, 0.0
  %v311 = vmax.f32 %v253, 0.0
  %v312 = vmax.f32 %v258, 0.0
  %v313 = vmax.f32 %v263, 0.0
  %v314 = vmax.f32 %v268, 0.0
  %v315 = vmax.f32 %v273, 0.0
  %v316 = vmax.f32 %v278, 0.0
  %v317 = vmax.f32 %v283, 0.0
  %v318 = vmax.f32 %v288, 0.0
  %v319 = vmax.f32 %v293, 0.0
  %v320 = vmax.f32 %v298, 0.0
  %v321 = vmax.f32 %v303, 0.0
  %vm322 = vcmask 261120
  %v323 = vsel %vm322, %v306, -inf
  %v324 = vrot.slane %v323, 4
  %v325 = vmax.f32 %v323, %v324
  %v326 = vrot.slane %v325, 2
  %v327 = vmax.f32 %v325, %v326
  %v328 = vrot.slane %v327, 1
  %v329 = vmax.f32 %v327, %v328
  %v330 = vsel %vm322, %v307, -inf
  %v331 = vrot.slane %v330, 4
  %v332 = vmax.f32 %v330, %v331
  %v333 = vrot.slane %v332, 2
  %v334 = vmax.f32 %v332, %v333
  %v335 = vrot.slane %v334, 1
  %v336 = vmax.f32 %v334, %v335
  %v337 = vsel %vm322, %v308, -inf
  %v338 = vrot.slane %v337, 4
  %v339 = vmax.f32 %v337, %v338
  %v340 = vrot.slane %v339, 2
  %v341 = vmax.f32 %v339, %v340
  %v342 = vrot.slane %v341, 1
  %v343 = vmax.f32 %v341, %v342
  %v344 = vsel %vm322, %v309, -inf
  %v345 = vrot.slane %v344, 4
  %v346 = vmax.f32 %v344, %v345
  %v347 = vrot.slane %v346, 2
  %v348 = vmax.f32 %v346, %v347
  %v349 = vrot.slane %v348, 1
  %v350 = vmax.f32 %v348, %v349
  %v351 = vsel %vm322, %v310, -inf
  %v352 = vrot.slane %v351, 4
  %v353 = vmax.f32 %v351, %v352
  %v354 = vrot.slane %v353, 2
  %v355 = vmax.f32 %v353, %v354
  %v356 = vrot.slane %v355, 1
  %v357 = vmax.f32 %v355, %v356
  %v358 = vsel %vm322, %v311, -inf
  %v359 = vrot.slane %v358, 4
  %v360 = vmax.f32 %v358, %v359
  %v361 = vrot.slane %v360, 2
  %v362 = vmax.f32 %v360, %v361
  %v363 = vrot.slane %v362, 1
  %v364 = vmax.f32 %v362, %v363
  %v365 = vsel %vm322, %v312, -inf
  %v366 = vrot.slane %v365, 4
  %v367 = vmax.f32 %v365, %v366
  %v368 = vrot.slane %v367, 2
  %v369 = vmax.f32 %v367, %v368
  %v370 = vrot.slane %v369, 1
  %v371 = vmax.f32 %v369, %v370
  %v372 = vsel %vm322, %v313, -inf
  %v373 = vrot.slane %v372, 4
  %v374 = vmax.f32 %v372, %v373
  %v375 = vrot.slane %v374, 2
  %v376 = vmax.f32 %v374, %v375
  %v377 = vrot.slane %v376, 1
  %v378 = vmax.f32 %v376, %v377
  %v379 = vsel %vm322, %v314, -inf
  %v380 = vrot.slane %v379, 4
  %v381 = vmax.f32 %v379, %v380
  %v382 = vrot.slane %v381, 2
  %v383 = vmax.f32 %v381, %v382
  %v384 = vrot.slane %v383, 1
  %v385 = vmax.f32 %v383, %v384
  %v386 = vsel %vm322, %v315, -inf
  %v387 = vrot.slane %v386, 4
  %v388 = vmax.f32 %v386, %v387
  %v389 = vrot.slane %v388, 2
  %v390 = vmax.f32 %v388, %v389
  %v391 = vrot.slane %v390, 1
  %v392 = vmax.f32 %v390, %v391
  %v393 = vsel %vm322, %v316, -inf
  %v394 = vrot.slane %v393, 4
  %v395 = vmax.f32 %v393, %v394
  %v396 = vrot.slane %v395, 2
  %v397 = vmax.f32 %v395, %v396
  %v398 = vrot.slane %v397, 1
  %v399 = vmax.f32 %v397, %v398
  %v400 = vsel %vm322, %v317, -inf
  %v401 = vrot.slane %v400, 4
  %v402 = vmax.f32 %v400, %v401
  %v403 = vrot.slane %v402, 2
  %v404 = vmax.f32 %v402, %v403
  %v405 = vrot.slane %v404, 1
  %v406 = vmax.f32 %v404, %v405
  %v407 = vsel %vm322, %v318, -inf
  %v408 = vrot.slane %v407, 4
  %v409 = vmax.f32 %v407, %v408
  %v410 = vrot.slane %v409, 2
  %v411 = vmax.f32 %v409, %v410
  %v412 = vrot.slane %v411, 1
  %v413 = vmax.f32 %v411, %v412
  %v414 = vsel %vm322, %v319, -inf
  %v415 = vrot.slane %v414, 4
  %v416 = vmax.f32 %v414, %v415
  %v417 = vrot.slane %v416, 2
  %v418 = vmax.f32 %v416, %v417
  %v419 = vrot.slane %v418, 1
  %v420 = vmax.f32 %v418, %v419
  %v421 = vsel %vm322, %v320, -inf
  %v422 = vrot.slane %v421, 4
  %v423 = vmax.f32 %v421, %v422
  %v424 = vrot.slane %v423, 2
  %v425 = vmax.f32 %v423, %v424
  %v426 = vrot.slane %v425, 1
  %v427 = vmax.f32 %v425, %v426
  %v428 = vsel %vm322, %v321, -inf
  %v429 = vrot.slane %v428, 4
  %v430 = vmax.f32 %v428, %v429
  %v431 = vrot.slane %v430, 2
  %v432 = vmax.f32 %v430, %v431
  %v433 = vrot.slane %v432, 1
  %v434 = vmax.f32 %v432, %v433
  %v435 = vld [vmem:[%s3] sm:$0x3]
  %v436 = vld [vmem:[%s3 + $0x2] sm:$0x3]
  %v437 = vld [vmem:[%s3 + $0x4] sm:$0x3]
  %v438 = vld [vmem:[%s3 + $0x6] sm:$0x3]
  %v439 = vld [vmem:[%s3 + $0x8] sm:$0x3]
  %v440 = vld [vmem:[%s3 + $0xa] sm:$0x3]
  %v441 = vld [vmem:[%s3 + $0xc] sm:$0x3]
  %v442 = vld [vmem:[%s3 + $0xe] sm:$0x3]
  %vm459 = vcmask 1041409
  %v460 = vsel %vm459, %v336, %v329
  %v461 = vsel %vm459, %v350, %v343
  %v462 = vsel %vm459, %v364, %v357
  %v463 = vsel %vm459, %v378, %v371
  %v464 = vsel %vm459, %v392, %v385
  %v465 = vsel %vm459, %v406, %v399
  %v466 = vsel %vm459, %v420, %v413
  %v467 = vsel %vm459, %v434, %v427
  %v476 = vadd.f32 %v435, %v460
  %v477 = vadd.f32 %v436, %v461
  %v478 = vadd.f32 %v437, %v462
  %v479 = vadd.f32 %v438, %v463
  %v480 = vadd.f32 %v439, %v464
  %v481 = vadd.f32 %v440, %v465
  %v482 = vadd.f32 %v441, %v466
  %v483 = vadd.f32 %v442, %v467
  %v484 = vld [vmem:[%s4] sm:$0xff]
  %v485 = vld [vmem:[%s4 + $0x8] sm:$0xff]
  %v486 = vld [vmem:[%s4 + $0x10] sm:$0xff]
  %v487 = vld [vmem:[%s4 + $0x18] sm:$0xff]
  %v488 = vld [vmem:[%s6] sm:$0x1]
  %v490 = vlaneseq
  %v491 = vshrl.u32 %v490, 7
  %v492 = vsub.s32 0, %v491
  %v493 = vrot.slane %v488, %v492
  %v503 = vcombine.low %v476, %v477
  %v504 = vcombine.low %v478, %v479
  %v506 = vunpack.c.l.s4 1983009808
  %v507 = vunpack.c.0.s8 %v506
  %v508 = vlaneseq
  %v509 = vshrl.u32 %v508, 7
  %v510 = vsub.s32 %v507, %v509
  %v511 = vrot.slane %v503, %v510
  %v513 = vunpack.c.l.s4 1983009808
  %v514 = vunpack.c.0.s8 %v513
  %v515 = vlaneseq
  %v516 = vshrl.u32 %v515, 7
  %v517 = vsub.s32 %v514, %v516
  %v518 = vrot.slane %v504, %v517
  %v519 = vcombine.low %v511, %v518
  %v520 = vcombine.low %v480, %v481
  %v521 = vcombine.low %v482, %v483
  %v523 = vunpack.c.l.s4 1983009808
  %v524 = vunpack.c.0.s8 %v523
  %v525 = vlaneseq
  %v526 = vshrl.u32 %v525, 7
  %v527 = vsub.s32 %v524, %v526
  %v528 = vrot.slane %v520, %v527
  %v530 = vunpack.c.l.s4 1983009808
  %v531 = vunpack.c.0.s8 %v530
  %v532 = vlaneseq
  %v533 = vshrl.u32 %v532, 7
  %v534 = vsub.s32 %v531, %v533
  %v535 = vrot.slane %v521, %v534
  %v536 = vcombine.low %v528, %v535
  %v537 = vsel %vm322, %v519, 0
  %v539 = vsel %vm322, %v536, 0
  %541 = vmatprep.subr.mxu0 0.0
  %542 = vmatpush1.msra.mxu0 0.0
  %543 = vmatprep.subr.mxu0 0.0
  %544 = vmatpush1.msra.mxu0 0.0
  %545 = vmatprep.subr.mxu0 0.0
  %546 = vmatpush1.msra.mxu0 0.0
  %547 = vmatprep.subr.mxu0 0.0
  %548 = vmatpush1.msra.mxu0 0.0
  %549 = vmatprep.subr.mxu0 0.0
  %550 = vmatpush1.msra.mxu0 0.0
  %551 = vmatprep.subr.mxu0 0.0
  %552 = vmatpush1.msra.mxu0 0.0
  %553 = vmatprep.subr.mxu0 0.0
  %554 = vmatpush1.msra.mxu0 0.0
  %555 = vmatprep.subr.mxu0 0.0
  %556 = vmatpush1.msra.mxu0 0.0
  %557 = vmatprep.subr.mxu0 0.0
  %558 = vmatpush1.msra.mxu0 0.0
  %559 = vmatprep.subr.mxu0 0.0
  %560 = vmatpush1.msra.mxu0 0.0
  %561 = vmatprep.subr.mxu0 0.0
  %562 = vmatpush1.msra.mxu0 0.0
  %563 = vmatprep.subr.mxu0 0.0
  %564 = vmatpush1.msra.mxu0 0.0
  %565 = vmatprep.subr.mxu0 0.0
  %566 = vmatpush1.msra.mxu0 %v487
  %567 = vmatprep.subr.mxu0 0.0
  %568 = vmatpush1.msra.mxu0 %v486
  %569 = vmatprep.subr.mxu0 0.0
  %570 = vmatpush1.msra.mxu0 %v485
  %571 = vmatprep.subr.mxu0 0.0
  %572 = vmatpush1.msra.mxu0 %v484
  %573 = vmatprep.subr.mxu0 0.0
  %574 = vmatpush2.msra.mxu0 0.0
  %575 = vmatprep.subr.mxu0 0.0
  %576 = vmatpush2.msra.mxu0 0.0
  %577 = vmatprep.subr.mxu0 0.0
  %578 = vmatpush2.msra.mxu0 0.0
  %579 = vmatprep.subr.mxu0 0.0
  %580 = vmatpush2.msra.mxu0 0.0
  %581 = vmatprep.subr.mxu0 0.0
  %582 = vmatpush2.msra.mxu0 0.0
  %583 = vmatprep.subr.mxu0 0.0
  %584 = vmatpush2.msra.mxu0 0.0
  %585 = vmatprep.subr.mxu0 0.0
  %586 = vmatpush2.msra.mxu0 0.0
  %587 = vmatprep.subr.mxu0 0.0
  %588 = vmatpush2.msra.mxu0 0.0
  %589 = vmatprep.subr.mxu0 0.0
  %590 = vmatpush2.msra.mxu0 0.0
  %591 = vmatprep.subr.mxu0 0.0
  %592 = vmatpush2.msra.mxu0 0.0
  %593 = vmatprep.subr.mxu0 0.0
  %594 = vmatpush2.msra.mxu0 0.0
  %595 = vmatprep.subr.mxu0 0.0
  %596 = vmatpush2.msra.mxu0 0.0
  %597 = vmatprep.subr.mxu0 0.0
  %598 = vmatpush2.msra.mxu0 0.0
  %599 = vmatprep.subr.mxu0 0.0
  %600 = vmatpush2.msra.mxu0 0.0
  %601 = vmatprep.subr.mxu0 0.0
  %602 = vmatpush2.msra.mxu0 0.0
  %603 = vmatprep.subr.mxu0 0.0
  %604 = vmatpush2.msra.mxu0 0.0
  %605 = vmatprep.mubr.f32.mxu0 0.0
  %606 = vmatmul.mubr.f32.gmra.mxu0 %v537
  %v607 = vpop.f32.mrf.mxu0
  %v608 = vadd.f32 %v493, %v607
  %v609 = vpop.f32.mrf.mxu0
  %610 = vmatprep.mubr.f32.mxu0 0.0
  %611 = vmatmul.mubr.f32.gmra.mxu0 %v539
  %v612 = vpop.f32.mrf.mxu0
  %v613 = vadd.f32 %v493, %v612
  %v614 = vpop.f32.mrf.mxu0
  %615 = vdwg.mxu0
  %v618 = vcombine.high %v608, %v608
  %v620 = vunpack.c.l.s4 1983009808
  %v621 = vunpack.c.0.s8 %v620
  %v622 = vlaneseq
  %v623 = vshrl.u32 %v622, 7
  %v624 = vsub.s32 %v621, %v623
  %v625 = vrot.slane %v608, %v624
  %v627 = vunpack.c.l.s4 1983009808
  %v628 = vunpack.c.0.s8 %v627
  %v629 = vlaneseq
  %v630 = vshrl.u32 %v629, 7
  %v631 = vsub.s32 %v628, %v630
  %v632 = vrot.slane %v618, %v631
  %v633 = vcombine.high %v625, %v625
  %v634 = vcombine.high %v632, %v632
  %v635 = vcombine.high %v613, %v613
  %v637 = vunpack.c.l.s4 1983009808
  %v638 = vunpack.c.0.s8 %v637
  %v639 = vlaneseq
  %v640 = vshrl.u32 %v639, 7
  %v641 = vsub.s32 %v638, %v640
  %v642 = vrot.slane %v613, %v641
  %v644 = vunpack.c.l.s4 1983009808
  %v645 = vunpack.c.0.s8 %v644
  %v646 = vlaneseq
  %v647 = vshrl.u32 %v646, 7
  %v648 = vsub.s32 %v645, %v647
  %v649 = vrot.slane %v635, %v648
  %v650 = vcombine.high %v642, %v642
  %v651 = vcombine.high %v649, %v649
  %660 = vst [vmem:[#allocation2] sm:$0x3] %v625
  %661 = vst [vmem:[#allocation2 + $0x2] sm:$0x3] %v633
  %662 = vst [vmem:[#allocation2 + $0x4] sm:$0x3] %v632
  %663 = vst [vmem:[#allocation2 + $0x6] sm:$0x3] %v634
  %664 = vst [vmem:[#allocation2 + $0x8] sm:$0x3] %v642
  %665 = vst [vmem:[#allocation2 + $0xa] sm:$0x3] %v650
  %666 = vst [vmem:[#allocation2 + $0xc] sm:$0x3] %v649
  %667 = vst [vmem:[#allocation2 + $0xe] sm:$0x3] %v651
  %v668 = vld [vmem:[%s5] sm:$0xff]
  %v669 = vld [vmem:[%s5 + $0x8] sm:$0xff]
  %v670 = vld [vmem:[%s5 + $0x10] sm:$0xff]
  %v671 = vld [vmem:[%s5 + $0x18] sm:$0xff]
  %v672 = vld [vmem:[%s7] sm:$0x3]
  %s673 = scalar_lea.vmem %s7, 2
  %v674 = vld [vmem:[%s673] sm:$0x3]
  %v675 = vld [vmem:[%s8] sm:$0x3]
  %s676 = scalar_lea.vmem %s8, 2
  %v677 = vld [vmem:[%s676] sm:$0x3]
  %679 = vrot.lane.b32.xlu0 %v674, 16
  %v680 = vpop.permute.xlu0 %679
  %vm682 = vcmask 130048
  %v683 = vsel %vm682, %v672, %v680
  %v685 = vsel %vm322, %v683, 0
  %687 = vmatprep.subr.mxu0 0.0
  %688 = vmatpush1.msra.mxu0 0.0
  %689 = vmatprep.subr.mxu0 0.0
  %690 = vmatpush1.msra.mxu0 0.0
  %691 = vmatprep.subr.mxu0 0.0
  %692 = vmatpush1.msra.mxu0 0.0
  %693 = vmatprep.subr.mxu0 0.0
  %694 = vmatpush1.msra.mxu0 0.0
  %695 = vmatprep.subr.mxu0 0.0
  %696 = vmatpush1.msra.mxu0 0.0
  %697 = vmatprep.subr.mxu0 0.0
  %698 = vmatpush1.msra.mxu0 0.0
  %699 = vmatprep.subr.mxu0 0.0
  %700 = vmatpush1.msra.mxu0 0.0
  %701 = vmatprep.subr.mxu0 0.0
  %702 = vmatpush1.msra.mxu0 0.0
  %703 = vmatprep.subr.mxu0 0.0
  %704 = vmatpush1.msra.mxu0 0.0
  %705 = vmatprep.subr.mxu0 0.0
  %706 = vmatpush1.msra.mxu0 0.0
  %707 = vmatprep.subr.mxu0 0.0
  %708 = vmatpush1.msra.mxu0 0.0
  %709 = vmatprep.subr.mxu0 0.0
  %710 = vmatpush1.msra.mxu0 0.0
  %711 = vmatprep.subr.mxu0 0.0
  %712 = vmatpush1.msra.mxu0 %v671
  %713 = vmatprep.subr.mxu0 0.0
  %714 = vmatpush1.msra.mxu0 %v670
  %715 = vmatprep.subr.mxu0 0.0
  %716 = vmatpush1.msra.mxu0 %v669
  %717 = vmatprep.subr.mxu0 0.0
  %718 = vmatpush1.msra.mxu0 %v668
  %719 = vmatprep.subr.mxu0 0.0
  %720 = vmatpush2.msra.mxu0 0.0
  %721 = vmatprep.subr.mxu0 0.0
  %722 = vmatpush2.msra.mxu0 0.0
  %723 = vmatprep.subr.mxu0 0.0
  %724 = vmatpush2.msra.mxu0 0.0
  %725 = vmatprep.subr.mxu0 0.0
  %726 = vmatpush2.msra.mxu0 0.0
  %727 = vmatprep.subr.mxu0 0.0
  %728 = vmatpush2.msra.mxu0 0.0
  %729 = vmatprep.subr.mxu0 0.0
  %730 = vmatpush2.msra.mxu0 0.0
  %731 = vmatprep.subr.mxu0 0.0
  %732 = vmatpush2.msra.mxu0 0.0
  %733 = vmatprep.subr.mxu0 0.0
  %734 = vmatpush2.msra.mxu0 0.0
  %735 = vmatprep.subr.mxu0 0.0
  %736 = vmatpush2.msra.mxu0 0.0
  %737 = vmatprep.subr.mxu0 0.0
  %738 = vmatpush2.msra.mxu0 0.0
  %739 = vmatprep.subr.mxu0 0.0
  %740 = vmatpush2.msra.mxu0 0.0
  %741 = vmatprep.subr.mxu0 0.0
  %742 = vmatpush2.msra.mxu0 0.0
  %743 = vmatprep.subr.mxu0 0.0
  %744 = vmatpush2.msra.mxu0 0.0
  %745 = vmatprep.subr.mxu0 0.0
  %746 = vmatpush2.msra.mxu0 0.0
  %747 = vmatprep.subr.mxu0 0.0
  %748 = vmatpush2.msra.mxu0 0.0
  %749 = vmatprep.subr.mxu0 0.0
  %750 = vmatpush2.msra.mxu0 0.0
  %751 = vmatprep.mubr.f32.mxu0 0.0
  %752 = vmatmul.mubr.f32.gmra.mxu0 %v685
  %v753 = vpop.f32.mrf.mxu0
  %v754 = vadd.f32 0.0, %v753
  %v755 = vpop.f32.mrf.mxu0
  %756 = vdwg.mxu0
  %v757 = vld [vmem:[#allocation2] sm:$0x3]
  %v758 = vadd.f32 %v754, %v757
  %s759 = scalar_lea.vmem [#allocation2], 14
  %v760 = vld [vmem:[%s759] sm:$0x3]
  %v761 = vadd.f32 %v754, %v760
  %v762 = vxor.u32 %v758, 2147483648
  %v763 = vmul.f32 %v762, 1.442695
  %v764 = vpow.pop %v763
  %v765 = vadd.f32 %v764, 1.0
  %v766 = vrcp.pop %v765
  %v767 = vmul.f32 1.0, %v766
  %v768 = vxor.u32 %v761, 2147483648
  %v769 = vmul.f32 %v768, 1.442695
  %v770 = vpow.pop %v769
  %v771 = vadd.f32 %v770, 1.0
  %v772 = vrcp.pop %v771
  %v773 = vmul.f32 1.0, %v772
  %v774 = vtanh.pop %v758
  %v775 = vtanh.pop %v761
  %777 = vrot.lane.b32.xlu0 %v675, 16
  %v778 = vpop.permute.xlu0 %777
  %v780 = vmul.f32 %v767, %v778
  %782 = vrot.lane.b32.xlu0 %v774, 80
  %v783 = vpop.permute.xlu0 %782
  %v785 = vmul.f32 %v767, %v783
  %787 = vrot.lane.b32.xlu0 %v785, 16
  %v788 = vpop.permute.xlu0 %787
  %v790 = vadd.f32 %v780, %v788
  %792 = vrot.lane.b32.xlu0 %v677, 80
  %v793 = vpop.permute.xlu0 %792
  %v795 = vmul.f32 %v773, %v793
  %797 = vrot.lane.b32.xlu0 %v775, 80
  %v798 = vpop.permute.xlu0 %797
  %v800 = vmul.f32 %v773, %v798
  %802 = vrot.lane.b32.xlu0 %v800, 16
  %v803 = vpop.permute.xlu0 %802
  %v805 = vadd.f32 %v795, %v803
  %v806 = vtanh.pop %v790
  %808 = vrot.lane.b32.xlu0 %v806, 16
  %v809 = vpop.permute.xlu0 %808
  %v811 = vmul.f32 %v767, %v809
  %v812 = vtanh.pop %v805
  %814 = vrot.lane.b32.xlu0 %v812, 16
  %v815 = vpop.permute.xlu0 %814
  %v817 = vmul.f32 %v773, %v815
  %819 = vrot.lane.b32.xlu0 %v811, 96
  %v820 = vpop.permute.xlu0 %819
  %vm822 = vcmask 123904
  %823 = vst.msk [vmem:[#allocation3] sm:$0x3] %vm822, %v820
  %825 = vrot.lane.b32.xlu0 %v817, 48
  %v826 = vpop.permute.xlu0 %825
  %s828 = scalar_lea.vmem [#allocation3], 14
  %vm829 = vcmask 255104
  %830 = vst.msk [vmem:[%s828] sm:$0x3] %vm829, %v826
  %v831 = vsel %vm682, %v820, %v826
  %v833 = vsel %vm322, %v831, 0
  %835 = vmatprep.subr.mxu0 0.0
  %836 = vmatpush1.msra.mxu0 0.0
  %837 = vmatprep.subr.mxu0 0.0
  %838 = vmatpush1.msra.mxu0 0.0
  %839 = vmatprep.subr.mxu0 0.0
  %840 = vmatpush1.msra.mxu0 0.0
  %841 = vmatprep.subr.mxu0 0.0
  %842 = vmatpush1.msra.mxu0 0.0
  %843 = vmatprep.subr.mxu0 0.0
  %844 = vmatpush1.msra.mxu0 0.0
  %845 = vmatprep.subr.mxu0 0.0
  %846 = vmatpush1.msra.mxu0 0.0
  %847 = vmatprep.subr.mxu0 0.0
  %848 = vmatpush1.msra.mxu0 0.0
  %849 = vmatprep.subr.mxu0 0.0
  %850 = vmatpush1.msra.mxu0 0.0
  %851 = vmatprep.subr.mxu0 0.0
  %852 = vmatpush1.msra.mxu0 0.0
  %853 = vmatprep.subr.mxu0 0.0
  %854 = vmatpush1.msra.mxu0 0.0
  %855 = vmatprep.subr.mxu0 0.0
  %856 = vmatpush1.msra.mxu0 0.0
  %857 = vmatprep.subr.mxu0 0.0
  %858 = vmatpush1.msra.mxu0 0.0
  %859 = vmatprep.subr.mxu0 0.0
  %860 = vmatpush1.msra.mxu0 %v671
  %861 = vmatprep.subr.mxu0 0.0
  %862 = vmatpush1.msra.mxu0 %v670
  %863 = vmatprep.subr.mxu0 0.0
  %864 = vmatpush1.msra.mxu0 %v669
  %865 = vmatprep.subr.mxu0 0.0
  %866 = vmatpush1.msra.mxu0 %v668
  %867 = vmatprep.subr.mxu0 0.0
  %868 = vmatpush2.msra.mxu0 0.0
  %869 = vmatprep.subr.mxu0 0.0
  %870 = vmatpush2.msra.mxu0 0.0
  %871 = vmatprep.subr.mxu0 0.0
  %872 = vmatpush2.msra.mxu0 0.0
  %873 = vmatprep.subr.mxu0 0.0
  %874 = vmatpush2.msra.mxu0 0.0
  %875 = vmatprep.subr.mxu0 0.0
  %876 = vmatpush2.msra.mxu0 0.0
  %877 = vmatprep.subr.mxu0 0.0
  %878 = vmatpush2.msra.mxu0 0.0
  %879 = vmatprep.subr.mxu0 0.0
  %880 = vmatpush2.msra.mxu0 0.0
  %881 = vmatprep.subr.mxu0 0.0
  %882 = vmatpush2.msra.mxu0 0.0
  %883 = vmatprep.subr.mxu0 0.0
  %884 = vmatpush2.msra.mxu0 0.0
  %885 = vmatprep.subr.mxu0 0.0
  %886 = vmatpush2.msra.mxu0 0.0
  %887 = vmatprep.subr.mxu0 0.0
  %888 = vmatpush2.msra.mxu0 0.0
  %889 = vmatprep.subr.mxu0 0.0
  %890 = vmatpush2.msra.mxu0 0.0
  %891 = vmatprep.subr.mxu0 0.0
  %892 = vmatpush2.msra.mxu0 0.0
  %893 = vmatprep.subr.mxu0 0.0
  %894 = vmatpush2.msra.mxu0 0.0
  %895 = vmatprep.subr.mxu0 0.0
  %896 = vmatpush2.msra.mxu0 0.0
  %897 = vmatprep.subr.mxu0 0.0
  %898 = vmatpush2.msra.mxu0 0.0
  %899 = vmatprep.mubr.f32.mxu0 0.0
  %900 = vmatmul.mubr.f32.gmra.mxu0 %v833
  %v901 = vpop.f32.mrf.mxu0
  %v902 = vadd.f32 0.0, %v901
  %v903 = vpop.f32.mrf.mxu0
  %904 = vdwg.mxu0
  %s905 = scalar_lea.vmem [#allocation2], 2
  %v906 = vld [vmem:[%s905] sm:$0x3]
  %v907 = vadd.f32 %v902, %v906
  %s908 = scalar_lea.vmem [#allocation2], 12
  %v909 = vld [vmem:[%s908] sm:$0x3]
  %v910 = vadd.f32 %v902, %v909
  %v911 = vxor.u32 %v907, 2147483648
  %v912 = vmul.f32 %v911, 1.442695
  %v913 = vpow.pop %v912
  %v914 = vadd.f32 %v913, 1.0
  %v915 = vrcp.pop %v914
  %v916 = vmul.f32 1.0, %v915
  %v917 = vxor.u32 %v910, 2147483648
  %v918 = vmul.f32 %v917, 1.442695
  %v919 = vpow.pop %v918
  %v920 = vadd.f32 %v919, 1.0
  %v921 = vrcp.pop %v920
  %v922 = vmul.f32 1.0, %v921
  %v923 = vtanh.pop %v907
  %v924 = vtanh.pop %v910
  %v925 = vmul.f32 %v916, %v790
  %927 = vrot.lane.b32.xlu0 %v923, 80
  %v928 = vpop.permute.xlu0 %927
  %v930 = vmul.f32 %v916, %v928
  %932 = vrot.lane.b32.xlu0 %v930, 16
  %v933 = vpop.permute.xlu0 %932
  %v935 = vadd.f32 %v925, %v933
  %v936 = vmul.f32 %v922, %v805
  %938 = vrot.lane.b32.xlu0 %v924, 80
  %v939 = vpop.permute.xlu0 %938
  %v941 = vmul.f32 %v922, %v939
  %943 = vrot.lane.b32.xlu0 %v941, 16
  %v944 = vpop.permute.xlu0 %943
  %v946 = vadd.f32 %v936, %v944
  %v947 = vtanh.pop %v935
  %949 = vrot.lane.b32.xlu0 %v947, 16
  %v950 = vpop.permute.xlu0 %949
  %v952 = vmul.f32 %v916, %v950
  %v953 = vtanh.pop %v946
  %955 = vrot.lane.b32.xlu0 %v953, 16
  %v956 = vpop.permute.xlu0 %955
  %v958 = vmul.f32 %v922, %v956
  %960 = vrot.lane.b32.xlu0 %v952, 96
  %v961 = vpop.permute.xlu0 %960
  %s963 = scalar_lea.vmem [#allocation3], 2
  %964 = vst.msk [vmem:[%s963] sm:$0x3] %vm822, %v961
  %966 = vrot.lane.b32.xlu0 %v958, 48
  %v967 = vpop.permute.xlu0 %966
  %s969 = scalar_lea.vmem [#allocation3], 12
  %970 = vst.msk [vmem:[%s969] sm:$0x3] %vm829, %v967
  %v971 = vsel %vm682, %v961, %v967
  %v973 = vsel %vm322, %v971, 0
  %975 = vmatprep.subr.mxu0 0.0
  %976 = vmatpush1.msra.mxu0 0.0
  %977 = vmatprep.subr.mxu0 0.0
  %978 = vmatpush1.msra.mxu0 0.0
  %979 = vmatprep.subr.mxu0 0.0
  %980 = vmatpush1.msra.mxu0 0.0
  %981 = vmatprep.subr.mxu0 0.0
  %982 = vmatpush1.msra.mxu0 0.0
  %983 = vmatprep.subr.mxu0 0.0
  %984 = vmatpush1.msra.mxu0 0.0
  %985 = vmatprep.subr.mxu0 0.0
  %986 = vmatpush1.msra.mxu0 0.0
  %987 = vmatprep.subr.mxu0 0.0
  %988 = vmatpush1.msra.mxu0 0.0
  %989 = vmatprep.subr.mxu0 0.0
  %990 = vmatpush1.msra.mxu0 0.0
  %991 = vmatprep.subr.mxu0 0.0
  %992 = vmatpush1.msra.mxu0 0.0
  %993 = vmatprep.subr.mxu0 0.0
  %994 = vmatpush1.msra.mxu0 0.0
  %995 = vmatprep.subr.mxu0 0.0
  %996 = vmatpush1.msra.mxu0 0.0
  %997 = vmatprep.subr.mxu0 0.0
  %998 = vmatpush1.msra.mxu0 0.0
  %999 = vmatprep.subr.mxu0 0.0
  %1000 = vmatpush1.msra.mxu0 %v671
  %1001 = vmatprep.subr.mxu0 0.0
  %1002 = vmatpush1.msra.mxu0 %v670
  %1003 = vmatprep.subr.mxu0 0.0
  %1004 = vmatpush1.msra.mxu0 %v669
  %1005 = vmatprep.subr.mxu0 0.0
  %1006 = vmatpush1.msra.mxu0 %v668
  %1007 = vmatprep.subr.mxu0 0.0
  %1008 = vmatpush2.msra.mxu0 0.0
  %1009 = vmatprep.subr.mxu0 0.0
  %1010 = vmatpush2.msra.mxu0 0.0
  %1011 = vmatprep.subr.mxu0 0.0
  %1012 = vmatpush2.msra.mxu0 0.0
  %1013 = vmatprep.subr.mxu0 0.0
  %1014 = vmatpush2.msra.mxu0 0.0
  %1015 = vmatprep.subr.mxu0 0.0
  %1016 = vmatpush2.msra.mxu0 0.0
  %1017 = vmatprep.subr.mxu0 0.0
  %1018 = vmatpush2.msra.mxu0 0.0
  %1019 = vmatprep.subr.mxu0 0.0
  %1020 = vmatpush2.msra.mxu0 0.0
  %1021 = vmatprep.subr.mxu0 0.0
  %1022 = vmatpush2.msra.mxu0 0.0
  %1023 = vmatprep.subr.mxu0 0.0
  %1024 = vmatpush2.msra.mxu0 0.0
  %1025 = vmatprep.subr.mxu0 0.0
  %1026 = vmatpush2.msra.mxu0 0.0
  %1027 = vmatprep.subr.mxu0 0.0
  %1028 = vmatpush2.msra.mxu0 0.0
  %1029 = vmatprep.subr.mxu0 0.0
  %1030 = vmatpush2.msra.mxu0 0.0
  %1031 = vmatprep.subr.mxu0 0.0
  %1032 = vmatpush2.msra.mxu0 0.0
  %1033 = vmatprep.subr.mxu0 0.0
  %1034 = vmatpush2.msra.mxu0 0.0
  %1035 = vmatprep.subr.mxu0 0.0
  %1036 = vmatpush2.msra.mxu0 0.0
  %1037 = vmatprep.subr.mxu0 0.0
  %1038 = vmatpush2.msra.mxu0 0.0
  %1039 = vmatprep.mubr.f32.mxu0 0.0
  %1040 = vmatmul.mubr.f32.gmra.mxu0 %v973
  %v1041 = vpop.f32.mrf.mxu0
  %v1042 = vadd.f32 0.0, %v1041
  %v1043 = vpop.f32.mrf.mxu0
  %1044 = vdwg.mxu0
  %s1045 = scalar_lea.vmem [#allocation2], 4
  %v1046 = vld [vmem:[%s1045] sm:$0x3]
  %v1047 = vadd.f32 %v1042, %v1046
  %s1048 = scalar_lea.vmem [#allocation2], 10
  %v1049 = vld [vmem:[%s1048] sm:$0x3]
  %v1050 = vadd.f32 %v1042, %v1049
  %v1051 = vxor.u32 %v1047, 2147483648
  %v1052 = vmul.f32 %v1051, 1.442695
  %v1053 = vpow.pop %v1052
  %v1054 = vadd.f32 %v1053, 1.0
  %v1055 = vrcp.pop %v1054
  %v1056 = vmul.f32 1.0, %v1055
  %v1057 = vxor.u32 %v1050, 2147483648
  %v1058 = vmul.f32 %v1057, 1.442695
  %v1059 = vpow.pop %v1058
  %v1060 = vadd.f32 %v1059, 1.0
  %v1061 = vrcp.pop %v1060
  %v1062 = vmul.f32 1.0, %v1061
  %v1063 = vtanh.pop %v1047
  %v1064 = vtanh.pop %v1050
  %v1065 = vmul.f32 %v1056, %v935
  %1067 = vrot.lane.b32.xlu0 %v1063, 80
  %v1068 = vpop.permute.xlu0 %1067
  %v1070 = vmul.f32 %v1056, %v1068
  %1072 = vrot.lane.b32.xlu0 %v1070, 16
  %v1073 = vpop.permute.xlu0 %1072
  %v1075 = vadd.f32 %v1065, %v1073
  %v1076 = vmul.f32 %v1062, %v946
  %1078 = vrot.lane.b32.xlu0 %v1064, 80
  %v1079 = vpop.permute.xlu0 %1078
  %v1081 = vmul.f32 %v1062, %v1079
  %1083 = vrot.lane.b32.xlu0 %v1081, 16
  %v1084 = vpop.permute.xlu0 %1083
  %v1086 = vadd.f32 %v1076, %v1084
  %v1087 = vtanh.pop %v1075
  %1089 = vrot.lane.b32.xlu0 %v1087, 16
  %v1090 = vpop.permute.xlu0 %1089
  %v1092 = vmul.f32 %v1056, %v1090
  %v1093 = vtanh.pop %v1086
  %1095 = vrot.lane.b32.xlu0 %v1093, 16
  %v1096 = vpop.permute.xlu0 %1095
  %v1098 = vmul.f32 %v1062, %v1096
  %1100 = vrot.lane.b32.xlu0 %v1092, 96
  %v1101 = vpop.permute.xlu0 %1100
  %s1103 = scalar_lea.vmem [#allocation3], 4
  %1104 = vst.msk [vmem:[%s1103] sm:$0x3] %vm822, %v1101
  %1106 = vrot.lane.b32.xlu0 %v1098, 48
  %v1107 = vpop.permute.xlu0 %1106
  %s1109 = scalar_lea.vmem [#allocation3], 10
  %1110 = vst.msk [vmem:[%s1109] sm:$0x3] %vm829, %v1107
  %v1111 = vsel %vm682, %v1101, %v1107
  %v1113 = vsel %vm322, %v1111, 0
  %1115 = vmatprep.subr.mxu0 0.0
  %1116 = vmatpush1.msra.mxu0 0.0
  %1117 = vmatprep.subr.mxu0 0.0
  %1118 = vmatpush1.msra.mxu0 0.0
  %1119 = vmatprep.subr.mxu0 0.0
  %1120 = vmatpush1.msra.mxu0 0.0
  %1121 = vmatprep.subr.mxu0 0.0
  %1122 = vmatpush1.msra.mxu0 0.0
  %1123 = vmatprep.subr.mxu0 0.0
  %1124 = vmatpush1.msra.mxu0 0.0
  %1125 = vmatprep.subr.mxu0 0.0
  %1126 = vmatpush1.msra.mxu0 0.0
  %1127 = vmatprep.subr.mxu0 0.0
  %1128 = vmatpush1.msra.mxu0 0.0
  %1129 = vmatprep.subr.mxu0 0.0
  %1130 = vmatpush1.msra.mxu0 0.0
  %1131 = vmatprep.subr.mxu0 0.0
  %1132 = vmatpush1.msra.mxu0 0.0
  %1133 = vmatprep.subr.mxu0 0.0
  %1134 = vmatpush1.msra.mxu0 0.0
  %1135 = vmatprep.subr.mxu0 0.0
  %1136 = vmatpush1.msra.mxu0 0.0
  %1137 = vmatprep.subr.mxu0 0.0
  %1138 = vmatpush1.msra.mxu0 0.0
  %1139 = vmatprep.subr.mxu0 0.0
  %1140 = vmatpush1.msra.mxu0 %v671
  %1141 = vmatprep.subr.mxu0 0.0
  %1142 = vmatpush1.msra.mxu0 %v670
  %1143 = vmatprep.subr.mxu0 0.0
  %1144 = vmatpush1.msra.mxu0 %v669
  %1145 = vmatprep.subr.mxu0 0.0
  %1146 = vmatpush1.msra.mxu0 %v668
  %1147 = vmatprep.subr.mxu0 0.0
  %1148 = vmatpush2.msra.mxu0 0.0
  %1149 = vmatprep.subr.mxu0 0.0
  %1150 = vmatpush2.msra.mxu0 0.0
  %1151 = vmatprep.subr.mxu0 0.0
  %1152 = vmatpush2.msra.mxu0 0.0
  %1153 = vmatprep.subr.mxu0 0.0
  %1154 = vmatpush2.msra.mxu0 0.0
  %1155 = vmatprep.subr.mxu0 0.0
  %1156 = vmatpush2.msra.mxu0 0.0
  %1157 = vmatprep.subr.mxu0 0.0
  %1158 = vmatpush2.msra.mxu0 0.0
  %1159 = vmatprep.subr.mxu0 0.0
  %1160 = vmatpush2.msra.mxu0 0.0
  %1161 = vmatprep.subr.mxu0 0.0
  %1162 = vmatpush2.msra.mxu0 0.0
  %1163 = vmatprep.subr.mxu0 0.0
  %1164 = vmatpush2.msra.mxu0 0.0
  %1165 = vmatprep.subr.mxu0 0.0
  %1166 = vmatpush2.msra.mxu0 0.0
  %1167 = vmatprep.subr.mxu0 0.0
  %1168 = vmatpush2.msra.mxu0 0.0
  %1169 = vmatprep.subr.mxu0 0.0
  %1170 = vmatpush2.msra.mxu0 0.0
  %1171 = vmatprep.subr.mxu0 0.0
  %1172 = vmatpush2.msra.mxu0 0.0
  %1173 = vmatprep.subr.mxu0 0.0
  %1174 = vmatpush2.msra.mxu0 0.0
  %1175 = vmatprep.subr.mxu0 0.0
  %1176 = vmatpush2.msra.mxu0 0.0
  %1177 = vmatprep.subr.mxu0 0.0
  %1178 = vmatpush2.msra.mxu0 0.0
  %1179 = vmatprep.mubr.f32.mxu0 0.0
  %1180 = vmatmul.mubr.f32.gmra.mxu0 %v1113
  %v1181 = vpop.f32.mrf.mxu0
  %v1182 = vadd.f32 0.0, %v1181
  %v1183 = vpop.f32.mrf.mxu0
  %1184 = vdwg.mxu0
  %s1185 = scalar_lea.vmem [#allocation2], 6
  %v1186 = vld [vmem:[%s1185] sm:$0x3]
  %v1187 = vadd.f32 %v1182, %v1186
  %s1188 = scalar_lea.vmem [#allocation2], 8
  %v1189 = vld [vmem:[%s1188] sm:$0x3]
  %v1190 = vadd.f32 %v1182, %v1189
  %v1191 = vxor.u32 %v1187, 2147483648
  %v1192 = vmul.f32 %v1191, 1.442695
  %v1193 = vpow.pop %v1192
  %v1194 = vadd.f32 %v1193, 1.0
  %v1195 = vrcp.pop %v1194
  %v1196 = vmul.f32 1.0, %v1195
  %v1197 = vxor.u32 %v1190, 2147483648
  %v1198 = vmul.f32 %v1197, 1.442695
  %v1199 = vpow.pop %v1198
  %v1200 = vadd.f32 %v1199, 1.0
  %v1201 = vrcp.pop %v1200
  %v1202 = vmul.f32 1.0, %v1201
  %v1203 = vtanh.pop %v1187
  %v1204 = vtanh.pop %v1190
  %v1205 = vmul.f32 %v1196, %v1075
  %1207 = vrot.lane.b32.xlu0 %v1203, 80
  %v1208 = vpop.permute.xlu0 %1207
  %v1210 = vmul.f32 %v1196, %v1208
  %1212 = vrot.lane.b32.xlu0 %v1210, 16
  %v1213 = vpop.permute.xlu0 %1212
  %v1215 = vadd.f32 %v1205, %v1213
  %v1216 = vmul.f32 %v1202, %v1086
  %1218 = vrot.lane.b32.xlu0 %v1204, 80
  %v1219 = vpop.permute.xlu0 %1218
  %v1221 = vmul.f32 %v1202, %v1219
  %1223 = vrot.lane.b32.xlu0 %v1221, 16
  %v1224 = vpop.permute.xlu0 %1223
  %v1226 = vadd.f32 %v1216, %v1224
  %v1227 = vtanh.pop %v1215
  %1229 = vrot.lane.b32.xlu0 %v1227, 16
  %v1230 = vpop.permute.xlu0 %1229
  %v1232 = vmul.f32 %v1196, %v1230
  %v1233 = vtanh.pop %v1226
  %1235 = vrot.lane.b32.xlu0 %v1233, 16
  %v1236 = vpop.permute.xlu0 %1235
  %v1238 = vmul.f32 %v1202, %v1236
  %1240 = vrot.lane.b32.xlu0 %v1232, 96
  %v1241 = vpop.permute.xlu0 %1240
  %s1243 = scalar_lea.vmem [#allocation3], 6
  %1244 = vst.msk [vmem:[%s1243] sm:$0x3] %vm822, %v1241
  %1246 = vrot.lane.b32.xlu0 %v1238, 48
  %v1247 = vpop.permute.xlu0 %1246
  %s1249 = scalar_lea.vmem [#allocation3], 8
  %1250 = vst.msk [vmem:[%s1249] sm:$0x3] %vm829, %v1247
  %v1251 = vsel %vm682, %v1241, %v1247
  %v1253 = vsel %vm322, %v1251, 0
  %1255 = vmatprep.subr.mxu0 0.0
  %1256 = vmatpush1.msra.mxu0 0.0
  %1257 = vmatprep.subr.mxu0 0.0
  %1258 = vmatpush1.msra.mxu0 0.0
  %1259 = vmatprep.subr.mxu0 0.0
  %1260 = vmatpush1.msra.mxu0 0.0
  %1261 = vmatprep.subr.mxu0 0.0
  %1262 = vmatpush1.msra.mxu0 0.0
  %1263 = vmatprep.subr.mxu0 0.0
  %1264 = vmatpush1.msra.mxu0 0.0
  %1265 = vmatprep.subr.mxu0 0.0
  %1266 = vmatpush1.msra.mxu0 0.0
  %1267 = vmatprep.subr.mxu0 0.0
  %1268 = vmatpush1.msra.mxu0 0.0
  %1269 = vmatprep.subr.mxu0 0.0
  %1270 = vmatpush1.msra.mxu0 0.0
  %1271 = vmatprep.subr.mxu0 0.0
  %1272 = vmatpush1.msra.mxu0 0.0
  %1273 = vmatprep.subr.mxu0 0.0
  %1274 = vmatpush1.msra.mxu0 0.0
  %1275 = vmatprep.subr.mxu0 0.0
  %1276 = vmatpush1.msra.mxu0 0.0
  %1277 = vmatprep.subr.mxu0 0.0
  %1278 = vmatpush1.msra.mxu0 0.0
  %1279 = vmatprep.subr.mxu0 0.0
  %1280 = vmatpush1.msra.mxu0 %v671
  %1281 = vmatprep.subr.mxu0 0.0
  %1282 = vmatpush1.msra.mxu0 %v670
  %1283 = vmatprep.subr.mxu0 0.0
  %1284 = vmatpush1.msra.mxu0 %v669
  %1285 = vmatprep.subr.mxu0 0.0
  %1286 = vmatpush1.msra.mxu0 %v668
  %1287 = vmatprep.subr.mxu0 0.0
  %1288 = vmatpush2.msra.mxu0 0.0
  %1289 = vmatprep.subr.mxu0 0.0
  %1290 = vmatpush2.msra.mxu0 0.0
  %1291 = vmatprep.subr.mxu0 0.0
  %1292 = vmatpush2.msra.mxu0 0.0
  %1293 = vmatprep.subr.mxu0 0.0
  %1294 = vmatpush2.msra.mxu0 0.0
  %1295 = vmatprep.subr.mxu0 0.0
  %1296 = vmatpush2.msra.mxu0 0.0
  %1297 = vmatprep.subr.mxu0 0.0
  %1298 = vmatpush2.msra.mxu0 0.0
  %1299 = vmatprep.subr.mxu0 0.0
  %1300 = vmatpush2.msra.mxu0 0.0
  %1301 = vmatprep.subr.mxu0 0.0
  %1302 = vmatpush2.msra.mxu0 0.0
  %1303 = vmatprep.subr.mxu0 0.0
  %1304 = vmatpush2.msra.mxu0 0.0
  %1305 = vmatprep.subr.mxu0 0.0
  %1306 = vmatpush2.msra.mxu0 0.0
  %1307 = vmatprep.subr.mxu0 0.0
  %1308 = vmatpush2.msra.mxu0 0.0
  %1309 = vmatprep.subr.mxu0 0.0
  %1310 = vmatpush2.msra.mxu0 0.0
  %1311 = vmatprep.subr.mxu0 0.0
  %1312 = vmatpush2.msra.mxu0 0.0
  %1313 = vmatprep.subr.mxu0 0.0
  %1314 = vmatpush2.msra.mxu0 0.0
  %1315 = vmatprep.subr.mxu0 0.0
  %1316 = vmatpush2.msra.mxu0 0.0
  %1317 = vmatprep.subr.mxu0 0.0
  %1318 = vmatpush2.msra.mxu0 0.0
  %1319 = vmatprep.mubr.f32.mxu0 0.0
  %1320 = vmatmul.mubr.f32.gmra.mxu0 %v1253
  %v1321 = vpop.f32.mrf.mxu0
  %v1322 = vadd.f32 0.0, %v1321
  %v1323 = vpop.f32.mrf.mxu0
  %1324 = vdwg.mxu0
  %v1325 = vld [vmem:[%s1188] sm:$0x3]
  %v1326 = vadd.f32 %v1322, %v1325
  %v1327 = vld [vmem:[%s1185] sm:$0x3]
  %v1328 = vadd.f32 %v1322, %v1327
  %v1329 = vxor.u32 %v1326, 2147483648
  %v1330 = vmul.f32 %v1329, 1.442695
  %v1331 = vpow.pop %v1330
  %v1332 = vadd.f32 %v1331, 1.0
  %v1333 = vrcp.pop %v1332
  %v1334 = vmul.f32 1.0, %v1333
  %v1335 = vxor.u32 %v1328, 2147483648
  %v1336 = vmul.f32 %v1335, 1.442695
  %v1337 = vpow.pop %v1336
  %v1338 = vadd.f32 %v1337, 1.0
  %v1339 = vrcp.pop %v1338
  %v1340 = vmul.f32 1.0, %v1339
  %v1341 = vtanh.pop %v1326
  %v1342 = vtanh.pop %v1328
  %v1343 = vmul.f32 %v1334, %v1215
  %1345 = vrot.lane.b32.xlu0 %v1341, 80
  %v1346 = vpop.permute.xlu0 %1345
  %v1348 = vmul.f32 %v1334, %v1346
  %1350 = vrot.lane.b32.xlu0 %v1348, 16
  %v1351 = vpop.permute.xlu0 %1350
  %v1353 = vadd.f32 %v1343, %v1351
  %v1354 = vmul.f32 %v1340, %v1226
  %1356 = vrot.lane.b32.xlu0 %v1342, 80
  %v1357 = vpop.permute.xlu0 %1356
  %v1359 = vmul.f32 %v1340, %v1357
  %1361 = vrot.lane.b32.xlu0 %v1359, 16
  %v1362 = vpop.permute.xlu0 %1361
  %v1364 = vadd.f32 %v1354, %v1362
  %v1365 = vtanh.pop %v1353
  %1367 = vrot.lane.b32.xlu0 %v1365, 16
  %v1368 = vpop.permute.xlu0 %1367
  %v1370 = vmul.f32 %v1334, %v1368
  %v1371 = vtanh.pop %v1364
  %1373 = vrot.lane.b32.xlu0 %v1371, 16
  %v1374 = vpop.permute.xlu0 %1373
  %v1376 = vmul.f32 %v1340, %v1374
  %1378 = vrot.lane.b32.xlu0 %v1370, 96
  %v1379 = vpop.permute.xlu0 %1378
  %1381 = vst.msk [vmem:[%s1249] sm:$0x3] %vm822, %v1379
  %1383 = vrot.lane.b32.xlu0 %v1376, 48
  %v1384 = vpop.permute.xlu0 %1383
  %1386 = vst.msk [vmem:[%s1243] sm:$0x3] %vm829, %v1384
  %v1387 = vsel %vm682, %v1379, %v1384
  %v1389 = vsel %vm322, %v1387, 0
  %1391 = vmatprep.subr.mxu0 0.0
  %1392 = vmatpush1.msra.mxu0 0.0
  %1393 = vmatprep.subr.mxu0 0.0
  %1394 = vmatpush1.msra.mxu0 0.0
  %1395 = vmatprep.subr.mxu0 0.0
  %1396 = vmatpush1.msra.mxu0 0.0
  %1397 = vmatprep.subr.mxu0 0.0
  %1398 = vmatpush1.msra.mxu0 0.0
  %1399 = vmatprep.subr.mxu0 0.0
  %1400 = vmatpush1.msra.mxu0 0.0
  %1401 = vmatprep.subr.mxu0 0.0
  %1402 = vmatpush1.msra.mxu0 0.0
  %1403 = vmatprep.subr.mxu0 0.0
  %1404 = vmatpush1.msra.mxu0 0.0
  %1405 = vmatprep.subr.mxu0 0.0
  %1406 = vmatpush1.msra.mxu0 0.0
  %1407 = vmatprep.subr.mxu0 0.0
  %1408 = vmatpush1.msra.mxu0 0.0
  %1409 = vmatprep.subr.mxu0 0.0
  %1410 = vmatpush1.msra.mxu0 0.0
  %1411 = vmatprep.subr.mxu0 0.0
  %1412 = vmatpush1.msra.mxu0 0.0
  %1413 = vmatprep.subr.mxu0 0.0
  %1414 = vmatpush1.msra.mxu0 0.0
  %1415 = vmatprep.subr.mxu0 0.0
  %1416 = vmatpush1.msra.mxu0 %v671
  %1417 = vmatprep.subr.mxu0 0.0
  %1418 = vmatpush1.msra.mxu0 %v670
  %1419 = vmatprep.subr.mxu0 0.0
  %1420 = vmatpush1.msra.mxu0 %v669
  %1421 = vmatprep.subr.mxu0 0.0
  %1422 = vmatpush1.msra.mxu0 %v668
  %1423 = vmatprep.subr.mxu0 0.0
  %1424 = vmatpush2.msra.mxu0 0.0
  %1425 = vmatprep.subr.mxu0 0.0
  %1426 = vmatpush2.msra.mxu0 0.0
  %1427 = vmatprep.subr.mxu0 0.0
  %1428 = vmatpush2.msra.mxu0 0.0
  %1429 = vmatprep.subr.mxu0 0.0
  %1430 = vmatpush2.msra.mxu0 0.0
  %1431 = vmatprep.subr.mxu0 0.0
  %1432 = vmatpush2.msra.mxu0 0.0
  %1433 = vmatprep.subr.mxu0 0.0
  %1434 = vmatpush2.msra.mxu0 0.0
  %1435 = vmatprep.subr.mxu0 0.0
  %1436 = vmatpush2.msra.mxu0 0.0
  %1437 = vmatprep.subr.mxu0 0.0
  %1438 = vmatpush2.msra.mxu0 0.0
  %1439 = vmatprep.subr.mxu0 0.0
  %1440 = vmatpush2.msra.mxu0 0.0
  %1441 = vmatprep.subr.mxu0 0.0
  %1442 = vmatpush2.msra.mxu0 0.0
  %1443 = vmatprep.subr.mxu0 0.0
  %1444 = vmatpush2.msra.mxu0 0.0
  %1445 = vmatprep.subr.mxu0 0.0
  %1446 = vmatpush2.msra.mxu0 0.0
  %1447 = vmatprep.subr.mxu0 0.0
  %1448 = vmatpush2.msra.mxu0 0.0
  %1449 = vmatprep.subr.mxu0 0.0
  %1450 = vmatpush2.msra.mxu0 0.0
  %1451 = vmatprep.subr.mxu0 0.0
  %1452 = vmatpush2.msra.mxu0 0.0
  %1453 = vmatprep.subr.mxu0 0.0
  %1454 = vmatpush2.msra.mxu0 0.0
  %1455 = vmatprep.mubr.f32.mxu0 0.0
  %1456 = vmatmul.mubr.f32.gmra.mxu0 %v1389
  %v1457 = vpop.f32.mrf.mxu0
  %v1458 = vadd.f32 0.0, %v1457
  %v1459 = vpop.f32.mrf.mxu0
  %1460 = vdwg.mxu0
  %v1461 = vld [vmem:[%s1048] sm:$0x3]
  %v1462 = vadd.f32 %v1458, %v1461
  %v1463 = vld [vmem:[%s1045] sm:$0x3]
  %v1464 = vadd.f32 %v1458, %v1463
  %v1465 = vxor.u32 %v1462, 2147483648
  %v1466 = vmul.f32 %v1465, 1.442695
  %v1467 = vpow.pop %v1466
  %v1468 = vadd.f32 %v1467, 1.0
  %v1469 = vrcp.pop %v1468
  %v1470 = vmul.f32 1.0, %v1469
  %v1471 = vxor.u32 %v1464, 2147483648
  %v1472 = vmul.f32 %v1471, 1.442695
  %v1473 = vpow.pop %v1472
  %v1474 = vadd.f32 %v1473, 1.0
  %v1475 = vrcp.pop %v1474
  %v1476 = vmul.f32 1.0, %v1475
  %v1477 = vtanh.pop %v1462
  %v1478 = vtanh.pop %v1464
  %v1479 = vmul.f32 %v1470, %v1353
  %1481 = vrot.lane.b32.xlu0 %v1477, 80
  %v1482 = vpop.permute.xlu0 %1481
  %v1484 = vmul.f32 %v1470, %v1482
  %1486 = vrot.lane.b32.xlu0 %v1484, 16
  %v1487 = vpop.permute.xlu0 %1486
  %v1489 = vadd.f32 %v1479, %v1487
  %v1490 = vmul.f32 %v1476, %v1364
  %1492 = vrot.lane.b32.xlu0 %v1478, 80
  %v1493 = vpop.permute.xlu0 %1492
  %v1495 = vmul.f32 %v1476, %v1493
  %1497 = vrot.lane.b32.xlu0 %v1495, 16
  %v1498 = vpop.permute.xlu0 %1497
  %v1500 = vadd.f32 %v1490, %v1498
  %v1501 = vtanh.pop %v1489
  %1503 = vrot.lane.b32.xlu0 %v1501, 16
  %v1504 = vpop.permute.xlu0 %1503
  %v1506 = vmul.f32 %v1470, %v1504
  %v1507 = vtanh.pop %v1500
  %1509 = vrot.lane.b32.xlu0 %v1507, 16
  %v1510 = vpop.permute.xlu0 %1509
  %v1512 = vmul.f32 %v1476, %v1510
  %1514 = vrot.lane.b32.xlu0 %v1506, 96
  %v1515 = vpop.permute.xlu0 %1514
  %1517 = vst.msk [vmem:[%s1109] sm:$0x3] %vm822, %v1515
  %1519 = vrot.lane.b32.xlu0 %v1512, 48
  %v1520 = vpop.permute.xlu0 %1519
  %1522 = vst.msk [vmem:[%s1103] sm:$0x3] %vm829, %v1520
  %v1523 = vsel %vm682, %v1515, %v1520
  %v1525 = vsel %vm322, %v1523, 0
  %1527 = vmatprep.subr.mxu0 0.0
  %1528 = vmatpush1.msra.mxu0 0.0
  %1529 = vmatprep.subr.mxu0 0.0
  %1530 = vmatpush1.msra.mxu0 0.0
  %1531 = vmatprep.subr.mxu0 0.0
  %1532 = vmatpush1.msra.mxu0 0.0
  %1533 = vmatprep.subr.mxu0 0.0
  %1534 = vmatpush1.msra.mxu0 0.0
  %1535 = vmatprep.subr.mxu0 0.0
  %1536 = vmatpush1.msra.mxu0 0.0
  %1537 = vmatprep.subr.mxu0 0.0
  %1538 = vmatpush1.msra.mxu0 0.0
  %1539 = vmatprep.subr.mxu0 0.0
  %1540 = vmatpush1.msra.mxu0 0.0
  %1541 = vmatprep.subr.mxu0 0.0
  %1542 = vmatpush1.msra.mxu0 0.0
  %1543 = vmatprep.subr.mxu0 0.0
  %1544 = vmatpush1.msra.mxu0 0.0
  %1545 = vmatprep.subr.mxu0 0.0
  %1546 = vmatpush1.msra.mxu0 0.0
  %1547 = vmatprep.subr.mxu0 0.0
  %1548 = vmatpush1.msra.mxu0 0.0
  %1549 = vmatprep.subr.mxu0 0.0
  %1550 = vmatpush1.msra.mxu0 0.0
  %1551 = vmatprep.subr.mxu0 0.0
  %1552 = vmatpush1.msra.mxu0 %v671
  %1553 = vmatprep.subr.mxu0 0.0
  %1554 = vmatpush1.msra.mxu0 %v670
  %1555 = vmatprep.subr.mxu0 0.0
  %1556 = vmatpush1.msra.mxu0 %v669
  %1557 = vmatprep.subr.mxu0 0.0
  %1558 = vmatpush1.msra.mxu0 %v668
  %1559 = vmatprep.subr.mxu0 0.0
  %1560 = vmatpush2.msra.mxu0 0.0
  %1561 = vmatprep.subr.mxu0 0.0
  %1562 = vmatpush2.msra.mxu0 0.0
  %1563 = vmatprep.subr.mxu0 0.0
  %1564 = vmatpush2.msra.mxu0 0.0
  %1565 = vmatprep.subr.mxu0 0.0
  %1566 = vmatpush2.msra.mxu0 0.0
  %1567 = vmatprep.subr.mxu0 0.0
  %1568 = vmatpush2.msra.mxu0 0.0
  %1569 = vmatprep.subr.mxu0 0.0
  %1570 = vmatpush2.msra.mxu0 0.0
  %1571 = vmatprep.subr.mxu0 0.0
  %1572 = vmatpush2.msra.mxu0 0.0
  %1573 = vmatprep.subr.mxu0 0.0
  %1574 = vmatpush2.msra.mxu0 0.0
  %1575 = vmatprep.subr.mxu0 0.0
  %1576 = vmatpush2.msra.mxu0 0.0
  %1577 = vmatprep.subr.mxu0 0.0
  %1578 = vmatpush2.msra.mxu0 0.0
  %1579 = vmatprep.subr.mxu0 0.0
  %1580 = vmatpush2.msra.mxu0 0.0
  %1581 = vmatprep.subr.mxu0 0.0
  %1582 = vmatpush2.msra.mxu0 0.0
  %1583 = vmatprep.subr.mxu0 0.0
  %1584 = vmatpush2.msra.mxu0 0.0
  %1585 = vmatprep.subr.mxu0 0.0
  %1586 = vmatpush2.msra.mxu0 0.0
  %1587 = vmatprep.subr.mxu0 0.0
  %1588 = vmatpush2.msra.mxu0 0.0
  %1589 = vmatprep.subr.mxu0 0.0
  %1590 = vmatpush2.msra.mxu0 0.0
  %1591 = vmatprep.mubr.f32.mxu0 0.0
  %1592 = vmatmul.mubr.f32.gmra.mxu0 %v1525
  %v1593 = vpop.f32.mrf.mxu0
  %v1594 = vadd.f32 0.0, %v1593
  %v1595 = vpop.f32.mrf.mxu0
  %1596 = vdwg.mxu0
  %v1597 = vld [vmem:[%s908] sm:$0x3]
  %v1598 = vadd.f32 %v1594, %v1597
  %v1599 = vld [vmem:[%s905] sm:$0x3]
  %v1600 = vadd.f32 %v1594, %v1599
  %v1601 = vxor.u32 %v1598, 2147483648
  %v1602 = vmul.f32 %v1601, 1.442695
  %v1603 = vpow.pop %v1602
  %v1604 = vadd.f32 %v1603, 1.0
  %v1605 = vrcp.pop %v1604
  %v1606 = vmul.f32 1.0, %v1605
  %v1607 = vxor.u32 %v1600, 2147483648
  %v1608 = vmul.f32 %v1607, 1.442695
  %v1609 = vpow.pop %v1608
  %v1610 = vadd.f32 %v1609, 1.0
  %v1611 = vrcp.pop %v1610
  %v1612 = vmul.f32 1.0, %v1611
  %v1613 = vtanh.pop %v1598
  %v1614 = vtanh.pop %v1600
  %v1615 = vmul.f32 %v1606, %v1489
  %1617 = vrot.lane.b32.xlu0 %v1613, 80
  %v1618 = vpop.permute.xlu0 %1617
  %v1620 = vmul.f32 %v1606, %v1618
  %1622 = vrot.lane.b32.xlu0 %v1620, 16
  %v1623 = vpop.permute.xlu0 %1622
  %v1625 = vadd.f32 %v1615, %v1623
  %v1626 = vmul.f32 %v1612, %v1500
  %1628 = vrot.lane.b32.xlu0 %v1614, 80
  %v1629 = vpop.permute.xlu0 %1628
  %v1631 = vmul.f32 %v1612, %v1629
  %1633 = vrot.lane.b32.xlu0 %v1631, 16
  %v1634 = vpop.permute.xlu0 %1633
  %v1636 = vadd.f32 %v1626, %v1634
  %v1637 = vtanh.pop %v1625
  %1639 = vrot.lane.b32.xlu0 %v1637, 16
  %v1640 = vpop.permute.xlu0 %1639
  %v1642 = vmul.f32 %v1606, %v1640
  %v1643 = vtanh.pop %v1636
  %1645 = vrot.lane.b32.xlu0 %v1643, 16
  %v1646 = vpop.permute.xlu0 %1645
  %v1648 = vmul.f32 %v1612, %v1646
  %1650 = vrot.lane.b32.xlu0 %v1642, 96
  %v1651 = vpop.permute.xlu0 %1650
  %1653 = vst.msk [vmem:[%s969] sm:$0x3] %vm822, %v1651
  %1655 = vrot.lane.b32.xlu0 %v1648, 48
  %v1656 = vpop.permute.xlu0 %1655
  %1658 = vst.msk [vmem:[%s963] sm:$0x3] %vm829, %v1656
  %v1659 = vsel %vm682, %v1651, %v1656
  %v1661 = vsel %vm322, %v1659, 0
  %1663 = vmatprep.subr.mxu0 0.0
  %1664 = vmatpush1.msra.mxu0 0.0
  %1665 = vmatprep.subr.mxu0 0.0
  %1666 = vmatpush1.msra.mxu0 0.0
  %1667 = vmatprep.subr.mxu0 0.0
  %1668 = vmatpush1.msra.mxu0 0.0
  %1669 = vmatprep.subr.mxu0 0.0
  %1670 = vmatpush1.msra.mxu0 0.0
  %1671 = vmatprep.subr.mxu0 0.0
  %1672 = vmatpush1.msra.mxu0 0.0
  %1673 = vmatprep.subr.mxu0 0.0
  %1674 = vmatpush1.msra.mxu0 0.0
  %1675 = vmatprep.subr.mxu0 0.0
  %1676 = vmatpush1.msra.mxu0 0.0
  %1677 = vmatprep.subr.mxu0 0.0
  %1678 = vmatpush1.msra.mxu0 0.0
  %1679 = vmatprep.subr.mxu0 0.0
  %1680 = vmatpush1.msra.mxu0 0.0
  %1681 = vmatprep.subr.mxu0 0.0
  %1682 = vmatpush1.msra.mxu0 0.0
  %1683 = vmatprep.subr.mxu0 0.0
  %1684 = vmatpush1.msra.mxu0 0.0
  %1685 = vmatprep.subr.mxu0 0.0
  %1686 = vmatpush1.msra.mxu0 0.0
  %1687 = vmatprep.subr.mxu0 0.0
  %1688 = vmatpush1.msra.mxu0 %v671
  %1689 = vmatprep.subr.mxu0 0.0
  %1690 = vmatpush1.msra.mxu0 %v670
  %1691 = vmatprep.subr.mxu0 0.0
  %1692 = vmatpush1.msra.mxu0 %v669
  %1693 = vmatprep.subr.mxu0 0.0
  %1694 = vmatpush1.msra.mxu0 %v668
  %1695 = vmatprep.subr.mxu0 0.0
  %1696 = vmatpush2.msra.mxu0 0.0
  %1697 = vmatprep.subr.mxu0 0.0
  %1698 = vmatpush2.msra.mxu0 0.0
  %1699 = vmatprep.subr.mxu0 0.0
  %1700 = vmatpush2.msra.mxu0 0.0
  %1701 = vmatprep.subr.mxu0 0.0
  %1702 = vmatpush2.msra.mxu0 0.0
  %1703 = vmatprep.subr.mxu0 0.0
  %1704 = vmatpush2.msra.mxu0 0.0
  %1705 = vmatprep.subr.mxu0 0.0
  %1706 = vmatpush2.msra.mxu0 0.0
  %1707 = vmatprep.subr.mxu0 0.0
  %1708 = vmatpush2.msra.mxu0 0.0
  %1709 = vmatprep.subr.mxu0 0.0
  %1710 = vmatpush2.msra.mxu0 0.0
  %1711 = vmatprep.subr.mxu0 0.0
  %1712 = vmatpush2.msra.mxu0 0.0
  %1713 = vmatprep.subr.mxu0 0.0
  %1714 = vmatpush2.msra.mxu0 0.0
  %1715 = vmatprep.subr.mxu0 0.0
  %1716 = vmatpush2.msra.mxu0 0.0
  %1717 = vmatprep.subr.mxu0 0.0
  %1718 = vmatpush2.msra.mxu0 0.0
  %1719 = vmatprep.subr.mxu0 0.0
  %1720 = vmatpush2.msra.mxu0 0.0
  %1721 = vmatprep.subr.mxu0 0.0
  %1722 = vmatpush2.msra.mxu0 0.0
  %1723 = vmatprep.subr.mxu0 0.0
  %1724 = vmatpush2.msra.mxu0 0.0
  %1725 = vmatprep.subr.mxu0 0.0
  %1726 = vmatpush2.msra.mxu0 0.0
  %1727 = vmatprep.mubr.f32.mxu0 0.0
  %1728 = vmatmul.mubr.f32.gmra.mxu0 %v1661
  %v1729 = vpop.f32.mrf.mxu0
  %v1730 = vadd.f32 0.0, %v1729
  %v1731 = vpop.f32.mrf.mxu0
  %1732 = vdwg.mxu0
  %v1733 = vld [vmem:[%s759] sm:$0x3]
  %v1734 = vadd.f32 %v1730, %v1733
  %v1735 = vld [vmem:[#allocation2] sm:$0x3]
  %v1736 = vadd.f32 %v1730, %v1735
  %v1737 = vxor.u32 %v1734, 2147483648
  %v1738 = vmul.f32 %v1737, 1.442695
  %v1739 = vpow.pop %v1738
  %v1740 = vadd.f32 %v1739, 1.0
  %v1741 = vrcp.pop %v1740
  %v1742 = vmul.f32 1.0, %v1741
  %v1743 = vxor.u32 %v1736, 2147483648
  %v1744 = vmul.f32 %v1743, 1.442695
  %v1745 = vpow.pop %v1744
  %v1746 = vadd.f32 %v1745, 1.0
  %v1747 = vrcp.pop %v1746
  %v1748 = vmul.f32 1.0, %v1747
  %v1749 = vtanh.pop %v1734
  %v1750 = vtanh.pop %v1736
  %v1751 = vmul.f32 %v1742, %v1625
  %1753 = vrot.lane.b32.xlu0 %v1749, 80
  %v1754 = vpop.permute.xlu0 %1753
  %v1756 = vmul.f32 %v1742, %v1754
  %1758 = vrot.lane.b32.xlu0 %v1756, 16
  %v1759 = vpop.permute.xlu0 %1758
  %v1761 = vadd.f32 %v1751, %v1759
  %v1762 = vmul.f32 %v1748, %v1636
  %1764 = vrot.lane.b32.xlu0 %v1750, 80
  %v1765 = vpop.permute.xlu0 %1764
  %v1767 = vmul.f32 %v1748, %v1765
  %1769 = vrot.lane.b32.xlu0 %v1767, 16
  %v1770 = vpop.permute.xlu0 %1769
  %v1772 = vadd.f32 %v1762, %v1770
  %v1773 = vtanh.pop %v1761
  %1775 = vrot.lane.b32.xlu0 %v1773, 16
  %v1776 = vpop.permute.xlu0 %1775
  %v1778 = vmul.f32 %v1742, %v1776
  %v1779 = vtanh.pop %v1772
  %1781 = vrot.lane.b32.xlu0 %v1779, 16
  %v1782 = vpop.permute.xlu0 %1781
  %v1784 = vmul.f32 %v1748, %v1782
  %1786 = vrot.lane.b32.xlu0 %v1778, 96
  %v1787 = vpop.permute.xlu0 %1786
  %1789 = vst.msk [vmem:[%s828] sm:$0x3] %vm822, %v1787
  %1791 = vrot.lane.b32.xlu0 %v1784, 48
  %v1792 = vpop.permute.xlu0 %1791
  %1794 = vst.msk [vmem:[#allocation3] sm:$0x3] %vm829, %v1792
  %v1795 = vld [vmem:[#allocation3] sm:$0x3]
  %v1796 = vld [vmem:[#allocation3 + $0x2] sm:$0x3]
  %v1797 = vld [vmem:[#allocation3 + $0x4] sm:$0x3]
  %v1798 = vld [vmem:[#allocation3 + $0x6] sm:$0x3]
  %v1799 = vld [vmem:[#allocation3 + $0x8] sm:$0x3]
  %v1800 = vld [vmem:[#allocation3 + $0xa] sm:$0x3]
  %v1801 = vld [vmem:[#allocation3 + $0xc] sm:$0x3]
  %v1802 = vld [vmem:[#allocation3 + $0xe] sm:$0x3]
  %v1803 = vld [vmem:[%s9] sm:$0xff]
  %v1804 = vld [vmem:[%s9 + $0x8] sm:$0xff]
  %v1805 = vld [vmem:[%s9 + $0x10] sm:$0xff]
  %v1806 = vld [vmem:[%s9 + $0x18] sm:$0xff]
  %v1807 = vld [vmem:[%s10] sm:$0x1]
  %v1809 = vlaneseq
  %v1810 = vshrl.u32 %v1809, 7
  %v1811 = vsub.s32 0, %v1810
  %v1812 = vrot.slane %v1807, %v1811
  %v1822 = vcombine.low %v1795, %v1796
  %v1823 = vcombine.low %v1797, %v1798
  %v1825 = vunpack.c.l.s4 1983009808
  %v1826 = vunpack.c.0.s8 %v1825
  %v1827 = vlaneseq
  %v1828 = vshrl.u32 %v1827, 7
  %v1829 = vsub.s32 %v1826, %v1828
  %v1830 = vrot.slane %v1822, %v1829
  %v1832 = vunpack.c.l.s4 1983009808
  %v1833 = vunpack.c.0.s8 %v1832
  %v1834 = vlaneseq
  %v1835 = vshrl.u32 %v1834, 7
  %v1836 = vsub.s32 %v1833, %v1835
  %v1837 = vrot.slane %v1823, %v1836
  %v1838 = vcombine.low %v1830, %v1837
  %v1839 = vcombine.low %v1799, %v1800
  %v1840 = vcombine.low %v1801, %v1802
  %v1842 = vunpack.c.l.s4 1983009808
  %v1843 = vunpack.c.0.s8 %v1842
  %v1844 = vlaneseq
  %v1845 = vshrl.u32 %v1844, 7
  %v1846 = vsub.s32 %v1843, %v1845
  %v1847 = vrot.slane %v1839, %v1846
  %v1849 = vunpack.c.l.s4 1983009808
  %v1850 = vunpack.c.0.s8 %v1849
  %v1851 = vlaneseq
  %v1852 = vshrl.u32 %v1851, 7
  %v1853 = vsub.s32 %v1850, %v1852
  %v1854 = vrot.slane %v1840, %v1853
  %v1855 = vcombine.low %v1847, %v1854
  %v1856 = vsel %vm322, %v1838, 0
  %v1858 = vsel %vm322, %v1855, 0
  %1860 = vmatprep.subr.mxu0 0.0
  %1861 = vmatpush1.msra.mxu0 0.0
  %1862 = vmatprep.subr.mxu0 0.0
  %1863 = vmatpush1.msra.mxu0 0.0
  %1864 = vmatprep.subr.mxu0 0.0
  %1865 = vmatpush1.msra.mxu0 0.0
  %1866 = vmatprep.subr.mxu0 0.0
  %1867 = vmatpush1.msra.mxu0 0.0
  %1868 = vmatprep.subr.mxu0 0.0
  %1869 = vmatpush1.msra.mxu0 0.0
  %1870 = vmatprep.subr.mxu0 0.0
  %1871 = vmatpush1.msra.mxu0 0.0
  %1872 = vmatprep.subr.mxu0 0.0
  %1873 = vmatpush1.msra.mxu0 0.0
  %1874 = vmatprep.subr.mxu0 0.0
  %1875 = vmatpush1.msra.mxu0 0.0
  %1876 = vmatprep.subr.mxu0 0.0
  %1877 = vmatpush1.msra.mxu0 0.0
  %1878 = vmatprep.subr.mxu0 0.0
  %1879 = vmatpush1.msra.mxu0 0.0
  %1880 = vmatprep.subr.mxu0 0.0
  %1881 = vmatpush1.msra.mxu0 0.0
  %1882 = vmatprep.subr.mxu0 0.0
  %1883 = vmatpush1.msra.mxu0 0.0
  %1884 = vmatprep.subr.mxu0 0.0
  %1885 = vmatpush1.msra.mxu0 %v1806
  %1886 = vmatprep.subr.mxu0 0.0
  %1887 = vmatpush1.msra.mxu0 %v1805
  %1888 = vmatprep.subr.mxu0 0.0
  %1889 = vmatpush1.msra.mxu0 %v1804
  %1890 = vmatprep.subr.mxu0 0.0
  %1891 = vmatpush1.msra.mxu0 %v1803
  %1892 = vmatprep.subr.mxu0 0.0
  %1893 = vmatpush2.msra.mxu0 0.0
  %1894 = vmatprep.subr.mxu0 0.0
  %1895 = vmatpush2.msra.mxu0 0.0
  %1896 = vmatprep.subr.mxu0 0.0
  %1897 = vmatpush2.msra.mxu0 0.0
  %1898 = vmatprep.subr.mxu0 0.0
  %1899 = vmatpush2.msra.mxu0 0.0
  %1900 = vmatprep.subr.mxu0 0.0
  %1901 = vmatpush2.msra.mxu0 0.0
  %1902 = vmatprep.subr.mxu0 0.0
  %1903 = vmatpush2.msra.mxu0 0.0
  %1904 = vmatprep.subr.mxu0 0.0
  %1905 = vmatpush2.msra.mxu0 0.0
  %1906 = vmatprep.subr.mxu0 0.0
  %1907 = vmatpush2.msra.mxu0 0.0
  %1908 = vmatprep.subr.mxu0 0.0
  %1909 = vmatpush2.msra.mxu0 0.0
  %1910 = vmatprep.subr.mxu0 0.0
  %1911 = vmatpush2.msra.mxu0 0.0
  %1912 = vmatprep.subr.mxu0 0.0
  %1913 = vmatpush2.msra.mxu0 0.0
  %1914 = vmatprep.subr.mxu0 0.0
  %1915 = vmatpush2.msra.mxu0 0.0
  %1916 = vmatprep.subr.mxu0 0.0
  %1917 = vmatpush2.msra.mxu0 0.0
  %1918 = vmatprep.subr.mxu0 0.0
  %1919 = vmatpush2.msra.mxu0 0.0
  %1920 = vmatprep.subr.mxu0 0.0
  %1921 = vmatpush2.msra.mxu0 0.0
  %1922 = vmatprep.subr.mxu0 0.0
  %1923 = vmatpush2.msra.mxu0 0.0
  %1924 = vmatprep.mubr.f32.mxu0 0.0
  %1925 = vmatmul.mubr.f32.gmra.mxu0 %v1856
  %v1926 = vpop.f32.mrf.mxu0
  %v1927 = vadd.f32 %v1812, %v1926
  %v1928 = vpop.f32.mrf.mxu0
  %1929 = vmatprep.mubr.f32.mxu0 0.0
  %1930 = vmatmul.mubr.f32.gmra.mxu0 %v1858
  %v1931 = vpop.f32.mrf.mxu0
  %v1932 = vadd.f32 %v1812, %v1931
  %v1933 = vpop.f32.mrf.mxu0
  %1934 = vdwg.mxu0
  %v1937 = vcombine.high %v1927, %v1927
  %v1939 = vunpack.c.l.s4 1983009808
  %v1940 = vunpack.c.0.s8 %v1939
  %v1941 = vlaneseq
  %v1942 = vshrl.u32 %v1941, 7
  %v1943 = vsub.s32 %v1940, %v1942
  %v1944 = vrot.slane %v1927, %v1943
  %v1946 = vunpack.c.l.s4 1983009808
  %v1947 = vunpack.c.0.s8 %v1946
  %v1948 = vlaneseq
  %v1949 = vshrl.u32 %v1948, 7
  %v1950 = vsub.s32 %v1947, %v1949
  %v1951 = vrot.slane %v1937, %v1950
  %v1952 = vcombine.high %v1944, %v1944
  %v1953 = vcombine.high %v1951, %v1951
  %v1954 = vcombine.high %v1932, %v1932
  %v1956 = vunpack.c.l.s4 1983009808
  %v1957 = vunpack.c.0.s8 %v1956
  %v1958 = vlaneseq
  %v1959 = vshrl.u32 %v1958, 7
  %v1960 = vsub.s32 %v1957, %v1959
  %v1961 = vrot.slane %v1932, %v1960
  %v1963 = vunpack.c.l.s4 1983009808
  %v1964 = vunpack.c.0.s8 %v1963
  %v1965 = vlaneseq
  %v1966 = vshrl.u32 %v1965, 7
  %v1967 = vsub.s32 %v1964, %v1966
  %v1968 = vrot.slane %v1954, %v1967
  %v1969 = vcombine.high %v1961, %v1961
  %v1970 = vcombine.high %v1968, %v1968
  %v1971 = vld [vmem:[%s11] sm:$0xff]
  %v1972 = vlaneseq
  %v1973 = vand.u32 %v1972, 127
  %v1974 = vld [vmem:[%s12] sm:$0x3]
  %v1977 = vunpack.c.l.s4 1966171168
  %v1978 = vunpack.c.0.s8 %v1977
  %v1979 = vlaneseq
  %v1980 = vshrl.u32 %v1979, 7
  %v1981 = vsub.s32 %v1978, %v1980
  %v1982 = vrot.slane %v1974, %v1981
  %v1983 = vcombine.high %v1982, %v1982
  %v1985 = vunpack.c.l.s4 1966171168
  %v1986 = vunpack.c.0.s8 %v1985
  %v1987 = vlaneseq
  %v1988 = vshrl.u32 %v1987, 7
  %v1989 = vsub.s32 %v1986, %v1988
  %v1990 = vrot.slane %v1982, %v1989
  %v1992 = vunpack.c.l.s4 1966171168
  %v1993 = vunpack.c.0.s8 %v1992
  %v1994 = vlaneseq
  %v1995 = vshrl.u32 %v1994, 7
  %v1996 = vsub.s32 %v1993, %v1995
  %v1997 = vrot.slane %v1983, %v1996
  %v1998 = vlaneseq
  %v1999 = vshrl.u32 %v1998, 7
  %v2000 = vsub.s32 0, %v1999
  %v2001 = vrot.slane %v1990, %v2000
  %v2002 = vlaneseq
  %v2003 = vshrl.u32 %v2002, 7
  %v2004 = vsub.s32 0, %v2003
  %v2005 = vrot.slane %v1997, %v2004
  %v2008 = vadd.f32 %v2001, %v1971
  %v2009 = vadd.f32 %v2005, %v1971
  %vm2010 = vcmask 64512
  %v2011 = vsel %vm2010, %v2008, -inf
  %2012 = vmax.xlane.f32.xlu0 %v2011
  %v2013 = vpop.xlane.xlu0 %2012
  %v2014 = vsel %vm2010, %v2009, -inf
  %2015 = vmax.xlane.f32.xlu0 %v2014
  %v2016 = vpop.xlane.xlu0 %2015
  %vm2017 = vcmp.ge.f32.partialorder %v2008, %v2013
  %vm2018 = vcmp.ge.f32.partialorder %v2009, %v2016
  %v2019 = vsel %vm2017, %v1973, 8
  %v2020 = vsel %vm2018, %v1973, 8
  %v2021 = vsel %vm2010, %v2019, 2147483647
  %v2022 = vand.u32 %v2021, 65535
  %v2023 = vshra.s32 %v2021, 16
  %v2024 = vcvt.s32.f32 %v2022
  %v2025 = vcvt.s32.f32 %v2023
  %2026 = vmin.xlane.f32.xlu0 %v2025
  %v2027 = vpop.xlane.xlu0 %2026
  %vm2028 = vcmp.eq.f32.partialorder %v2025, %v2027
  %v2029 = vsel %vm2028, %v2024, inf
  %2030 = vmin.xlane.f32.xlu0 %v2029
  %v2031 = vpop.xlane.xlu0 %2030
  %v2032 = vcvt.f32.s32 %v2031
  %v2033 = vcvt.f32.s32 %v2027
  %v2034 = vshll.u32 %v2033, 16
  %v2035 = vadd.s32 %v2034, %v2032
  %v2036 = vsel %vm2010, %v2020, 2147483647
  %v2037 = vand.u32 %v2036, 65535
  %v2038 = vshra.s32 %v2036, 16
  %v2039 = vcvt.s32.f32 %v2037
  %v2040 = vcvt.s32.f32 %v2038
  %2041 = vmin.xlane.f32.xlu0 %v2040
  %v2042 = vpop.xlane.xlu0 %2041
  %vm2043 = vcmp.eq.f32.partialorder %v2040, %v2042
  %v2044 = vsel %vm2043, %v2039, inf
  %2045 = vmin.xlane.f32.xlu0 %v2044
  %v2046 = vpop.xlane.xlu0 %2045
  %v2047 = vcvt.f32.s32 %v2046
  %v2048 = vcvt.f32.s32 %v2042
  %v2049 = vshll.u32 %v2048, 16
  %v2050 = vadd.s32 %v2049, %v2047
  %v2052 = vunpack.c.l.s4 1983009808
  %v2053 = vunpack.c.0.s8 %v2052
  %v2054 = vlaneseq
  %v2055 = vshrl.u32 %v2054, 7
  %v2056 = vsub.s32 %v2053, %v2055
  %v2057 = vrot.slane %v1944, %v2056
  %v2058 = vlaneseq
  %v2059 = vshrl.u32 %v2058, 7
  %v2060 = vsub.s32 0, %v2059
  %v2061 = vrot.slane %v2057, %v2060
  %2063 = vbcast.lane.b32.xlu0 %v2061, 256
  %v2064 = vpop.permute.xlu0 %2063
  %v2065 = vlaneseq
  %v2066 = vshrl.u32 %v2065, 7
  %v2067 = vsub.s32 1, %v2066
  %v2068 = vrot.slane %v2057, %v2067
  %2070 = vbcast.lane.b32.xlu0 %v2068, 256
  %v2071 = vpop.permute.xlu0 %2070
  %v2074 = vadd.f32 %v2013, %v2064
  %v2075 = vadd.f32 %v2016, %v2071
  %v2077 = vlaneseq
  %v2078 = vshrl.u32 %v2077, 7
  %v2079 = vsub.s32 0, %v2078
  %v2080 = vrot.slane %v1971, %v2079
  %2082 = vbcast.lane.b32.xlu0 %v2080, 256
  %v2083 = vpop.permute.xlu0 %2082
  %v2084 = vlaneseq
  %v2085 = vshrl.u32 %v2084, 7
  %v2086 = vsub.s32 1, %v2085
  %v2087 = vrot.slane %v1971, %v2086
  %2089 = vbcast.lane.b32.xlu0 %v2087, 256
  %v2090 = vpop.permute.xlu0 %2089
  %v2091 = vlaneseq
  %v2092 = vshrl.u32 %v2091, 7
  %v2093 = vsub.s32 2, %v2092
  %v2094 = vrot.slane %v1971, %v2093
  %2096 = vbcast.lane.b32.xlu0 %v2094, 256
  %v2097 = vpop.permute.xlu0 %2096
  %v2098 = vlaneseq
  %v2099 = vshrl.u32 %v2098, 7
  %v2100 = vsub.s32 3, %v2099
  %v2101 = vrot.slane %v1971, %v2100
  %2103 = vbcast.lane.b32.xlu0 %v2101, 256
  %v2104 = vpop.permute.xlu0 %2103
  %v2105 = vlaneseq
  %v2106 = vshrl.u32 %v2105, 7
  %v2107 = vsub.s32 4, %v2106
  %v2108 = vrot.slane %v1971, %v2107
  %2110 = vbcast.lane.b32.xlu0 %v2108, 256
  %v2111 = vpop.permute.xlu0 %2110
  %v2112 = vlaneseq
  %v2113 = vshrl.u32 %v2112, 7
  %v2114 = vsub.s32 5, %v2113
  %v2115 = vrot.slane %v1971, %v2114
  %2117 = vbcast.lane.b32.xlu0 %v2115, 256
  %v2118 = vpop.permute.xlu0 %2117
  %v2119 = vlaneseq
  %v2120 = vshrl.u32 %v2119, 7
  %v2121 = vsub.s32 6, %v2120
  %v2122 = vrot.slane %v1971, %v2121
  %2124 = vbcast.lane.b32.xlu0 %v2122, 256
  %v2125 = vpop.permute.xlu0 %2124
  %v2126 = vlaneseq
  %v2127 = vshrl.u32 %v2126, 7
  %v2128 = vsub.s32 7, %v2127
  %v2129 = vrot.slane %v1971, %v2128
  %2131 = vbcast.lane.b32.xlu0 %v2129, 256
  %v2132 = vpop.permute.xlu0 %2131
  %v2141 = vadd.f32 %v2074, %v2083
  %v2142 = vadd.f32 %v2074, %v2090
  %v2143 = vadd.f32 %v2074, %v2097
  %v2144 = vadd.f32 %v2074, %v2104
  %v2145 = vadd.f32 %v2074, %v2111
  %v2146 = vadd.f32 %v2074, %v2118
  %v2147 = vadd.f32 %v2074, %v2125
  %v2148 = vadd.f32 %v2074, %v2132
  %v2149 = vadd.f32 %v2075, %v2083
  %v2150 = vadd.f32 %v2075, %v2090
  %v2151 = vadd.f32 %v2075, %v2097
  %v2152 = vadd.f32 %v2075, %v2104
  %v2153 = vadd.f32 %v2075, %v2111
  %v2154 = vadd.f32 %v2075, %v2118
  %v2155 = vadd.f32 %v2075, %v2125
  %v2156 = vadd.f32 %v2075, %v2132
  %2173 = vset.pattern.permute.xlu0 0
  %2174 = vperm.xlu0 %2173, %v2141
  %v2175 = vpop.permute.xlu0 %2174
  %2176 = vset.pattern.permute.xlu0 0
  %2177 = vperm.xlu0 %2176, %v2142
  %v2178 = vpop.permute.xlu0 %2177
  %2179 = vset.pattern.permute.xlu0 0
  %2180 = vperm.xlu0 %2179, %v2143
  %v2181 = vpop.permute.xlu0 %2180
  %2182 = vset.pattern.permute.xlu0 0
  %2183 = vperm.xlu0 %2182, %v2144
  %v2184 = vpop.permute.xlu0 %2183
  %2185 = vset.pattern.permute.xlu0 0
  %2186 = vperm.xlu0 %2185, %v2145
  %v2187 = vpop.permute.xlu0 %2186
  %2188 = vset.pattern.permute.xlu0 0
  %2189 = vperm.xlu0 %2188, %v2146
  %v2190 = vpop.permute.xlu0 %2189
  %2191 = vset.pattern.permute.xlu0 0
  %2192 = vperm.xlu0 %2191, %v2147
  %v2193 = vpop.permute.xlu0 %2192
  %2194 = vset.pattern.permute.xlu0 0
  %2195 = vperm.xlu0 %2194, %v2148
  %v2196 = vpop.permute.xlu0 %2195
  %2197 = vset.pattern.permute.xlu0 0
  %2198 = vperm.xlu0 %2197, %v2149
  %v2199 = vpop.permute.xlu0 %2198
  %2200 = vset.pattern.permute.xlu0 0
  %2201 = vperm.xlu0 %2200, %v2150
  %v2202 = vpop.permute.xlu0 %2201
  %2203 = vset.pattern.permute.xlu0 0
  %2204 = vperm.xlu0 %2203, %v2151
  %v2205 = vpop.permute.xlu0 %2204
  %2206 = vset.pattern.permute.xlu0 0
  %2207 = vperm.xlu0 %2206, %v2152
  %v2208 = vpop.permute.xlu0 %2207
  %2209 = vset.pattern.permute.xlu0 0
  %2210 = vperm.xlu0 %2209, %v2153
  %v2211 = vpop.permute.xlu0 %2210
  %2212 = vset.pattern.permute.xlu0 0
  %2213 = vperm.xlu0 %2212, %v2154
  %v2214 = vpop.permute.xlu0 %2213
  %2215 = vset.pattern.permute.xlu0 0
  %2216 = vperm.xlu0 %2215, %v2155
  %v2217 = vpop.permute.xlu0 %2216
  %2218 = vset.pattern.permute.xlu0 0
  %2219 = vperm.xlu0 %2218, %v2156
  %v2220 = vpop.permute.xlu0 %2219
  %v2221 = vlaneseq
  %v2222 = vshrl.u32 %v2221, 7
  %v2223 = vsub.s32 %v1973, %v2222
  %v2224 = vrot.slane %v2175, %v2223
  %v2225 = vlaneseq
  %v2226 = vshrl.u32 %v2225, 7
  %v2227 = vsub.s32 %v1973, %v2226
  %v2228 = vrot.slane %v2178, %v2227
  %v2229 = vlaneseq
  %v2230 = vshrl.u32 %v2229, 7
  %v2231 = vsub.s32 %v1973, %v2230
  %v2232 = vrot.slane %v2181, %v2231
  %v2233 = vlaneseq
  %v2234 = vshrl.u32 %v2233, 7
  %v2235 = vsub.s32 %v1973, %v2234
  %v2236 = vrot.slane %v2184, %v2235
  %v2237 = vlaneseq
  %v2238 = vshrl.u32 %v2237, 7
  %v2239 = vsub.s32 %v1973, %v2238
  %v2240 = vrot.slane %v2187, %v2239
  %v2241 = vlaneseq
  %v2242 = vshrl.u32 %v2241, 7
  %v2243 = vsub.s32 %v1973, %v2242
  %v2244 = vrot.slane %v2190, %v2243
  %v2245 = vlaneseq
  %v2246 = vshrl.u32 %v2245, 7
  %v2247 = vsub.s32 %v1973, %v2246
  %v2248 = vrot.slane %v2193, %v2247
  %v2249 = vlaneseq
  %v2250 = vshrl.u32 %v2249, 7
  %v2251 = vsub.s32 %v1973, %v2250
  %v2252 = vrot.slane %v2196, %v2251
  %v2253 = vlaneseq
  %v2254 = vshrl.u32 %v2253, 7
  %v2255 = vsub.s32 %v1973, %v2254
  %v2256 = vrot.slane %v2199, %v2255
  %v2257 = vlaneseq
  %v2258 = vshrl.u32 %v2257, 7
  %v2259 = vsub.s32 %v1973, %v2258
  %v2260 = vrot.slane %v2202, %v2259
  %v2261 = vlaneseq
  %v2262 = vshrl.u32 %v2261, 7
  %v2263 = vsub.s32 %v1973, %v2262
  %v2264 = vrot.slane %v2205, %v2263
  %v2265 = vlaneseq
  %v2266 = vshrl.u32 %v2265, 7
  %v2267 = vsub.s32 %v1973, %v2266
  %v2268 = vrot.slane %v2208, %v2267
  %v2269 = vlaneseq
  %v2270 = vshrl.u32 %v2269, 7
  %v2271 = vsub.s32 %v1973, %v2270
  %v2272 = vrot.slane %v2211, %v2271
  %v2273 = vlaneseq
  %v2274 = vshrl.u32 %v2273, 7
  %v2275 = vsub.s32 %v1973, %v2274
  %v2276 = vrot.slane %v2214, %v2275
  %v2277 = vlaneseq
  %v2278 = vshrl.u32 %v2277, 7
  %v2279 = vsub.s32 %v1973, %v2278
  %v2280 = vrot.slane %v2217, %v2279
  %v2281 = vlaneseq
  %v2282 = vshrl.u32 %v2281, 7
  %v2283 = vsub.s32 %v1973, %v2282
  %v2284 = vrot.slane %v2220, %v2283
  %v2285 = vsel %vm459, %v2228, %v2224
  %vm2286 = vcmask 1042434
  %v2287 = vsel %vm2286, %v2232, %v2285
  %vm2288 = vcmask 1043459
  %v2289 = vsel %vm2288, %v2236, %v2287
  %vm2290 = vcmask 1044484
  %v2291 = vsel %vm2290, %v2240, %v2289
  %vm2292 = vcmask 1045509
  %v2293 = vsel %vm2292, %v2244, %v2291
  %vm2294 = vcmask 1046534
  %v2295 = vsel %vm2294, %v2248, %v2293
  %vm2296 = vcmask 1047559
  %v2297 = vsel %vm2296, %v2252, %v2295
  %v2298 = vsel %vm459, %v2260, %v2256
  %v2299 = vsel %vm2286, %v2264, %v2298
  %v2300 = vsel %vm2288, %v2268, %v2299
  %v2301 = vsel %vm2290, %v2272, %v2300
  %v2302 = vsel %vm2292, %v2276, %v2301
  %v2303 = vsel %vm2294, %v2280, %v2302
  %v2304 = vsel %vm2296, %v2284, %v2303
  %v2307 = vsel %vm2010, %v2297, -inf
  %2308 = vmax.xlane.f32.xlu0 %v2307
  %v2309 = vpop.xlane.xlu0 %2308
  %v2310 = vsel %vm2010, %v2304, -inf
  %2311 = vmax.xlane.f32.xlu0 %v2310
  %v2312 = vpop.xlane.xlu0 %2311
  %v2315 = vlaneseq
  %v2316 = vshrl.u32 %v2315, 7
  %v2317 = vsub.s32 0, %v2316
  %v2318 = vrot.slane %v2309, %v2317
  %v2319 = vlaneseq
  %v2320 = vshrl.u32 %v2319, 7
  %v2321 = vsub.s32 1, %v2320
  %v2322 = vrot.slane %v2309, %v2321
  %v2323 = vlaneseq
  %v2324 = vshrl.u32 %v2323, 7
  %v2325 = vsub.s32 2, %v2324
  %v2326 = vrot.slane %v2309, %v2325
  %v2327 = vlaneseq
  %v2328 = vshrl.u32 %v2327, 7
  %v2329 = vsub.s32 3, %v2328
  %v2330 = vrot.slane %v2309, %v2329
  %v2331 = vlaneseq
  %v2332 = vshrl.u32 %v2331, 7
  %v2333 = vsub.s32 4, %v2332
  %v2334 = vrot.slane %v2309, %v2333
  %v2335 = vlaneseq
  %v2336 = vshrl.u32 %v2335, 7
  %v2337 = vsub.s32 5, %v2336
  %v2338 = vrot.slane %v2309, %v2337
  %v2339 = vlaneseq
  %v2340 = vshrl.u32 %v2339, 7
  %v2341 = vsub.s32 6, %v2340
  %v2342 = vrot.slane %v2309, %v2341
  %v2343 = vlaneseq
  %v2344 = vshrl.u32 %v2343, 7
  %v2345 = vsub.s32 7, %v2344
  %v2346 = vrot.slane %v2309, %v2345
  %v2347 = vlaneseq
  %v2348 = vshrl.u32 %v2347, 7
  %v2349 = vsub.s32 0, %v2348
  %v2350 = vrot.slane %v2312, %v2349
  %v2351 = vlaneseq
  %v2352 = vshrl.u32 %v2351, 7
  %v2353 = vsub.s32 1, %v2352
  %v2354 = vrot.slane %v2312, %v2353
  %v2355 = vlaneseq
  %v2356 = vshrl.u32 %v2355, 7
  %v2357 = vsub.s32 2, %v2356
  %v2358 = vrot.slane %v2312, %v2357
  %v2359 = vlaneseq
  %v2360 = vshrl.u32 %v2359, 7
  %v2361 = vsub.s32 3, %v2360
  %v2362 = vrot.slane %v2312, %v2361
  %v2363 = vlaneseq
  %v2364 = vshrl.u32 %v2363, 7
  %v2365 = vsub.s32 4, %v2364
  %v2366 = vrot.slane %v2312, %v2365
  %v2367 = vlaneseq
  %v2368 = vshrl.u32 %v2367, 7
  %v2369 = vsub.s32 5, %v2368
  %v2370 = vrot.slane %v2312, %v2369
  %v2371 = vlaneseq
  %v2372 = vshrl.u32 %v2371, 7
  %v2373 = vsub.s32 6, %v2372
  %v2374 = vrot.slane %v2312, %v2373
  %v2375 = vlaneseq
  %v2376 = vshrl.u32 %v2375, 7
  %v2377 = vsub.s32 7, %v2376
  %v2378 = vrot.slane %v2312, %v2377
  %vm2395 = vcmp.ge.f32.partialorder %v2141, %v2318
  %vm2396 = vcmp.ge.f32.partialorder %v2142, %v2322
  %vm2397 = vcmp.ge.f32.partialorder %v2143, %v2326
  %vm2398 = vcmp.ge.f32.partialorder %v2144, %v2330
  %vm2399 = vcmp.ge.f32.partialorder %v2145, %v2334
  %vm2400 = vcmp.ge.f32.partialorder %v2146, %v2338
  %vm2401 = vcmp.ge.f32.partialorder %v2147, %v2342
  %vm2402 = vcmp.ge.f32.partialorder %v2148, %v2346
  %vm2403 = vcmp.ge.f32.partialorder %v2149, %v2350
  %vm2404 = vcmp.ge.f32.partialorder %v2150, %v2354
  %vm2405 = vcmp.ge.f32.partialorder %v2151, %v2358
  %vm2406 = vcmp.ge.f32.partialorder %v2152, %v2362
  %vm2407 = vcmp.ge.f32.partialorder %v2153, %v2366
  %vm2408 = vcmp.ge.f32.partialorder %v2154, %v2370
  %vm2409 = vcmp.ge.f32.partialorder %v2155, %v2374
  %vm2410 = vcmp.ge.f32.partialorder %v2156, %v2378
  %2412 = vbcast.lane.b32.xlu0 %v1973, 256
  %v2413 = vpop.permute.xlu0 %2412
  %v2414 = vsel %vm2395, %v2413, 8
  %v2415 = vsel %vm2396, %v2413, 8
  %v2416 = vsel %vm2397, %v2413, 8
  %v2417 = vsel %vm2398, %v2413, 8
  %v2418 = vsel %vm2399, %v2413, 8
  %v2419 = vsel %vm2400, %v2413, 8
  %v2420 = vsel %vm2401, %v2413, 8
  %v2421 = vsel %vm2402, %v2413, 8
  %v2422 = vsel %vm2403, %v2413, 8
  %v2423 = vsel %vm2404, %v2413, 8
  %v2424 = vsel %vm2405, %v2413, 8
  %v2425 = vsel %vm2406, %v2413, 8
  %v2426 = vsel %vm2407, %v2413, 8
  %v2427 = vsel %vm2408, %v2413, 8
  %v2428 = vsel %vm2409, %v2413, 8
  %v2429 = vsel %vm2410, %v2413, 8
  %2430 = vset.pattern.permute.xlu0 0
  %2431 = vperm.xlu0 %2430, %v2414
  %v2432 = vpop.permute.xlu0 %2431
  %2433 = vset.pattern.permute.xlu0 0
  %2434 = vperm.xlu0 %2433, %v2415
  %v2435 = vpop.permute.xlu0 %2434
  %2436 = vset.pattern.permute.xlu0 0
  %2437 = vperm.xlu0 %2436, %v2416
  %v2438 = vpop.permute.xlu0 %2437
  %2439 = vset.pattern.permute.xlu0 0
  %2440 = vperm.xlu0 %2439, %v2417
  %v2441 = vpop.permute.xlu0 %2440
  %2442 = vset.pattern.permute.xlu0 0
  %2443 = vperm.xlu0 %2442, %v2418
  %v2444 = vpop.permute.xlu0 %2443
  %2445 = vset.pattern.permute.xlu0 0
  %2446 = vperm.xlu0 %2445, %v2419
  %v2447 = vpop.permute.xlu0 %2446
  %2448 = vset.pattern.permute.xlu0 0
  %2449 = vperm.xlu0 %2448, %v2420
  %v2450 = vpop.permute.xlu0 %2449
  %2451 = vset.pattern.permute.xlu0 0
  %2452 = vperm.xlu0 %2451, %v2421
  %v2453 = vpop.permute.xlu0 %2452
  %2454 = vset.pattern.permute.xlu0 0
  %2455 = vperm.xlu0 %2454, %v2422
  %v2456 = vpop.permute.xlu0 %2455
  %2457 = vset.pattern.permute.xlu0 0
  %2458 = vperm.xlu0 %2457, %v2423
  %v2459 = vpop.permute.xlu0 %2458
  %2460 = vset.pattern.permute.xlu0 0
  %2461 = vperm.xlu0 %2460, %v2424
  %v2462 = vpop.permute.xlu0 %2461
  %2463 = vset.pattern.permute.xlu0 0
  %2464 = vperm.xlu0 %2463, %v2425
  %v2465 = vpop.permute.xlu0 %2464
  %2466 = vset.pattern.permute.xlu0 0
  %2467 = vperm.xlu0 %2466, %v2426
  %v2468 = vpop.permute.xlu0 %2467
  %2469 = vset.pattern.permute.xlu0 0
  %2470 = vperm.xlu0 %2469, %v2427
  %v2471 = vpop.permute.xlu0 %2470
  %2472 = vset.pattern.permute.xlu0 0
  %2473 = vperm.xlu0 %2472, %v2428
  %v2474 = vpop.permute.xlu0 %2473
  %2475 = vset.pattern.permute.xlu0 0
  %2476 = vperm.xlu0 %2475, %v2429
  %v2477 = vpop.permute.xlu0 %2476
  %v2478 = vlaneseq
  %v2479 = vshrl.u32 %v2478, 7
  %v2480 = vsub.s32 %v1973, %v2479
  %v2481 = vrot.slane %v2432, %v2480
  %v2482 = vlaneseq
  %v2483 = vshrl.u32 %v2482, 7
  %v2484 = vsub.s32 %v1973, %v2483
  %v2485 = vrot.slane %v2435, %v2484
  %v2486 = vlaneseq
  %v2487 = vshrl.u32 %v2486, 7
  %v2488 = vsub.s32 %v1973, %v2487
  %v2489 = vrot.slane %v2438, %v2488
  %v2490 = vlaneseq
  %v2491 = vshrl.u32 %v2490, 7
  %v2492 = vsub.s32 %v1973, %v2491
  %v2493 = vrot.slane %v2441, %v2492
  %v2494 = vlaneseq
  %v2495 = vshrl.u32 %v2494, 7
  %v2496 = vsub.s32 %v1973, %v2495
  %v2497 = vrot.slane %v2444, %v2496
  %v2498 = vlaneseq
  %v2499 = vshrl.u32 %v2498, 7
  %v2500 = vsub.s32 %v1973, %v2499
  %v2501 = vrot.slane %v2447, %v2500
  %v2502 = vlaneseq
  %v2503 = vshrl.u32 %v2502, 7
  %v2504 = vsub.s32 %v1973, %v2503
  %v2505 = vrot.slane %v2450, %v2504
  %v2506 = vlaneseq
  %v2507 = vshrl.u32 %v2506, 7
  %v2508 = vsub.s32 %v1973, %v2507
  %v2509 = vrot.slane %v2453, %v2508
  %v2510 = vlaneseq
  %v2511 = vshrl.u32 %v2510, 7
  %v2512 = vsub.s32 %v1973, %v2511
  %v2513 = vrot.slane %v2456, %v2512
  %v2514 = vlaneseq
  %v2515 = vshrl.u32 %v2514, 7
  %v2516 = vsub.s32 %v1973, %v2515
  %v2517 = vrot.slane %v2459, %v2516
  %v2518 = vlaneseq
  %v2519 = vshrl.u32 %v2518, 7
  %v2520 = vsub.s32 %v1973, %v2519
  %v2521 = vrot.slane %v2462, %v2520
  %v2522 = vlaneseq
  %v2523 = vshrl.u32 %v2522, 7
  %v2524 = vsub.s32 %v1973, %v2523
  %v2525 = vrot.slane %v2465, %v2524
  %v2526 = vlaneseq
  %v2527 = vshrl.u32 %v2526, 7
  %v2528 = vsub.s32 %v1973, %v2527
  %v2529 = vrot.slane %v2468, %v2528
  %v2530 = vlaneseq
  %v2531 = vshrl.u32 %v2530, 7
  %v2532 = vsub.s32 %v1973, %v2531
  %v2533 = vrot.slane %v2471, %v2532
  %v2534 = vlaneseq
  %v2535 = vshrl.u32 %v2534, 7
  %v2536 = vsub.s32 %v1973, %v2535
  %v2537 = vrot.slane %v2474, %v2536
  %v2538 = vlaneseq
  %v2539 = vshrl.u32 %v2538, 7
  %v2540 = vsub.s32 %v1973, %v2539
  %v2541 = vrot.slane %v2477, %v2540
  %v2542 = vsel %vm459, %v2485, %v2481
  %v2543 = vsel %vm2286, %v2489, %v2542
  %v2544 = vsel %vm2288, %v2493, %v2543
  %v2545 = vsel %vm2290, %v2497, %v2544
  %v2546 = vsel %vm2292, %v2501, %v2545
  %v2547 = vsel %vm2294, %v2505, %v2546
  %v2548 = vsel %vm2296, %v2509, %v2547
  %v2549 = vsel %vm459, %v2517, %v2513
  %v2550 = vsel %vm2286, %v2521, %v2549
  %v2551 = vsel %vm2288, %v2525, %v2550
  %v2552 = vsel %vm2290, %v2529, %v2551
  %v2553 = vsel %vm2292, %v2533, %v2552
  %v2554 = vsel %vm2294, %v2537, %v2553
  %v2555 = vsel %vm2296, %v2541, %v2554
  %v2556 = vsel %vm2010, %v2548, 2147483647
  %v2557 = vand.u32 %v2556, 65535
  %v2558 = vshra.s32 %v2556, 16
  %v2559 = vcvt.s32.f32 %v2557
  %v2560 = vcvt.s32.f32 %v2558
  %2561 = vmin.xlane.f32.xlu0 %v2560
  %v2562 = vpop.xlane.xlu0 %2561
  %vm2563 = vcmp.eq.f32.partialorder %v2560, %v2562
  %v2564 = vsel %vm2563, %v2559, inf
  %2565 = vmin.xlane.f32.xlu0 %v2564
  %v2566 = vpop.xlane.xlu0 %2565
  %v2567 = vcvt.f32.s32 %v2566
  %v2568 = vcvt.f32.s32 %v2562
  %v2569 = vshll.u32 %v2568, 16
  %v2570 = vadd.s32 %v2569, %v2567
  %v2571 = vsel %vm2010, %v2555, 2147483647
  %v2572 = vand.u32 %v2571, 65535
  %v2573 = vshra.s32 %v2571, 16
  %v2574 = vcvt.s32.f32 %v2572
  %v2575 = vcvt.s32.f32 %v2573
  %2576 = vmin.xlane.f32.xlu0 %v2575
  %v2577 = vpop.xlane.xlu0 %2576
  %vm2578 = vcmp.eq.f32.partialorder %v2575, %v2577
  %v2579 = vsel %vm2578, %v2574, inf
  %2580 = vmin.xlane.f32.xlu0 %v2579
  %v2581 = vpop.xlane.xlu0 %2580
  %v2582 = vcvt.f32.s32 %v2581
  %v2583 = vcvt.f32.s32 %v2577
  %v2584 = vshll.u32 %v2583, 16
  %v2585 = vadd.s32 %v2584, %v2582
  %v2587 = vunpack.c.l.s4 1983009808
  %v2588 = vunpack.c.0.s8 %v2587
  %v2589 = vlaneseq
  %v2590 = vshrl.u32 %v2589, 7
  %v2591 = vsub.s32 %v2588, %v2590
  %v2592 = vrot.slane %v1952, %v2591
  %v2593 = vlaneseq
  %v2594 = vshrl.u32 %v2593, 7
  %v2595 = vsub.s32 0, %v2594
  %v2596 = vrot.slane %v2592, %v2595
  %2598 = vbcast.lane.b32.xlu0 %v2596, 256
  %v2599 = vpop.permute.xlu0 %2598
  %v2600 = vlaneseq
  %v2601 = vshrl.u32 %v2600, 7
  %v2602 = vsub.s32 1, %v2601
  %v2603 = vrot.slane %v2592, %v2602
  %2605 = vbcast.lane.b32.xlu0 %v2603, 256
  %v2606 = vpop.permute.xlu0 %2605
  %v2609 = vadd.f32 %v2309, %v2599
  %v2610 = vadd.f32 %v2312, %v2606
  %v2611 = vadd.f32 %v2609, %v2083
  %v2612 = vadd.f32 %v2609, %v2090
  %v2613 = vadd.f32 %v2609, %v2097
  %v2614 = vadd.f32 %v2609, %v2104
  %v2615 = vadd.f32 %v2609, %v2111
  %v2616 = vadd.f32 %v2609, %v2118
  %v2617 = vadd.f32 %v2609, %v2125
  %v2618 = vadd.f32 %v2609, %v2132
  %v2619 = vadd.f32 %v2610, %v2083
  %v2620 = vadd.f32 %v2610, %v2090
  %v2621 = vadd.f32 %v2610, %v2097
  %v2622 = vadd.f32 %v2610, %v2104
  %v2623 = vadd.f32 %v2610, %v2111
  %v2624 = vadd.f32 %v2610, %v2118
  %v2625 = vadd.f32 %v2610, %v2125
  %v2626 = vadd.f32 %v2610, %v2132
  %2643 = vset.pattern.permute.xlu0 0
  %2644 = vperm.xlu0 %2643, %v2611
  %v2645 = vpop.permute.xlu0 %2644
  %2646 = vset.pattern.permute.xlu0 0
  %2647 = vperm.xlu0 %2646, %v2612
  %v2648 = vpop.permute.xlu0 %2647
  %2649 = vset.pattern.permute.xlu0 0
  %2650 = vperm.xlu0 %2649, %v2613
  %v2651 = vpop.permute.xlu0 %2650
  %2652 = vset.pattern.permute.xlu0 0
  %2653 = vperm.xlu0 %2652, %v2614
  %v2654 = vpop.permute.xlu0 %2653
  %2655 = vset.pattern.permute.xlu0 0
  %2656 = vperm.xlu0 %2655, %v2615
  %v2657 = vpop.permute.xlu0 %2656
  %2658 = vset.pattern.permute.xlu0 0
  %2659 = vperm.xlu0 %2658, %v2616
  %v2660 = vpop.permute.xlu0 %2659
  %2661 = vset.pattern.permute.xlu0 0
  %2662 = vperm.xlu0 %2661, %v2617
  %v2663 = vpop.permute.xlu0 %2662
  %2664 = vset.pattern.permute.xlu0 0
  %2665 = vperm.xlu0 %2664, %v2618
  %v2666 = vpop.permute.xlu0 %2665
  %2667 = vset.pattern.permute.xlu0 0
  %2668 = vperm.xlu0 %2667, %v2619
  %v2669 = vpop.permute.xlu0 %2668
  %2670 = vset.pattern.permute.xlu0 0
  %2671 = vperm.xlu0 %2670, %v2620
  %v2672 = vpop.permute.xlu0 %2671
  %2673 = vset.pattern.permute.xlu0 0
  %2674 = vperm.xlu0 %2673, %v2621
  %v2675 = vpop.permute.xlu0 %2674
  %2676 = vset.pattern.permute.xlu0 0
  %2677 = vperm.xlu0 %2676, %v2622
  %v2678 = vpop.permute.xlu0 %2677
  %2679 = vset.pattern.permute.xlu0 0
  %2680 = vperm.xlu0 %2679, %v2623
  %v2681 = vpop.permute.xlu0 %2680
  %2682 = vset.pattern.permute.xlu0 0
  %2683 = vperm.xlu0 %2682, %v2624
  %v2684 = vpop.permute.xlu0 %2683
  %2685 = vset.pattern.permute.xlu0 0
  %2686 = vperm.xlu0 %2685, %v2625
  %v2687 = vpop.permute.xlu0 %2686
  %2688 = vset.pattern.permute.xlu0 0
  %2689 = vperm.xlu0 %2688, %v2626
  %v2690 = vpop.permute.xlu0 %2689
  %v2691 = vlaneseq
  %v2692 = vshrl.u32 %v2691, 7
  %v2693 = vsub.s32 %v1973, %v2692
  %v2694 = vrot.slane %v2645, %v2693
  %v2695 = vlaneseq
  %v2696 = vshrl.u32 %v2695, 7
  %v2697 = vsub.s32 %v1973, %v2696
  %v2698 = vrot.slane %v2648, %v2697
  %v2699 = vlaneseq
  %v2700 = vshrl.u32 %v2699, 7
  %v2701 = vsub.s32 %v1973, %v2700
  %v2702 = vrot.slane %v2651, %v2701
  %v2703 = vlaneseq
  %v2704 = vshrl.u32 %v2703, 7
  %v2705 = vsub.s32 %v1973, %v2704
  %v2706 = vrot.slane %v2654, %v2705
  %v2707 = vlaneseq
  %v2708 = vshrl.u32 %v2707, 7
  %v2709 = vsub.s32 %v1973, %v2708
  %v2710 = vrot.slane %v2657, %v2709
  %v2711 = vlaneseq
  %v2712 = vshrl.u32 %v2711, 7
  %v2713 = vsub.s32 %v1973, %v2712
  %v2714 = vrot.slane %v2660, %v2713
  %v2715 = vlaneseq
  %v2716 = vshrl.u32 %v2715, 7
  %v2717 = vsub.s32 %v1973, %v2716
  %v2718 = vrot.slane %v2663, %v2717
  %v2719 = vlaneseq
  %v2720 = vshrl.u32 %v2719, 7
  %v2721 = vsub.s32 %v1973, %v2720
  %v2722 = vrot.slane %v2666, %v2721
  %v2723 = vlaneseq
  %v2724 = vshrl.u32 %v2723, 7
  %v2725 = vsub.s32 %v1973, %v2724
  %v2726 = vrot.slane %v2669, %v2725
  %v2727 = vlaneseq
  %v2728 = vshrl.u32 %v2727, 7
  %v2729 = vsub.s32 %v1973, %v2728
  %v2730 = vrot.slane %v2672, %v2729
  %v2731 = vlaneseq
  %v2732 = vshrl.u32 %v2731, 7
  %v2733 = vsub.s32 %v1973, %v2732
  %v2734 = vrot.slane %v2675, %v2733
  %v2735 = vlaneseq
  %v2736 = vshrl.u32 %v2735, 7
  %v2737 = vsub.s32 %v1973, %v2736
  %v2738 = vrot.slane %v2678, %v2737
  %v2739 = vlaneseq
  %v2740 = vshrl.u32 %v2739, 7
  %v2741 = vsub.s32 %v1973, %v2740
  %v2742 = vrot.slane %v2681, %v2741
  %v2743 = vlaneseq
  %v2744 = vshrl.u32 %v2743, 7
  %v2745 = vsub.s32 %v1973, %v2744
  %v2746 = vrot.slane %v2684, %v2745
  %v2747 = vlaneseq
  %v2748 = vshrl.u32 %v2747, 7
  %v2749 = vsub.s32 %v1973, %v2748
  %v2750 = vrot.slane %v2687, %v2749
  %v2751 = vlaneseq
  %v2752 = vshrl.u32 %v2751, 7
  %v2753 = vsub.s32 %v1973, %v2752
  %v2754 = vrot.slane %v2690, %v2753
  %v2755 = vsel %vm459, %v2698, %v2694
  %v2756 = vsel %vm2286, %v2702, %v2755
  %v2757 = vsel %vm2288, %v2706, %v2756
  %v2758 = vsel %vm2290, %v2710, %v2757
  %v2759 = vsel %vm2292, %v2714, %v2758
  %v2760 = vsel %vm2294, %v2718, %v2759
  %v2761 = vsel %vm2296, %v2722, %v2760
  %v2762 = vsel %vm459, %v2730, %v2726
  %v2763 = vsel %vm2286, %v2734, %v2762
  %v2764 = vsel %vm2288, %v2738, %v2763
  %v2765 = vsel %vm2290, %v2742, %v2764
  %v2766 = vsel %vm2292, %v2746, %v2765
  %v2767 = vsel %vm2294, %v2750, %v2766
  %v2768 = vsel %vm2296, %v2754, %v2767
  %v2771 = vsel %vm2010, %v2761, -inf
  %2772 = vmax.xlane.f32.xlu0 %v2771
  %v2773 = vpop.xlane.xlu0 %2772
  %v2774 = vsel %vm2010, %v2768, -inf
  %2775 = vmax.xlane.f32.xlu0 %v2774
  %v2776 = vpop.xlane.xlu0 %2775
  %v2779 = vlaneseq
  %v2780 = vshrl.u32 %v2779, 7
  %v2781 = vsub.s32 0, %v2780
  %v2782 = vrot.slane %v2773, %v2781
  %v2783 = vlaneseq
  %v2784 = vshrl.u32 %v2783, 7
  %v2785 = vsub.s32 1, %v2784
  %v2786 = vrot.slane %v2773, %v2785
  %v2787 = vlaneseq
  %v2788 = vshrl.u32 %v2787, 7
  %v2789 = vsub.s32 2, %v2788
  %v2790 = vrot.slane %v2773, %v2789
  %v2791 = vlaneseq
  %v2792 = vshrl.u32 %v2791, 7
  %v2793 = vsub.s32 3, %v2792
  %v2794 = vrot.slane %v2773, %v2793
  %v2795 = vlaneseq
  %v2796 = vshrl.u32 %v2795, 7
  %v2797 = vsub.s32 4, %v2796
  %v2798 = vrot.slane %v2773, %v2797
  %v2799 = vlaneseq
  %v2800 = vshrl.u32 %v2799, 7
  %v2801 = vsub.s32 5, %v2800
  %v2802 = vrot.slane %v2773, %v2801
  %v2803 = vlaneseq
  %v2804 = vshrl.u32 %v2803, 7
  %v2805 = vsub.s32 6, %v2804
  %v2806 = vrot.slane %v2773, %v2805
  %v2807 = vlaneseq
  %v2808 = vshrl.u32 %v2807, 7
  %v2809 = vsub.s32 7, %v2808
  %v2810 = vrot.slane %v2773, %v2809
  %v2811 = vlaneseq
  %v2812 = vshrl.u32 %v2811, 7
  %v2813 = vsub.s32 0, %v2812
  %v2814 = vrot.slane %v2776, %v2813
  %v2815 = vlaneseq
  %v2816 = vshrl.u32 %v2815, 7
  %v2817 = vsub.s32 1, %v2816
  %v2818 = vrot.slane %v2776, %v2817
  %v2819 = vlaneseq
  %v2820 = vshrl.u32 %v2819, 7
  %v2821 = vsub.s32 2, %v2820
  %v2822 = vrot.slane %v2776, %v2821
  %v2823 = vlaneseq
  %v2824 = vshrl.u32 %v2823, 7
  %v2825 = vsub.s32 3, %v2824
  %v2826 = vrot.slane %v2776, %v2825
  %v2827 = vlaneseq
  %v2828 = vshrl.u32 %v2827, 7
  %v2829 = vsub.s32 4, %v2828
  %v2830 = vrot.slane %v2776, %v2829
  %v2831 = vlaneseq
  %v2832 = vshrl.u32 %v2831, 7
  %v2833 = vsub.s32 5, %v2832
  %v2834 = vrot.slane %v2776, %v2833
  %v2835 = vlaneseq
  %v2836 = vshrl.u32 %v2835, 7
  %v2837 = vsub.s32 6, %v2836
  %v2838 = vrot.slane %v2776, %v2837
  %v2839 = vlaneseq
  %v2840 = vshrl.u32 %v2839, 7
  %v2841 = vsub.s32 7, %v2840
  %v2842 = vrot.slane %v2776, %v2841
  %vm2859 = vcmp.ge.f32.partialorder %v2611, %v2782
  %vm2860 = vcmp.ge.f32.partialorder %v2612, %v2786
  %vm2861 = vcmp.ge.f32.partialorder %v2613, %v2790
  %vm2862 = vcmp.ge.f32.partialorder %v2614, %v2794
  %vm2863 = vcmp.ge.f32.partialorder %v2615, %v2798
  %vm2864 = vcmp.ge.f32.partialorder %v2616, %v2802
  %vm2865 = vcmp.ge.f32.partialorder %v2617, %v2806
  %vm2866 = vcmp.ge.f32.partialorder %v2618, %v2810
  %vm2867 = vcmp.ge.f32.partialorder %v2619, %v2814
  %vm2868 = vcmp.ge.f32.partialorder %v2620, %v2818
  %vm2869 = vcmp.ge.f32.partialorder %v2621, %v2822
  %vm2870 = vcmp.ge.f32.partialorder %v2622, %v2826
  %vm2871 = vcmp.ge.f32.partialorder %v2623, %v2830
  %vm2872 = vcmp.ge.f32.partialorder %v2624, %v2834
  %vm2873 = vcmp.ge.f32.partialorder %v2625, %v2838
  %vm2874 = vcmp.ge.f32.partialorder %v2626, %v2842
  %v2875 = vsel %vm2859, %v2413, 8
  %v2876 = vsel %vm2860, %v2413, 8
  %v2877 = vsel %vm2861, %v2413, 8
  %v2878 = vsel %vm2862, %v2413, 8
  %v2879 = vsel %vm2863, %v2413, 8
  %v2880 = vsel %vm2864, %v2413, 8
  %v2881 = vsel %vm2865, %v2413, 8
  %v2882 = vsel %vm2866, %v2413, 8
  %v2883 = vsel %vm2867, %v2413, 8
  %v2884 = vsel %vm2868, %v2413, 8
  %v2885 = vsel %vm2869, %v2413, 8
  %v2886 = vsel %vm2870, %v2413, 8
  %v2887 = vsel %vm2871, %v2413, 8
  %v2888 = vsel %vm2872, %v2413, 8
  %v2889 = vsel %vm2873, %v2413, 8
  %v2890 = vsel %vm2874, %v2413, 8
  %2891 = vset.pattern.permute.xlu0 0
  %2892 = vperm.xlu0 %2891, %v2875
  %v2893 = vpop.permute.xlu0 %2892
  %2894 = vset.pattern.permute.xlu0 0
  %2895 = vperm.xlu0 %2894, %v2876
  %v2896 = vpop.permute.xlu0 %2895
  %2897 = vset.pattern.permute.xlu0 0
  %2898 = vperm.xlu0 %2897, %v2877
  %v2899 = vpop.permute.xlu0 %2898
  %2900 = vset.pattern.permute.xlu0 0
  %2901 = vperm.xlu0 %2900, %v2878
  %v2902 = vpop.permute.xlu0 %2901
  %2903 = vset.pattern.permute.xlu0 0
  %2904 = vperm.xlu0 %2903, %v2879
  %v2905 = vpop.permute.xlu0 %2904
  %2906 = vset.pattern.permute.xlu0 0
  %2907 = vperm.xlu0 %2906, %v2880
  %v2908 = vpop.permute.xlu0 %2907
  %2909 = vset.pattern.permute.xlu0 0
  %2910 = vperm.xlu0 %2909, %v2881
  %v2911 = vpop.permute.xlu0 %2910
  %2912 = vset.pattern.permute.xlu0 0
  %2913 = vperm.xlu0 %2912, %v2882
  %v2914 = vpop.permute.xlu0 %2913
  %2915 = vset.pattern.permute.xlu0 0
  %2916 = vperm.xlu0 %2915, %v2883
  %v2917 = vpop.permute.xlu0 %2916
  %2918 = vset.pattern.permute.xlu0 0
  %2919 = vperm.xlu0 %2918, %v2884
  %v2920 = vpop.permute.xlu0 %2919
  %2921 = vset.pattern.permute.xlu0 0
  %2922 = vperm.xlu0 %2921, %v2885
  %v2923 = vpop.permute.xlu0 %2922
  %2924 = vset.pattern.permute.xlu0 0
  %2925 = vperm.xlu0 %2924, %v2886
  %v2926 = vpop.permute.xlu0 %2925
  %2927 = vset.pattern.permute.xlu0 0
  %2928 = vperm.xlu0 %2927, %v2887
  %v2929 = vpop.permute.xlu0 %2928
  %2930 = vset.pattern.permute.xlu0 0
  %2931 = vperm.xlu0 %2930, %v2888
  %v2932 = vpop.permute.xlu0 %2931
  %2933 = vset.pattern.permute.xlu0 0
  %2934 = vperm.xlu0 %2933, %v2889
  %v2935 = vpop.permute.xlu0 %2934
  %2936 = vset.pattern.permute.xlu0 0
  %2937 = vperm.xlu0 %2936, %v2890
  %v2938 = vpop.permute.xlu0 %2937
  %v2939 = vlaneseq
  %v2940 = vshrl.u32 %v2939, 7
  %v2941 = vsub.s32 %v1973, %v2940
  %v2942 = vrot.slane %v2893, %v2941
  %v2943 = vlaneseq
  %v2944 = vshrl.u32 %v2943, 7
  %v2945 = vsub.s32 %v1973, %v2944
  %v2946 = vrot.slane %v2896, %v2945
  %v2947 = vlaneseq
  %v2948 = vshrl.u32 %v2947, 7
  %v2949 = vsub.s32 %v1973, %v2948
  %v2950 = vrot.slane %v2899, %v2949
  %v2951 = vlaneseq
  %v2952 = vshrl.u32 %v2951, 7
  %v2953 = vsub.s32 %v1973, %v2952
  %v2954 = vrot.slane %v2902, %v2953
  %v2955 = vlaneseq
  %v2956 = vshrl.u32 %v2955, 7
  %v2957 = vsub.s32 %v1973, %v2956
  %v2958 = vrot.slane %v2905, %v2957
  %v2959 = vlaneseq
  %v2960 = vshrl.u32 %v2959, 7
  %v2961 = vsub.s32 %v1973, %v2960
  %v2962 = vrot.slane %v2908, %v2961
  %v2963 = vlaneseq
  %v2964 = vshrl.u32 %v2963, 7
  %v2965 = vsub.s32 %v1973, %v2964
  %v2966 = vrot.slane %v2911, %v2965
  %v2967 = vlaneseq
  %v2968 = vshrl.u32 %v2967, 7
  %v2969 = vsub.s32 %v1973, %v2968
  %v2970 = vrot.slane %v2914, %v2969
  %v2971 = vlaneseq
  %v2972 = vshrl.u32 %v2971, 7
  %v2973 = vsub.s32 %v1973, %v2972
  %v2974 = vrot.slane %v2917, %v2973
  %v2975 = vlaneseq
  %v2976 = vshrl.u32 %v2975, 7
  %v2977 = vsub.s32 %v1973, %v2976
  %v2978 = vrot.slane %v2920, %v2977
  %v2979 = vlaneseq
  %v2980 = vshrl.u32 %v2979, 7
  %v2981 = vsub.s32 %v1973, %v2980
  %v2982 = vrot.slane %v2923, %v2981
  %v2983 = vlaneseq
  %v2984 = vshrl.u32 %v2983, 7
  %v2985 = vsub.s32 %v1973, %v2984
  %v2986 = vrot.slane %v2926, %v2985
  %v2987 = vlaneseq
  %v2988 = vshrl.u32 %v2987, 7
  %v2989 = vsub.s32 %v1973, %v2988
  %v2990 = vrot.slane %v2929, %v2989
  %v2991 = vlaneseq
  %v2992 = vshrl.u32 %v2991, 7
  %v2993 = vsub.s32 %v1973, %v2992
  %v2994 = vrot.slane %v2932, %v2993
  %v2995 = vlaneseq
  %v2996 = vshrl.u32 %v2995, 7
  %v2997 = vsub.s32 %v1973, %v2996
  %v2998 = vrot.slane %v2935, %v2997
  %v2999 = vlaneseq
  %v3000 = vshrl.u32 %v2999, 7
  %v3001 = vsub.s32 %v1973, %v3000
  %v3002 = vrot.slane %v2938, %v3001
  %v3003 = vsel %vm459, %v2946, %v2942
  %v3004 = vsel %vm2286, %v2950, %v3003
  %v3005 = vsel %vm2288, %v2954, %v3004
  %v3006 = vsel %vm2290, %v2958, %v3005
  %v3007 = vsel %vm2292, %v2962, %v3006
  %v3008 = vsel %vm2294, %v2966, %v3007
  %v3009 = vsel %vm2296, %v2970, %v3008
  %v3010 = vsel %vm459, %v2978, %v2974
  %v3011 = vsel %vm2286, %v2982, %v3010
  %v3012 = vsel %vm2288, %v2986, %v3011
  %v3013 = vsel %vm2290, %v2990, %v3012
  %v3014 = vsel %vm2292, %v2994, %v3013
  %v3015 = vsel %vm2294, %v2998, %v3014
  %v3016 = vsel %vm2296, %v3002, %v3015
  %v3017 = vsel %vm2010, %v3009, 2147483647
  %v3018 = vand.u32 %v3017, 65535
  %v3019 = vshra.s32 %v3017, 16
  %v3020 = vcvt.s32.f32 %v3018
  %v3021 = vcvt.s32.f32 %v3019
  %3022 = vmin.xlane.f32.xlu0 %v3021
  %v3023 = vpop.xlane.xlu0 %3022
  %vm3024 = vcmp.eq.f32.partialorder %v3021, %v3023
  %v3025 = vsel %vm3024, %v3020, inf
  %3026 = vmin.xlane.f32.xlu0 %v3025
  %v3027 = vpop.xlane.xlu0 %3026
  %v3028 = vcvt.f32.s32 %v3027
  %v3029 = vcvt.f32.s32 %v3023
  %v3030 = vshll.u32 %v3029, 16
  %v3031 = vadd.s32 %v3030, %v3028
  %v3032 = vsel %vm2010, %v3016, 2147483647
  %v3033 = vand.u32 %v3032, 65535
  %v3034 = vshra.s32 %v3032, 16
  %v3035 = vcvt.s32.f32 %v3033
  %v3036 = vcvt.s32.f32 %v3034
  %3037 = vmin.xlane.f32.xlu0 %v3036
  %v3038 = vpop.xlane.xlu0 %3037
  %vm3039 = vcmp.eq.f32.partialorder %v3036, %v3038
  %v3040 = vsel %vm3039, %v3035, inf
  %3041 = vmin.xlane.f32.xlu0 %v3040
  %v3042 = vpop.xlane.xlu0 %3041
  %v3043 = vcvt.f32.s32 %v3042
  %v3044 = vcvt.f32.s32 %v3038
  %v3045 = vshll.u32 %v3044, 16
  %v3046 = vadd.s32 %v3045, %v3043
  %v3048 = vunpack.c.l.s4 1983009808
  %v3049 = vunpack.c.0.s8 %v3048
  %v3050 = vlaneseq
  %v3051 = vshrl.u32 %v3050, 7
  %v3052 = vsub.s32 %v3049, %v3051
  %v3053 = vrot.slane %v1951, %v3052
  %v3054 = vlaneseq
  %v3055 = vshrl.u32 %v3054, 7
  %v3056 = vsub.s32 0, %v3055
  %v3057 = vrot.slane %v3053, %v3056
  %3059 = vbcast.lane.b32.xlu0 %v3057, 256
  %v3060 = vpop.permute.xlu0 %3059
  %v3061 = vlaneseq
  %v3062 = vshrl.u32 %v3061, 7
  %v3063 = vsub.s32 1, %v3062
  %v3064 = vrot.slane %v3053, %v3063
  %3066 = vbcast.lane.b32.xlu0 %v3064, 256
  %v3067 = vpop.permute.xlu0 %3066
  %v3070 = vadd.f32 %v2773, %v3060
  %v3071 = vadd.f32 %v2776, %v3067
  %v3072 = vadd.f32 %v3070, %v2083
  %v3073 = vadd.f32 %v3070, %v2090
  %v3074 = vadd.f32 %v3070, %v2097
  %v3075 = vadd.f32 %v3070, %v2104
  %v3076 = vadd.f32 %v3070, %v2111
  %v3077 = vadd.f32 %v3070, %v2118
  %v3078 = vadd.f32 %v3070, %v2125
  %v3079 = vadd.f32 %v3070, %v2132
  %v3080 = vadd.f32 %v3071, %v2083
  %v3081 = vadd.f32 %v3071, %v2090
  %v3082 = vadd.f32 %v3071, %v2097
  %v3083 = vadd.f32 %v3071, %v2104
  %v3084 = vadd.f32 %v3071, %v2111
  %v3085 = vadd.f32 %v3071, %v2118
  %v3086 = vadd.f32 %v3071, %v2125
  %v3087 = vadd.f32 %v3071, %v2132
  %3104 = vset.pattern.permute.xlu0 0
  %3105 = vperm.xlu0 %3104, %v3072
  %v3106 = vpop.permute.xlu0 %3105
  %3107 = vset.pattern.permute.xlu0 0
  %3108 = vperm.xlu0 %3107, %v3073
  %v3109 = vpop.permute.xlu0 %3108
  %3110 = vset.pattern.permute.xlu0 0
  %3111 = vperm.xlu0 %3110, %v3074
  %v3112 = vpop.permute.xlu0 %3111
  %3113 = vset.pattern.permute.xlu0 0
  %3114 = vperm.xlu0 %3113, %v3075
  %v3115 = vpop.permute.xlu0 %3114
  %3116 = vset.pattern.permute.xlu0 0
  %3117 = vperm.xlu0 %3116, %v3076
  %v3118 = vpop.permute.xlu0 %3117
  %3119 = vset.pattern.permute.xlu0 0
  %3120 = vperm.xlu0 %3119, %v3077
  %v3121 = vpop.permute.xlu0 %3120
  %3122 = vset.pattern.permute.xlu0 0
  %3123 = vperm.xlu0 %3122, %v3078
  %v3124 = vpop.permute.xlu0 %3123
  %3125 = vset.pattern.permute.xlu0 0
  %3126 = vperm.xlu0 %3125, %v3079
  %v3127 = vpop.permute.xlu0 %3126
  %3128 = vset.pattern.permute.xlu0 0
  %3129 = vperm.xlu0 %3128, %v3080
  %v3130 = vpop.permute.xlu0 %3129
  %3131 = vset.pattern.permute.xlu0 0
  %3132 = vperm.xlu0 %3131, %v3081
  %v3133 = vpop.permute.xlu0 %3132
  %3134 = vset.pattern.permute.xlu0 0
  %3135 = vperm.xlu0 %3134, %v3082
  %v3136 = vpop.permute.xlu0 %3135
  %3137 = vset.pattern.permute.xlu0 0
  %3138 = vperm.xlu0 %3137, %v3083
  %v3139 = vpop.permute.xlu0 %3138
  %3140 = vset.pattern.permute.xlu0 0
  %3141 = vperm.xlu0 %3140, %v3084
  %v3142 = vpop.permute.xlu0 %3141
  %3143 = vset.pattern.permute.xlu0 0
  %3144 = vperm.xlu0 %3143, %v3085
  %v3145 = vpop.permute.xlu0 %3144
  %3146 = vset.pattern.permute.xlu0 0
  %3147 = vperm.xlu0 %3146, %v3086
  %v3148 = vpop.permute.xlu0 %3147
  %3149 = vset.pattern.permute.xlu0 0
  %3150 = vperm.xlu0 %3149, %v3087
  %v3151 = vpop.permute.xlu0 %3150
  %v3152 = vlaneseq
  %v3153 = vshrl.u32 %v3152, 7
  %v3154 = vsub.s32 %v1973, %v3153
  %v3155 = vrot.slane %v3106, %v3154
  %v3156 = vlaneseq
  %v3157 = vshrl.u32 %v3156, 7
  %v3158 = vsub.s32 %v1973, %v3157
  %v3159 = vrot.slane %v3109, %v3158
  %v3160 = vlaneseq
  %v3161 = vshrl.u32 %v3160, 7
  %v3162 = vsub.s32 %v1973, %v3161
  %v3163 = vrot.slane %v3112, %v3162
  %v3164 = vlaneseq
  %v3165 = vshrl.u32 %v3164, 7
  %v3166 = vsub.s32 %v1973, %v3165
  %v3167 = vrot.slane %v3115, %v3166
  %v3168 = vlaneseq
  %v3169 = vshrl.u32 %v3168, 7
  %v3170 = vsub.s32 %v1973, %v3169
  %v3171 = vrot.slane %v3118, %v3170
  %v3172 = vlaneseq
  %v3173 = vshrl.u32 %v3172, 7
  %v3174 = vsub.s32 %v1973, %v3173
  %v3175 = vrot.slane %v3121, %v3174
  %v3176 = vlaneseq
  %v3177 = vshrl.u32 %v3176, 7
  %v3178 = vsub.s32 %v1973, %v3177
  %v3179 = vrot.slane %v3124, %v3178
  %v3180 = vlaneseq
  %v3181 = vshrl.u32 %v3180, 7
  %v3182 = vsub.s32 %v1973, %v3181
  %v3183 = vrot.slane %v3127, %v3182
  %v3184 = vlaneseq
  %v3185 = vshrl.u32 %v3184, 7
  %v3186 = vsub.s32 %v1973, %v3185
  %v3187 = vrot.slane %v3130, %v3186
  %v3188 = vlaneseq
  %v3189 = vshrl.u32 %v3188, 7
  %v3190 = vsub.s32 %v1973, %v3189
  %v3191 = vrot.slane %v3133, %v3190
  %v3192 = vlaneseq
  %v3193 = vshrl.u32 %v3192, 7
  %v3194 = vsub.s32 %v1973, %v3193
  %v3195 = vrot.slane %v3136, %v3194
  %v3196 = vlaneseq
  %v3197 = vshrl.u32 %v3196, 7
  %v3198 = vsub.s32 %v1973, %v3197
  %v3199 = vrot.slane %v3139, %v3198
  %v3200 = vlaneseq
  %v3201 = vshrl.u32 %v3200, 7
  %v3202 = vsub.s32 %v1973, %v3201
  %v3203 = vrot.slane %v3142, %v3202
  %v3204 = vlaneseq
  %v3205 = vshrl.u32 %v3204, 7
  %v3206 = vsub.s32 %v1973, %v3205
  %v3207 = vrot.slane %v3145, %v3206
  %v3208 = vlaneseq
  %v3209 = vshrl.u32 %v3208, 7
  %v3210 = vsub.s32 %v1973, %v3209
  %v3211 = vrot.slane %v3148, %v3210
  %v3212 = vlaneseq
  %v3213 = vshrl.u32 %v3212, 7
  %v3214 = vsub.s32 %v1973, %v3213
  %v3215 = vrot.slane %v3151, %v3214
  %v3216 = vsel %vm459, %v3159, %v3155
  %v3217 = vsel %vm2286, %v3163, %v3216
  %v3218 = vsel %vm2288, %v3167, %v3217
  %v3219 = vsel %vm2290, %v3171, %v3218
  %v3220 = vsel %vm2292, %v3175, %v3219
  %v3221 = vsel %vm2294, %v3179, %v3220
  %v3222 = vsel %vm2296, %v3183, %v3221
  %v3223 = vsel %vm459, %v3191, %v3187
  %v3224 = vsel %vm2286, %v3195, %v3223
  %v3225 = vsel %vm2288, %v3199, %v3224
  %v3226 = vsel %vm2290, %v3203, %v3225
  %v3227 = vsel %vm2292, %v3207, %v3226
  %v3228 = vsel %vm2294, %v3211, %v3227
  %v3229 = vsel %vm2296, %v3215, %v3228
  %v3232 = vsel %vm2010, %v3222, -inf
  %3233 = vmax.xlane.f32.xlu0 %v3232
  %v3234 = vpop.xlane.xlu0 %3233
  %v3235 = vsel %vm2010, %v3229, -inf
  %3236 = vmax.xlane.f32.xlu0 %v3235
  %v3237 = vpop.xlane.xlu0 %3236
  %v3240 = vlaneseq
  %v3241 = vshrl.u32 %v3240, 7
  %v3242 = vsub.s32 0, %v3241
  %v3243 = vrot.slane %v3234, %v3242
  %v3244 = vlaneseq
  %v3245 = vshrl.u32 %v3244, 7
  %v3246 = vsub.s32 1, %v3245
  %v3247 = vrot.slane %v3234, %v3246
  %v3248 = vlaneseq
  %v3249 = vshrl.u32 %v3248, 7
  %v3250 = vsub.s32 2, %v3249
  %v3251 = vrot.slane %v3234, %v3250
  %v3252 = vlaneseq
  %v3253 = vshrl.u32 %v3252, 7
  %v3254 = vsub.s32 3, %v3253
  %v3255 = vrot.slane %v3234, %v3254
  %v3256 = vlaneseq
  %v3257 = vshrl.u32 %v3256, 7
  %v3258 = vsub.s32 4, %v3257
  %v3259 = vrot.slane %v3234, %v3258
  %v3260 = vlaneseq
  %v3261 = vshrl.u32 %v3260, 7
  %v3262 = vsub.s32 5, %v3261
  %v3263 = vrot.slane %v3234, %v3262
  %v3264 = vlaneseq
  %v3265 = vshrl.u32 %v3264, 7
  %v3266 = vsub.s32 6, %v3265
  %v3267 = vrot.slane %v3234, %v3266
  %v3268 = vlaneseq
  %v3269 = vshrl.u32 %v3268, 7
  %v3270 = vsub.s32 7, %v3269
  %v3271 = vrot.slane %v3234, %v3270
  %v3272 = vlaneseq
  %v3273 = vshrl.u32 %v3272, 7
  %v3274 = vsub.s32 0, %v3273
  %v3275 = vrot.slane %v3237, %v3274
  %v3276 = vlaneseq
  %v3277 = vshrl.u32 %v3276, 7
  %v3278 = vsub.s32 1, %v3277
  %v3279 = vrot.slane %v3237, %v3278
  %v3280 = vlaneseq
  %v3281 = vshrl.u32 %v3280, 7
  %v3282 = vsub.s32 2, %v3281
  %v3283 = vrot.slane %v3237, %v3282
  %v3284 = vlaneseq
  %v3285 = vshrl.u32 %v3284, 7
  %v3286 = vsub.s32 3, %v3285
  %v3287 = vrot.slane %v3237, %v3286
  %v3288 = vlaneseq
  %v3289 = vshrl.u32 %v3288, 7
  %v3290 = vsub.s32 4, %v3289
  %v3291 = vrot.slane %v3237, %v3290
  %v3292 = vlaneseq
  %v3293 = vshrl.u32 %v3292, 7
  %v3294 = vsub.s32 5, %v3293
  %v3295 = vrot.slane %v3237, %v3294
  %v3296 = vlaneseq
  %v3297 = vshrl.u32 %v3296, 7
  %v3298 = vsub.s32 6, %v3297
  %v3299 = vrot.slane %v3237, %v3298
  %v3300 = vlaneseq
  %v3301 = vshrl.u32 %v3300, 7
  %v3302 = vsub.s32 7, %v3301
  %v3303 = vrot.slane %v3237, %v3302
  %vm3320 = vcmp.ge.f32.partialorder %v3072, %v3243
  %vm3321 = vcmp.ge.f32.partialorder %v3073, %v3247
  %vm3322 = vcmp.ge.f32.partialorder %v3074, %v3251
  %vm3323 = vcmp.ge.f32.partialorder %v3075, %v3255
  %vm3324 = vcmp.ge.f32.partialorder %v3076, %v3259
  %vm3325 = vcmp.ge.f32.partialorder %v3077, %v3263
  %vm3326 = vcmp.ge.f32.partialorder %v3078, %v3267
  %vm3327 = vcmp.ge.f32.partialorder %v3079, %v3271
  %vm3328 = vcmp.ge.f32.partialorder %v3080, %v3275
  %vm3329 = vcmp.ge.f32.partialorder %v3081, %v3279
  %vm3330 = vcmp.ge.f32.partialorder %v3082, %v3283
  %vm3331 = vcmp.ge.f32.partialorder %v3083, %v3287
  %vm3332 = vcmp.ge.f32.partialorder %v3084, %v3291
  %vm3333 = vcmp.ge.f32.partialorder %v3085, %v3295
  %vm3334 = vcmp.ge.f32.partialorder %v3086, %v3299
  %vm3335 = vcmp.ge.f32.partialorder %v3087, %v3303
  %v3336 = vsel %vm3320, %v2413, 8
  %v3337 = vsel %vm3321, %v2413, 8
  %v3338 = vsel %vm3322, %v2413, 8
  %v3339 = vsel %vm3323, %v2413, 8
  %v3340 = vsel %vm3324, %v2413, 8
  %v3341 = vsel %vm3325, %v2413, 8
  %v3342 = vsel %vm3326, %v2413, 8
  %v3343 = vsel %vm3327, %v2413, 8
  %v3344 = vsel %vm3328, %v2413, 8
  %v3345 = vsel %vm3329, %v2413, 8
  %v3346 = vsel %vm3330, %v2413, 8
  %v3347 = vsel %vm3331, %v2413, 8
  %v3348 = vsel %vm3332, %v2413, 8
  %v3349 = vsel %vm3333, %v2413, 8
  %v3350 = vsel %vm3334, %v2413, 8
  %v3351 = vsel %vm3335, %v2413, 8
  %3352 = vset.pattern.permute.xlu0 0
  %3353 = vperm.xlu0 %3352, %v3336
  %v3354 = vpop.permute.xlu0 %3353
  %3355 = vset.pattern.permute.xlu0 0
  %3356 = vperm.xlu0 %3355, %v3337
  %v3357 = vpop.permute.xlu0 %3356
  %3358 = vset.pattern.permute.xlu0 0
  %3359 = vperm.xlu0 %3358, %v3338
  %v3360 = vpop.permute.xlu0 %3359
  %3361 = vset.pattern.permute.xlu0 0
  %3362 = vperm.xlu0 %3361, %v3339
  %v3363 = vpop.permute.xlu0 %3362
  %3364 = vset.pattern.permute.xlu0 0
  %3365 = vperm.xlu0 %3364, %v3340
  %v3366 = vpop.permute.xlu0 %3365
  %3367 = vset.pattern.permute.xlu0 0
  %3368 = vperm.xlu0 %3367, %v3341
  %v3369 = vpop.permute.xlu0 %3368
  %3370 = vset.pattern.permute.xlu0 0
  %3371 = vperm.xlu0 %3370, %v3342
  %v3372 = vpop.permute.xlu0 %3371
  %3373 = vset.pattern.permute.xlu0 0
  %3374 = vperm.xlu0 %3373, %v3343
  %v3375 = vpop.permute.xlu0 %3374
  %3376 = vset.pattern.permute.xlu0 0
  %3377 = vperm.xlu0 %3376, %v3344
  %v3378 = vpop.permute.xlu0 %3377
  %3379 = vset.pattern.permute.xlu0 0
  %3380 = vperm.xlu0 %3379, %v3345
  %v3381 = vpop.permute.xlu0 %3380
  %3382 = vset.pattern.permute.xlu0 0
  %3383 = vperm.xlu0 %3382, %v3346
  %v3384 = vpop.permute.xlu0 %3383
  %3385 = vset.pattern.permute.xlu0 0
  %3386 = vperm.xlu0 %3385, %v3347
  %v3387 = vpop.permute.xlu0 %3386
  %3388 = vset.pattern.permute.xlu0 0
  %3389 = vperm.xlu0 %3388, %v3348
  %v3390 = vpop.permute.xlu0 %3389
  %3391 = vset.pattern.permute.xlu0 0
  %3392 = vperm.xlu0 %3391, %v3349
  %v3393 = vpop.permute.xlu0 %3392
  %3394 = vset.pattern.permute.xlu0 0
  %3395 = vperm.xlu0 %3394, %v3350
  %v3396 = vpop.permute.xlu0 %3395
  %3397 = vset.pattern.permute.xlu0 0
  %3398 = vperm.xlu0 %3397, %v3351
  %v3399 = vpop.permute.xlu0 %3398
  %v3400 = vlaneseq
  %v3401 = vshrl.u32 %v3400, 7
  %v3402 = vsub.s32 %v1973, %v3401
  %v3403 = vrot.slane %v3354, %v3402
  %v3404 = vlaneseq
  %v3405 = vshrl.u32 %v3404, 7
  %v3406 = vsub.s32 %v1973, %v3405
  %v3407 = vrot.slane %v3357, %v3406
  %v3408 = vlaneseq
  %v3409 = vshrl.u32 %v3408, 7
  %v3410 = vsub.s32 %v1973, %v3409
  %v3411 = vrot.slane %v3360, %v3410
  %v3412 = vlaneseq
  %v3413 = vshrl.u32 %v3412, 7
  %v3414 = vsub.s32 %v1973, %v3413
  %v3415 = vrot.slane %v3363, %v3414
  %v3416 = vlaneseq
  %v3417 = vshrl.u32 %v3416, 7
  %v3418 = vsub.s32 %v1973, %v3417
  %v3419 = vrot.slane %v3366, %v3418
  %v3420 = vlaneseq
  %v3421 = vshrl.u32 %v3420, 7
  %v3422 = vsub.s32 %v1973, %v3421
  %v3423 = vrot.slane %v3369, %v3422
  %v3424 = vlaneseq
  %v3425 = vshrl.u32 %v3424, 7
  %v3426 = vsub.s32 %v1973, %v3425
  %v3427 = vrot.slane %v3372, %v3426
  %v3428 = vlaneseq
  %v3429 = vshrl.u32 %v3428, 7
  %v3430 = vsub.s32 %v1973, %v3429
  %v3431 = vrot.slane %v3375, %v3430
  %v3432 = vlaneseq
  %v3433 = vshrl.u32 %v3432, 7
  %v3434 = vsub.s32 %v1973, %v3433
  %v3435 = vrot.slane %v3378, %v3434
  %v3436 = vlaneseq
  %v3437 = vshrl.u32 %v3436, 7
  %v3438 = vsub.s32 %v1973, %v3437
  %v3439 = vrot.slane %v3381, %v3438
  %v3440 = vlaneseq
  %v3441 = vshrl.u32 %v3440, 7
  %v3442 = vsub.s32 %v1973, %v3441
  %v3443 = vrot.slane %v3384, %v3442
  %v3444 = vlaneseq
  %v3445 = vshrl.u32 %v3444, 7
  %v3446 = vsub.s32 %v1973, %v3445
  %v3447 = vrot.slane %v3387, %v3446
  %v3448 = vlaneseq
  %v3449 = vshrl.u32 %v3448, 7
  %v3450 = vsub.s32 %v1973, %v3449
  %v3451 = vrot.slane %v3390, %v3450
  %v3452 = vlaneseq
  %v3453 = vshrl.u32 %v3452, 7
  %v3454 = vsub.s32 %v1973, %v3453
  %v3455 = vrot.slane %v3393, %v3454
  %v3456 = vlaneseq
  %v3457 = vshrl.u32 %v3456, 7
  %v3458 = vsub.s32 %v1973, %v3457
  %v3459 = vrot.slane %v3396, %v3458
  %v3460 = vlaneseq
  %v3461 = vshrl.u32 %v3460, 7
  %v3462 = vsub.s32 %v1973, %v3461
  %v3463 = vrot.slane %v3399, %v3462
  %v3464 = vsel %vm459, %v3407, %v3403
  %v3465 = vsel %vm2286, %v3411, %v3464
  %v3466 = vsel %vm2288, %v3415, %v3465
  %v3467 = vsel %vm2290, %v3419, %v3466
  %v3468 = vsel %vm2292, %v3423, %v3467
  %v3469 = vsel %vm2294, %v3427, %v3468
  %v3470 = vsel %vm2296, %v3431, %v3469
  %v3471 = vsel %vm459, %v3439, %v3435
  %v3472 = vsel %vm2286, %v3443, %v3471
  %v3473 = vsel %vm2288, %v3447, %v3472
  %v3474 = vsel %vm2290, %v3451, %v3473
  %v3475 = vsel %vm2292, %v3455, %v3474
  %v3476 = vsel %vm2294, %v3459, %v3475
  %v3477 = vsel %vm2296, %v3463, %v3476
  %v3478 = vsel %vm2010, %v3470, 2147483647
  %v3479 = vand.u32 %v3478, 65535
  %v3480 = vshra.s32 %v3478, 16
  %v3481 = vcvt.s32.f32 %v3479
  %v3482 = vcvt.s32.f32 %v3480
  %3483 = vmin.xlane.f32.xlu0 %v3482
  %v3484 = vpop.xlane.xlu0 %3483
  %vm3485 = vcmp.eq.f32.partialorder %v3482, %v3484
  %v3486 = vsel %vm3485, %v3481, inf
  %3487 = vmin.xlane.f32.xlu0 %v3486
  %v3488 = vpop.xlane.xlu0 %3487
  %v3489 = vcvt.f32.s32 %v3488
  %v3490 = vcvt.f32.s32 %v3484
  %v3491 = vshll.u32 %v3490, 16
  %v3492 = vadd.s32 %v3491, %v3489
  %v3493 = vsel %vm2010, %v3477, 2147483647
  %v3494 = vand.u32 %v3493, 65535
  %v3495 = vshra.s32 %v3493, 16
  %v3496 = vcvt.s32.f32 %v3494
  %v3497 = vcvt.s32.f32 %v3495
  %3498 = vmin.xlane.f32.xlu0 %v3497
  %v3499 = vpop.xlane.xlu0 %3498
  %vm3500 = vcmp.eq.f32.partialorder %v3497, %v3499
  %v3501 = vsel %vm3500, %v3496, inf
  %3502 = vmin.xlane.f32.xlu0 %v3501
  %v3503 = vpop.xlane.xlu0 %3502
  %v3504 = vcvt.f32.s32 %v3503
  %v3505 = vcvt.f32.s32 %v3499
  %v3506 = vshll.u32 %v3505, 16
  %v3507 = vadd.s32 %v3506, %v3504
  %v3509 = vunpack.c.l.s4 1983009808
  %v3510 = vunpack.c.0.s8 %v3509
  %v3511 = vlaneseq
  %v3512 = vshrl.u32 %v3511, 7
  %v3513 = vsub.s32 %v3510, %v3512
  %v3514 = vrot.slane %v1953, %v3513
  %v3515 = vlaneseq
  %v3516 = vshrl.u32 %v3515, 7
  %v3517 = vsub.s32 0, %v3516
  %v3518 = vrot.slane %v3514, %v3517
  %3520 = vbcast.lane.b32.xlu0 %v3518, 256
  %v3521 = vpop.permute.xlu0 %3520
  %v3522 = vlaneseq
  %v3523 = vshrl.u32 %v3522, 7
  %v3524 = vsub.s32 1, %v3523
  %v3525 = vrot.slane %v3514, %v3524
  %3527 = vbcast.lane.b32.xlu0 %v3525, 256
  %v3528 = vpop.permute.xlu0 %3527
  %v3531 = vadd.f32 %v3234, %v3521
  %v3532 = vadd.f32 %v3237, %v3528
  %v3533 = vadd.f32 %v3531, %v2083
  %v3534 = vadd.f32 %v3531, %v2090
  %v3535 = vadd.f32 %v3531, %v2097
  %v3536 = vadd.f32 %v3531, %v2104
  %v3537 = vadd.f32 %v3531, %v2111
  %v3538 = vadd.f32 %v3531, %v2118
  %v3539 = vadd.f32 %v3531, %v2125
  %v3540 = vadd.f32 %v3531, %v2132
  %v3541 = vadd.f32 %v3532, %v2083
  %v3542 = vadd.f32 %v3532, %v2090
  %v3543 = vadd.f32 %v3532, %v2097
  %v3544 = vadd.f32 %v3532, %v2104
  %v3545 = vadd.f32 %v3532, %v2111
  %v3546 = vadd.f32 %v3532, %v2118
  %v3547 = vadd.f32 %v3532, %v2125
  %v3548 = vadd.f32 %v3532, %v2132
  %3565 = vset.pattern.permute.xlu0 0
  %3566 = vperm.xlu0 %3565, %v3533
  %v3567 = vpop.permute.xlu0 %3566
  %3568 = vset.pattern.permute.xlu0 0
  %3569 = vperm.xlu0 %3568, %v3534
  %v3570 = vpop.permute.xlu0 %3569
  %3571 = vset.pattern.permute.xlu0 0
  %3572 = vperm.xlu0 %3571, %v3535
  %v3573 = vpop.permute.xlu0 %3572
  %3574 = vset.pattern.permute.xlu0 0
  %3575 = vperm.xlu0 %3574, %v3536
  %v3576 = vpop.permute.xlu0 %3575
  %3577 = vset.pattern.permute.xlu0 0
  %3578 = vperm.xlu0 %3577, %v3537
  %v3579 = vpop.permute.xlu0 %3578
  %3580 = vset.pattern.permute.xlu0 0
  %3581 = vperm.xlu0 %3580, %v3538
  %v3582 = vpop.permute.xlu0 %3581
  %3583 = vset.pattern.permute.xlu0 0
  %3584 = vperm.xlu0 %3583, %v3539
  %v3585 = vpop.permute.xlu0 %3584
  %3586 = vset.pattern.permute.xlu0 0
  %3587 = vperm.xlu0 %3586, %v3540
  %v3588 = vpop.permute.xlu0 %3587
  %3589 = vset.pattern.permute.xlu0 0
  %3590 = vperm.xlu0 %3589, %v3541
  %v3591 = vpop.permute.xlu0 %3590
  %3592 = vset.pattern.permute.xlu0 0
  %3593 = vperm.xlu0 %3592, %v3542
  %v3594 = vpop.permute.xlu0 %3593
  %3595 = vset.pattern.permute.xlu0 0
  %3596 = vperm.xlu0 %3595, %v3543
  %v3597 = vpop.permute.xlu0 %3596
  %3598 = vset.pattern.permute.xlu0 0
  %3599 = vperm.xlu0 %3598, %v3544
  %v3600 = vpop.permute.xlu0 %3599
  %3601 = vset.pattern.permute.xlu0 0
  %3602 = vperm.xlu0 %3601, %v3545
  %v3603 = vpop.permute.xlu0 %3602
  %3604 = vset.pattern.permute.xlu0 0
  %3605 = vperm.xlu0 %3604, %v3546
  %v3606 = vpop.permute.xlu0 %3605
  %3607 = vset.pattern.permute.xlu0 0
  %3608 = vperm.xlu0 %3607, %v3547
  %v3609 = vpop.permute.xlu0 %3608
  %3610 = vset.pattern.permute.xlu0 0
  %3611 = vperm.xlu0 %3610, %v3548
  %v3612 = vpop.permute.xlu0 %3611
  %v3613 = vlaneseq
  %v3614 = vshrl.u32 %v3613, 7
  %v3615 = vsub.s32 %v1973, %v3614
  %v3616 = vrot.slane %v3567, %v3615
  %v3617 = vlaneseq
  %v3618 = vshrl.u32 %v3617, 7
  %v3619 = vsub.s32 %v1973, %v3618
  %v3620 = vrot.slane %v3570, %v3619
  %v3621 = vlaneseq
  %v3622 = vshrl.u32 %v3621, 7
  %v3623 = vsub.s32 %v1973, %v3622
  %v3624 = vrot.slane %v3573, %v3623
  %v3625 = vlaneseq
  %v3626 = vshrl.u32 %v3625, 7
  %v3627 = vsub.s32 %v1973, %v3626
  %v3628 = vrot.slane %v3576, %v3627
  %v3629 = vlaneseq
  %v3630 = vshrl.u32 %v3629, 7
  %v3631 = vsub.s32 %v1973, %v3630
  %v3632 = vrot.slane %v3579, %v3631
  %v3633 = vlaneseq
  %v3634 = vshrl.u32 %v3633, 7
  %v3635 = vsub.s32 %v1973, %v3634
  %v3636 = vrot.slane %v3582, %v3635
  %v3637 = vlaneseq
  %v3638 = vshrl.u32 %v3637, 7
  %v3639 = vsub.s32 %v1973, %v3638
  %v3640 = vrot.slane %v3585, %v3639
  %v3641 = vlaneseq
  %v3642 = vshrl.u32 %v3641, 7
  %v3643 = vsub.s32 %v1973, %v3642
  %v3644 = vrot.slane %v3588, %v3643
  %v3645 = vlaneseq
  %v3646 = vshrl.u32 %v3645, 7
  %v3647 = vsub.s32 %v1973, %v3646
  %v3648 = vrot.slane %v3591, %v3647
  %v3649 = vlaneseq
  %v3650 = vshrl.u32 %v3649, 7
  %v3651 = vsub.s32 %v1973, %v3650
  %v3652 = vrot.slane %v3594, %v3651
  %v3653 = vlaneseq
  %v3654 = vshrl.u32 %v3653, 7
  %v3655 = vsub.s32 %v1973, %v3654
  %v3656 = vrot.slane %v3597, %v3655
  %v3657 = vlaneseq
  %v3658 = vshrl.u32 %v3657, 7
  %v3659 = vsub.s32 %v1973, %v3658
  %v3660 = vrot.slane %v3600, %v3659
  %v3661 = vlaneseq
  %v3662 = vshrl.u32 %v3661, 7
  %v3663 = vsub.s32 %v1973, %v3662
  %v3664 = vrot.slane %v3603, %v3663
  %v3665 = vlaneseq
  %v3666 = vshrl.u32 %v3665, 7
  %v3667 = vsub.s32 %v1973, %v3666
  %v3668 = vrot.slane %v3606, %v3667
  %v3669 = vlaneseq
  %v3670 = vshrl.u32 %v3669, 7
  %v3671 = vsub.s32 %v1973, %v3670
  %v3672 = vrot.slane %v3609, %v3671
  %v3673 = vlaneseq
  %v3674 = vshrl.u32 %v3673, 7
  %v3675 = vsub.s32 %v1973, %v3674
  %v3676 = vrot.slane %v3612, %v3675
  %v3677 = vsel %vm459, %v3620, %v3616
  %v3678 = vsel %vm2286, %v3624, %v3677
  %v3679 = vsel %vm2288, %v3628, %v3678
  %v3680 = vsel %vm2290, %v3632, %v3679
  %v3681 = vsel %vm2292, %v3636, %v3680
  %v3682 = vsel %vm2294, %v3640, %v3681
  %v3683 = vsel %vm2296, %v3644, %v3682
  %v3684 = vsel %vm459, %v3652, %v3648
  %v3685 = vsel %vm2286, %v3656, %v3684
  %v3686 = vsel %vm2288, %v3660, %v3685
  %v3687 = vsel %vm2290, %v3664, %v3686
  %v3688 = vsel %vm2292, %v3668, %v3687
  %v3689 = vsel %vm2294, %v3672, %v3688
  %v3690 = vsel %vm2296, %v3676, %v3689
  %v3693 = vsel %vm2010, %v3683, -inf
  %3694 = vmax.xlane.f32.xlu0 %v3693
  %v3695 = vpop.xlane.xlu0 %3694
  %v3696 = vsel %vm2010, %v3690, -inf
  %3697 = vmax.xlane.f32.xlu0 %v3696
  %v3698 = vpop.xlane.xlu0 %3697
  %v3701 = vlaneseq
  %v3702 = vshrl.u32 %v3701, 7
  %v3703 = vsub.s32 0, %v3702
  %v3704 = vrot.slane %v3695, %v3703
  %v3705 = vlaneseq
  %v3706 = vshrl.u32 %v3705, 7
  %v3707 = vsub.s32 1, %v3706
  %v3708 = vrot.slane %v3695, %v3707
  %v3709 = vlaneseq
  %v3710 = vshrl.u32 %v3709, 7
  %v3711 = vsub.s32 2, %v3710
  %v3712 = vrot.slane %v3695, %v3711
  %v3713 = vlaneseq
  %v3714 = vshrl.u32 %v3713, 7
  %v3715 = vsub.s32 3, %v3714
  %v3716 = vrot.slane %v3695, %v3715
  %v3717 = vlaneseq
  %v3718 = vshrl.u32 %v3717, 7
  %v3719 = vsub.s32 4, %v3718
  %v3720 = vrot.slane %v3695, %v3719
  %v3721 = vlaneseq
  %v3722 = vshrl.u32 %v3721, 7
  %v3723 = vsub.s32 5, %v3722
  %v3724 = vrot.slane %v3695, %v3723
  %v3725 = vlaneseq
  %v3726 = vshrl.u32 %v3725, 7
  %v3727 = vsub.s32 6, %v3726
  %v3728 = vrot.slane %v3695, %v3727
  %v3729 = vlaneseq
  %v3730 = vshrl.u32 %v3729, 7
  %v3731 = vsub.s32 7, %v3730
  %v3732 = vrot.slane %v3695, %v3731
  %v3733 = vlaneseq
  %v3734 = vshrl.u32 %v3733, 7
  %v3735 = vsub.s32 0, %v3734
  %v3736 = vrot.slane %v3698, %v3735
  %v3737 = vlaneseq
  %v3738 = vshrl.u32 %v3737, 7
  %v3739 = vsub.s32 1, %v3738
  %v3740 = vrot.slane %v3698, %v3739
  %v3741 = vlaneseq
  %v3742 = vshrl.u32 %v3741, 7
  %v3743 = vsub.s32 2, %v3742
  %v3744 = vrot.slane %v3698, %v3743
  %v3745 = vlaneseq
  %v3746 = vshrl.u32 %v3745, 7
  %v3747 = vsub.s32 3, %v3746
  %v3748 = vrot.slane %v3698, %v3747
  %v3749 = vlaneseq
  %v3750 = vshrl.u32 %v3749, 7
  %v3751 = vsub.s32 4, %v3750
  %v3752 = vrot.slane %v3698, %v3751
  %v3753 = vlaneseq
  %v3754 = vshrl.u32 %v3753, 7
  %v3755 = vsub.s32 5, %v3754
  %v3756 = vrot.slane %v3698, %v3755
  %v3757 = vlaneseq
  %v3758 = vshrl.u32 %v3757, 7
  %v3759 = vsub.s32 6, %v3758
  %v3760 = vrot.slane %v3698, %v3759
  %v3761 = vlaneseq
  %v3762 = vshrl.u32 %v3761, 7
  %v3763 = vsub.s32 7, %v3762
  %v3764 = vrot.slane %v3698, %v3763
  %vm3781 = vcmp.ge.f32.partialorder %v3533, %v3704
  %vm3782 = vcmp.ge.f32.partialorder %v3534, %v3708
  %vm3783 = vcmp.ge.f32.partialorder %v3535, %v3712
  %vm3784 = vcmp.ge.f32.partialorder %v3536, %v3716
  %vm3785 = vcmp.ge.f32.partialorder %v3537, %v3720
  %vm3786 = vcmp.ge.f32.partialorder %v3538, %v3724
  %vm3787 = vcmp.ge.f32.partialorder %v3539, %v3728
  %vm3788 = vcmp.ge.f32.partialorder %v3540, %v3732
  %vm3789 = vcmp.ge.f32.partialorder %v3541, %v3736
  %vm3790 = vcmp.ge.f32.partialorder %v3542, %v3740
  %vm3791 = vcmp.ge.f32.partialorder %v3543, %v3744
  %vm3792 = vcmp.ge.f32.partialorder %v3544, %v3748
  %vm3793 = vcmp.ge.f32.partialorder %v3545, %v3752
  %vm3794 = vcmp.ge.f32.partialorder %v3546, %v3756
  %vm3795 = vcmp.ge.f32.partialorder %v3547, %v3760
  %vm3796 = vcmp.ge.f32.partialorder %v3548, %v3764
  %v3797 = vsel %vm3781, %v2413, 8
  %v3798 = vsel %vm3782, %v2413, 8
  %v3799 = vsel %vm3783, %v2413, 8
  %v3800 = vsel %vm3784, %v2413, 8
  %v3801 = vsel %vm3785, %v2413, 8
  %v3802 = vsel %vm3786, %v2413, 8
  %v3803 = vsel %vm3787, %v2413, 8
  %v3804 = vsel %vm3788, %v2413, 8
  %v3805 = vsel %vm3789, %v2413, 8
  %v3806 = vsel %vm3790, %v2413, 8
  %v3807 = vsel %vm3791, %v2413, 8
  %v3808 = vsel %vm3792, %v2413, 8
  %v3809 = vsel %vm3793, %v2413, 8
  %v3810 = vsel %vm3794, %v2413, 8
  %v3811 = vsel %vm3795, %v2413, 8
  %v3812 = vsel %vm3796, %v2413, 8
  %3813 = vset.pattern.permute.xlu0 0
  %3814 = vperm.xlu0 %3813, %v3797
  %v3815 = vpop.permute.xlu0 %3814
  %3816 = vset.pattern.permute.xlu0 0
  %3817 = vperm.xlu0 %3816, %v3798
  %v3818 = vpop.permute.xlu0 %3817
  %3819 = vset.pattern.permute.xlu0 0
  %3820 = vperm.xlu0 %3819, %v3799
  %v3821 = vpop.permute.xlu0 %3820
  %3822 = vset.pattern.permute.xlu0 0
  %3823 = vperm.xlu0 %3822, %v3800
  %v3824 = vpop.permute.xlu0 %3823
  %3825 = vset.pattern.permute.xlu0 0
  %3826 = vperm.xlu0 %3825, %v3801
  %v3827 = vpop.permute.xlu0 %3826
  %3828 = vset.pattern.permute.xlu0 0
  %3829 = vperm.xlu0 %3828, %v3802
  %v3830 = vpop.permute.xlu0 %3829
  %3831 = vset.pattern.permute.xlu0 0
  %3832 = vperm.xlu0 %3831, %v3803
  %v3833 = vpop.permute.xlu0 %3832
  %3834 = vset.pattern.permute.xlu0 0
  %3835 = vperm.xlu0 %3834, %v3804
  %v3836 = vpop.permute.xlu0 %3835
  %3837 = vset.pattern.permute.xlu0 0
  %3838 = vperm.xlu0 %3837, %v3805
  %v3839 = vpop.permute.xlu0 %3838
  %3840 = vset.pattern.permute.xlu0 0
  %3841 = vperm.xlu0 %3840, %v3806
  %v3842 = vpop.permute.xlu0 %3841
  %3843 = vset.pattern.permute.xlu0 0
  %3844 = vperm.xlu0 %3843, %v3807
  %v3845 = vpop.permute.xlu0 %3844
  %3846 = vset.pattern.permute.xlu0 0
  %3847 = vperm.xlu0 %3846, %v3808
  %v3848 = vpop.permute.xlu0 %3847
  %3849 = vset.pattern.permute.xlu0 0
  %3850 = vperm.xlu0 %3849, %v3809
  %v3851 = vpop.permute.xlu0 %3850
  %3852 = vset.pattern.permute.xlu0 0
  %3853 = vperm.xlu0 %3852, %v3810
  %v3854 = vpop.permute.xlu0 %3853
  %3855 = vset.pattern.permute.xlu0 0
  %3856 = vperm.xlu0 %3855, %v3811
  %v3857 = vpop.permute.xlu0 %3856
  %3858 = vset.pattern.permute.xlu0 0
  %3859 = vperm.xlu0 %3858, %v3812
  %v3860 = vpop.permute.xlu0 %3859
  %v3861 = vlaneseq
  %v3862 = vshrl.u32 %v3861, 7
  %v3863 = vsub.s32 %v1973, %v3862
  %v3864 = vrot.slane %v3815, %v3863
  %v3865 = vlaneseq
  %v3866 = vshrl.u32 %v3865, 7
  %v3867 = vsub.s32 %v1973, %v3866
  %v3868 = vrot.slane %v3818, %v3867
  %v3869 = vlaneseq
  %v3870 = vshrl.u32 %v3869, 7
  %v3871 = vsub.s32 %v1973, %v3870
  %v3872 = vrot.slane %v3821, %v3871
  %v3873 = vlaneseq
  %v3874 = vshrl.u32 %v3873, 7
  %v3875 = vsub.s32 %v1973, %v3874
  %v3876 = vrot.slane %v3824, %v3875
  %v3877 = vlaneseq
  %v3878 = vshrl.u32 %v3877, 7
  %v3879 = vsub.s32 %v1973, %v3878
  %v3880 = vrot.slane %v3827, %v3879
  %v3881 = vlaneseq
  %v3882 = vshrl.u32 %v3881, 7
  %v3883 = vsub.s32 %v1973, %v3882
  %v3884 = vrot.slane %v3830, %v3883
  %v3885 = vlaneseq
  %v3886 = vshrl.u32 %v3885, 7
  %v3887 = vsub.s32 %v1973, %v3886
  %v3888 = vrot.slane %v3833, %v3887
  %v3889 = vlaneseq
  %v3890 = vshrl.u32 %v3889, 7
  %v3891 = vsub.s32 %v1973, %v3890
  %v3892 = vrot.slane %v3836, %v3891
  %v3893 = vlaneseq
  %v3894 = vshrl.u32 %v3893, 7
  %v3895 = vsub.s32 %v1973, %v3894
  %v3896 = vrot.slane %v3839, %v3895
  %v3897 = vlaneseq
  %v3898 = vshrl.u32 %v3897, 7
  %v3899 = vsub.s32 %v1973, %v3898
  %v3900 = vrot.slane %v3842, %v3899
  %v3901 = vlaneseq
  %v3902 = vshrl.u32 %v3901, 7
  %v3903 = vsub.s32 %v1973, %v3902
  %v3904 = vrot.slane %v3845, %v3903
  %v3905 = vlaneseq
  %v3906 = vshrl.u32 %v3905, 7
  %v3907 = vsub.s32 %v1973, %v3906
  %v3908 = vrot.slane %v3848, %v3907
  %v3909 = vlaneseq
  %v3910 = vshrl.u32 %v3909, 7
  %v3911 = vsub.s32 %v1973, %v3910
  %v3912 = vrot.slane %v3851, %v3911
  %v3913 = vlaneseq
  %v3914 = vshrl.u32 %v3913, 7
  %v3915 = vsub.s32 %v1973, %v3914
  %v3916 = vrot.slane %v3854, %v3915
  %v3917 = vlaneseq
  %v3918 = vshrl.u32 %v3917, 7
  %v3919 = vsub.s32 %v1973, %v3918
  %v3920 = vrot.slane %v3857, %v3919
  %v3921 = vlaneseq
  %v3922 = vshrl.u32 %v3921, 7
  %v3923 = vsub.s32 %v1973, %v3922
  %v3924 = vrot.slane %v3860, %v3923
  %v3925 = vsel %vm459, %v3868, %v3864
  %v3926 = vsel %vm2286, %v3872, %v3925
  %v3927 = vsel %vm2288, %v3876, %v3926
  %v3928 = vsel %vm2290, %v3880, %v3927
  %v3929 = vsel %vm2292, %v3884, %v3928
  %v3930 = vsel %vm2294, %v3888, %v3929
  %v3931 = vsel %vm2296, %v3892, %v3930
  %v3932 = vsel %vm459, %v3900, %v3896
  %v3933 = vsel %vm2286, %v3904, %v3932
  %v3934 = vsel %vm2288, %v3908, %v3933
  %v3935 = vsel %vm2290, %v3912, %v3934
  %v3936 = vsel %vm2292, %v3916, %v3935
  %v3937 = vsel %vm2294, %v3920, %v3936
  %v3938 = vsel %vm2296, %v3924, %v3937
  %v3939 = vsel %vm2010, %v3931, 2147483647
  %v3940 = vand.u32 %v3939, 65535
  %v3941 = vshra.s32 %v3939, 16
  %v3942 = vcvt.s32.f32 %v3940
  %v3943 = vcvt.s32.f32 %v3941
  %3944 = vmin.xlane.f32.xlu0 %v3943
  %v3945 = vpop.xlane.xlu0 %3944
  %vm3946 = vcmp.eq.f32.partialorder %v3943, %v3945
  %v3947 = vsel %vm3946, %v3942, inf
  %3948 = vmin.xlane.f32.xlu0 %v3947
  %v3949 = vpop.xlane.xlu0 %3948
  %v3950 = vcvt.f32.s32 %v3949
  %v3951 = vcvt.f32.s32 %v3945
  %v3952 = vshll.u32 %v3951, 16
  %v3953 = vadd.s32 %v3952, %v3950
  %v3954 = vsel %vm2010, %v3938, 2147483647
  %v3955 = vand.u32 %v3954, 65535
  %v3956 = vshra.s32 %v3954, 16
  %v3957 = vcvt.s32.f32 %v3955
  %v3958 = vcvt.s32.f32 %v3956
  %3959 = vmin.xlane.f32.xlu0 %v3958
  %v3960 = vpop.xlane.xlu0 %3959
  %vm3961 = vcmp.eq.f32.partialorder %v3958, %v3960
  %v3962 = vsel %vm3961, %v3957, inf
  %3963 = vmin.xlane.f32.xlu0 %v3962
  %v3964 = vpop.xlane.xlu0 %3963
  %v3965 = vcvt.f32.s32 %v3964
  %v3966 = vcvt.f32.s32 %v3960
  %v3967 = vshll.u32 %v3966, 16
  %v3968 = vadd.s32 %v3967, %v3965
  %v3970 = vunpack.c.l.s4 1983009808
  %v3971 = vunpack.c.0.s8 %v3970
  %v3972 = vlaneseq
  %v3973 = vshrl.u32 %v3972, 7
  %v3974 = vsub.s32 %v3971, %v3973
  %v3975 = vrot.slane %v1961, %v3974
  %v3976 = vlaneseq
  %v3977 = vshrl.u32 %v3976, 7
  %v3978 = vsub.s32 0, %v3977
  %v3979 = vrot.slane %v3975, %v3978
  %3981 = vbcast.lane.b32.xlu0 %v3979, 256
  %v3982 = vpop.permute.xlu0 %3981
  %v3983 = vlaneseq
  %v3984 = vshrl.u32 %v3983, 7
  %v3985 = vsub.s32 1, %v3984
  %v3986 = vrot.slane %v3975, %v3985
  %3988 = vbcast.lane.b32.xlu0 %v3986, 256
  %v3989 = vpop.permute.xlu0 %3988
  %v3992 = vadd.f32 %v3695, %v3982
  %v3993 = vadd.f32 %v3698, %v3989
  %v3994 = vadd.f32 %v3992, %v2083
  %v3995 = vadd.f32 %v3992, %v2090
  %v3996 = vadd.f32 %v3992, %v2097
  %v3997 = vadd.f32 %v3992, %v2104
  %v3998 = vadd.f32 %v3992, %v2111
  %v3999 = vadd.f32 %v3992, %v2118
  %v4000 = vadd.f32 %v3992, %v2125
  %v4001 = vadd.f32 %v3992, %v2132
  %v4002 = vadd.f32 %v3993, %v2083
  %v4003 = vadd.f32 %v3993, %v2090
  %v4004 = vadd.f32 %v3993, %v2097
  %v4005 = vadd.f32 %v3993, %v2104
  %v4006 = vadd.f32 %v3993, %v2111
  %v4007 = vadd.f32 %v3993, %v2118
  %v4008 = vadd.f32 %v3993, %v2125
  %v4009 = vadd.f32 %v3993, %v2132
  %4026 = vset.pattern.permute.xlu0 0
  %4027 = vperm.xlu0 %4026, %v3994
  %v4028 = vpop.permute.xlu0 %4027
  %4029 = vset.pattern.permute.xlu0 0
  %4030 = vperm.xlu0 %4029, %v3995
  %v4031 = vpop.permute.xlu0 %4030
  %4032 = vset.pattern.permute.xlu0 0
  %4033 = vperm.xlu0 %4032, %v3996
  %v4034 = vpop.permute.xlu0 %4033
  %4035 = vset.pattern.permute.xlu0 0
  %4036 = vperm.xlu0 %4035, %v3997
  %v4037 = vpop.permute.xlu0 %4036
  %4038 = vset.pattern.permute.xlu0 0
  %4039 = vperm.xlu0 %4038, %v3998
  %v4040 = vpop.permute.xlu0 %4039
  %4041 = vset.pattern.permute.xlu0 0
  %4042 = vperm.xlu0 %4041, %v3999
  %v4043 = vpop.permute.xlu0 %4042
  %4044 = vset.pattern.permute.xlu0 0
  %4045 = vperm.xlu0 %4044, %v4000
  %v4046 = vpop.permute.xlu0 %4045
  %4047 = vset.pattern.permute.xlu0 0
  %4048 = vperm.xlu0 %4047, %v4001
  %v4049 = vpop.permute.xlu0 %4048
  %4050 = vset.pattern.permute.xlu0 0
  %4051 = vperm.xlu0 %4050, %v4002
  %v4052 = vpop.permute.xlu0 %4051
  %4053 = vset.pattern.permute.xlu0 0
  %4054 = vperm.xlu0 %4053, %v4003
  %v4055 = vpop.permute.xlu0 %4054
  %4056 = vset.pattern.permute.xlu0 0
  %4057 = vperm.xlu0 %4056, %v4004
  %v4058 = vpop.permute.xlu0 %4057
  %4059 = vset.pattern.permute.xlu0 0
  %4060 = vperm.xlu0 %4059, %v4005
  %v4061 = vpop.permute.xlu0 %4060
  %4062 = vset.pattern.permute.xlu0 0
  %4063 = vperm.xlu0 %4062, %v4006
  %v4064 = vpop.permute.xlu0 %4063
  %4065 = vset.pattern.permute.xlu0 0
  %4066 = vperm.xlu0 %4065, %v4007
  %v4067 = vpop.permute.xlu0 %4066
  %4068 = vset.pattern.permute.xlu0 0
  %4069 = vperm.xlu0 %4068, %v4008
  %v4070 = vpop.permute.xlu0 %4069
  %4071 = vset.pattern.permute.xlu0 0
  %4072 = vperm.xlu0 %4071, %v4009
  %v4073 = vpop.permute.xlu0 %4072
  %v4074 = vlaneseq
  %v4075 = vshrl.u32 %v4074, 7
  %v4076 = vsub.s32 %v1973, %v4075
  %v4077 = vrot.slane %v4028, %v4076
  %v4078 = vlaneseq
  %v4079 = vshrl.u32 %v4078, 7
  %v4080 = vsub.s32 %v1973, %v4079
  %v4081 = vrot.slane %v4031, %v4080
  %v4082 = vlaneseq
  %v4083 = vshrl.u32 %v4082, 7
  %v4084 = vsub.s32 %v1973, %v4083
  %v4085 = vrot.slane %v4034, %v4084
  %v4086 = vlaneseq
  %v4087 = vshrl.u32 %v4086, 7
  %v4088 = vsub.s32 %v1973, %v4087
  %v4089 = vrot.slane %v4037, %v4088
  %v4090 = vlaneseq
  %v4091 = vshrl.u32 %v4090, 7
  %v4092 = vsub.s32 %v1973, %v4091
  %v4093 = vrot.slane %v4040, %v4092
  %v4094 = vlaneseq
  %v4095 = vshrl.u32 %v4094, 7
  %v4096 = vsub.s32 %v1973, %v4095
  %v4097 = vrot.slane %v4043, %v4096
  %v4098 = vlaneseq
  %v4099 = vshrl.u32 %v4098, 7
  %v4100 = vsub.s32 %v1973, %v4099
  %v4101 = vrot.slane %v4046, %v4100
  %v4102 = vlaneseq
  %v4103 = vshrl.u32 %v4102, 7
  %v4104 = vsub.s32 %v1973, %v4103
  %v4105 = vrot.slane %v4049, %v4104
  %v4106 = vlaneseq
  %v4107 = vshrl.u32 %v4106, 7
  %v4108 = vsub.s32 %v1973, %v4107
  %v4109 = vrot.slane %v4052, %v4108
  %v4110 = vlaneseq
  %v4111 = vshrl.u32 %v4110, 7
  %v4112 = vsub.s32 %v1973, %v4111
  %v4113 = vrot.slane %v4055, %v4112
  %v4114 = vlaneseq
  %v4115 = vshrl.u32 %v4114, 7
  %v4116 = vsub.s32 %v1973, %v4115
  %v4117 = vrot.slane %v4058, %v4116
  %v4118 = vlaneseq
  %v4119 = vshrl.u32 %v4118, 7
  %v4120 = vsub.s32 %v1973, %v4119
  %v4121 = vrot.slane %v4061, %v4120
  %v4122 = vlaneseq
  %v4123 = vshrl.u32 %v4122, 7
  %v4124 = vsub.s32 %v1973, %v4123
  %v4125 = vrot.slane %v4064, %v4124
  %v4126 = vlaneseq
  %v4127 = vshrl.u32 %v4126, 7
  %v4128 = vsub.s32 %v1973, %v4127
  %v4129 = vrot.slane %v4067, %v4128
  %v4130 = vlaneseq
  %v4131 = vshrl.u32 %v4130, 7
  %v4132 = vsub.s32 %v1973, %v4131
  %v4133 = vrot.slane %v4070, %v4132
  %v4134 = vlaneseq
  %v4135 = vshrl.u32 %v4134, 7
  %v4136 = vsub.s32 %v1973, %v4135
  %v4137 = vrot.slane %v4073, %v4136
  %v4138 = vsel %vm459, %v4081, %v4077
  %v4139 = vsel %vm2286, %v4085, %v4138
  %v4140 = vsel %vm2288, %v4089, %v4139
  %v4141 = vsel %vm2290, %v4093, %v4140
  %v4142 = vsel %vm2292, %v4097, %v4141
  %v4143 = vsel %vm2294, %v4101, %v4142
  %v4144 = vsel %vm2296, %v4105, %v4143
  %v4145 = vsel %vm459, %v4113, %v4109
  %v4146 = vsel %vm2286, %v4117, %v4145
  %v4147 = vsel %vm2288, %v4121, %v4146
  %v4148 = vsel %vm2290, %v4125, %v4147
  %v4149 = vsel %vm2292, %v4129, %v4148
  %v4150 = vsel %vm2294, %v4133, %v4149
  %v4151 = vsel %vm2296, %v4137, %v4150
  %v4154 = vsel %vm2010, %v4144, -inf
  %4155 = vmax.xlane.f32.xlu0 %v4154
  %v4156 = vpop.xlane.xlu0 %4155
  %v4157 = vsel %vm2010, %v4151, -inf
  %4158 = vmax.xlane.f32.xlu0 %v4157
  %v4159 = vpop.xlane.xlu0 %4158
  %v4162 = vlaneseq
  %v4163 = vshrl.u32 %v4162, 7
  %v4164 = vsub.s32 0, %v4163
  %v4165 = vrot.slane %v4156, %v4164
  %v4166 = vlaneseq
  %v4167 = vshrl.u32 %v4166, 7
  %v4168 = vsub.s32 1, %v4167
  %v4169 = vrot.slane %v4156, %v4168
  %v4170 = vlaneseq
  %v4171 = vshrl.u32 %v4170, 7
  %v4172 = vsub.s32 2, %v4171
  %v4173 = vrot.slane %v4156, %v4172
  %v4174 = vlaneseq
  %v4175 = vshrl.u32 %v4174, 7
  %v4176 = vsub.s32 3, %v4175
  %v4177 = vrot.slane %v4156, %v4176
  %v4178 = vlaneseq
  %v4179 = vshrl.u32 %v4178, 7
  %v4180 = vsub.s32 4, %v4179
  %v4181 = vrot.slane %v4156, %v4180
  %v4182 = vlaneseq
  %v4183 = vshrl.u32 %v4182, 7
  %v4184 = vsub.s32 5, %v4183
  %v4185 = vrot.slane %v4156, %v4184
  %v4186 = vlaneseq
  %v4187 = vshrl.u32 %v4186, 7
  %v4188 = vsub.s32 6, %v4187
  %v4189 = vrot.slane %v4156, %v4188
  %v4190 = vlaneseq
  %v4191 = vshrl.u32 %v4190, 7
  %v4192 = vsub.s32 7, %v4191
  %v4193 = vrot.slane %v4156, %v4192
  %v4194 = vlaneseq
  %v4195 = vshrl.u32 %v4194, 7
  %v4196 = vsub.s32 0, %v4195
  %v4197 = vrot.slane %v4159, %v4196
  %v4198 = vlaneseq
  %v4199 = vshrl.u32 %v4198, 7
  %v4200 = vsub.s32 1, %v4199
  %v4201 = vrot.slane %v4159, %v4200
  %v4202 = vlaneseq
  %v4203 = vshrl.u32 %v4202, 7
  %v4204 = vsub.s32 2, %v4203
  %v4205 = vrot.slane %v4159, %v4204
  %v4206 = vlaneseq
  %v4207 = vshrl.u32 %v4206, 7
  %v4208 = vsub.s32 3, %v4207
  %v4209 = vrot.slane %v4159, %v4208
  %v4210 = vlaneseq
  %v4211 = vshrl.u32 %v4210, 7
  %v4212 = vsub.s32 4, %v4211
  %v4213 = vrot.slane %v4159, %v4212
  %v4214 = vlaneseq
  %v4215 = vshrl.u32 %v4214, 7
  %v4216 = vsub.s32 5, %v4215
  %v4217 = vrot.slane %v4159, %v4216
  %v4218 = vlaneseq
  %v4219 = vshrl.u32 %v4218, 7
  %v4220 = vsub.s32 6, %v4219
  %v4221 = vrot.slane %v4159, %v4220
  %v4222 = vlaneseq
  %v4223 = vshrl.u32 %v4222, 7
  %v4224 = vsub.s32 7, %v4223
  %v4225 = vrot.slane %v4159, %v4224
  %vm4242 = vcmp.ge.f32.partialorder %v3994, %v4165
  %vm4243 = vcmp.ge.f32.partialorder %v3995, %v4169
  %vm4244 = vcmp.ge.f32.partialorder %v3996, %v4173
  %vm4245 = vcmp.ge.f32.partialorder %v3997, %v4177
  %vm4246 = vcmp.ge.f32.partialorder %v3998, %v4181
  %vm4247 = vcmp.ge.f32.partialorder %v3999, %v4185
  %vm4248 = vcmp.ge.f32.partialorder %v4000, %v4189
  %vm4249 = vcmp.ge.f32.partialorder %v4001, %v4193
  %vm4250 = vcmp.ge.f32.partialorder %v4002, %v4197
  %vm4251 = vcmp.ge.f32.partialorder %v4003, %v4201
  %vm4252 = vcmp.ge.f32.partialorder %v4004, %v4205
  %vm4253 = vcmp.ge.f32.partialorder %v4005, %v4209
  %vm4254 = vcmp.ge.f32.partialorder %v4006, %v4213
  %vm4255 = vcmp.ge.f32.partialorder %v4007, %v4217
  %vm4256 = vcmp.ge.f32.partialorder %v4008, %v4221
  %vm4257 = vcmp.ge.f32.partialorder %v4009, %v4225
  %v4258 = vsel %vm4242, %v2413, 8
  %v4259 = vsel %vm4243, %v2413, 8
  %v4260 = vsel %vm4244, %v2413, 8
  %v4261 = vsel %vm4245, %v2413, 8
  %v4262 = vsel %vm4246, %v2413, 8
  %v4263 = vsel %vm4247, %v2413, 8
  %v4264 = vsel %vm4248, %v2413, 8
  %v4265 = vsel %vm4249, %v2413, 8
  %v4266 = vsel %vm4250, %v2413, 8
  %v4267 = vsel %vm4251, %v2413, 8
  %v4268 = vsel %vm4252, %v2413, 8
  %v4269 = vsel %vm4253, %v2413, 8
  %v4270 = vsel %vm4254, %v2413, 8
  %v4271 = vsel %vm4255, %v2413, 8
  %v4272 = vsel %vm4256, %v2413, 8
  %v4273 = vsel %vm4257, %v2413, 8
  %4274 = vset.pattern.permute.xlu0 0
  %4275 = vperm.xlu0 %4274, %v4258
  %v4276 = vpop.permute.xlu0 %4275
  %4277 = vset.pattern.permute.xlu0 0
  %4278 = vperm.xlu0 %4277, %v4259
  %v4279 = vpop.permute.xlu0 %4278
  %4280 = vset.pattern.permute.xlu0 0
  %4281 = vperm.xlu0 %4280, %v4260
  %v4282 = vpop.permute.xlu0 %4281
  %4283 = vset.pattern.permute.xlu0 0
  %4284 = vperm.xlu0 %4283, %v4261
  %v4285 = vpop.permute.xlu0 %4284
  %4286 = vset.pattern.permute.xlu0 0
  %4287 = vperm.xlu0 %4286, %v4262
  %v4288 = vpop.permute.xlu0 %4287
  %4289 = vset.pattern.permute.xlu0 0
  %4290 = vperm.xlu0 %4289, %v4263
  %v4291 = vpop.permute.xlu0 %4290
  %4292 = vset.pattern.permute.xlu0 0
  %4293 = vperm.xlu0 %4292, %v4264
  %v4294 = vpop.permute.xlu0 %4293
  %4295 = vset.pattern.permute.xlu0 0
  %4296 = vperm.xlu0 %4295, %v4265
  %v4297 = vpop.permute.xlu0 %4296
  %4298 = vset.pattern.permute.xlu0 0
  %4299 = vperm.xlu0 %4298, %v4266
  %v4300 = vpop.permute.xlu0 %4299
  %4301 = vset.pattern.permute.xlu0 0
  %4302 = vperm.xlu0 %4301, %v4267
  %v4303 = vpop.permute.xlu0 %4302
  %4304 = vset.pattern.permute.xlu0 0
  %4305 = vperm.xlu0 %4304, %v4268
  %v4306 = vpop.permute.xlu0 %4305
  %4307 = vset.pattern.permute.xlu0 0
  %4308 = vperm.xlu0 %4307, %v4269
  %v4309 = vpop.permute.xlu0 %4308
  %4310 = vset.pattern.permute.xlu0 0
  %4311 = vperm.xlu0 %4310, %v4270
  %v4312 = vpop.permute.xlu0 %4311
  %4313 = vset.pattern.permute.xlu0 0
  %4314 = vperm.xlu0 %4313, %v4271
  %v4315 = vpop.permute.xlu0 %4314
  %4316 = vset.pattern.permute.xlu0 0
  %4317 = vperm.xlu0 %4316, %v4272
  %v4318 = vpop.permute.xlu0 %4317
  %4319 = vset.pattern.permute.xlu0 0
  %4320 = vperm.xlu0 %4319, %v4273
  %v4321 = vpop.permute.xlu0 %4320
  %v4322 = vlaneseq
  %v4323 = vshrl.u32 %v4322, 7
  %v4324 = vsub.s32 %v1973, %v4323
  %v4325 = vrot.slane %v4276, %v4324
  %v4326 = vlaneseq
  %v4327 = vshrl.u32 %v4326, 7
  %v4328 = vsub.s32 %v1973, %v4327
  %v4329 = vrot.slane %v4279, %v4328
  %v4330 = vlaneseq
  %v4331 = vshrl.u32 %v4330, 7
  %v4332 = vsub.s32 %v1973, %v4331
  %v4333 = vrot.slane %v4282, %v4332
  %v4334 = vlaneseq
  %v4335 = vshrl.u32 %v4334, 7
  %v4336 = vsub.s32 %v1973, %v4335
  %v4337 = vrot.slane %v4285, %v4336
  %v4338 = vlaneseq
  %v4339 = vshrl.u32 %v4338, 7
  %v4340 = vsub.s32 %v1973, %v4339
  %v4341 = vrot.slane %v4288, %v4340
  %v4342 = vlaneseq
  %v4343 = vshrl.u32 %v4342, 7
  %v4344 = vsub.s32 %v1973, %v4343
  %v4345 = vrot.slane %v4291, %v4344
  %v4346 = vlaneseq
  %v4347 = vshrl.u32 %v4346, 7
  %v4348 = vsub.s32 %v1973, %v4347
  %v4349 = vrot.slane %v4294, %v4348
  %v4350 = vlaneseq
  %v4351 = vshrl.u32 %v4350, 7
  %v4352 = vsub.s32 %v1973, %v4351
  %v4353 = vrot.slane %v4297, %v4352
  %v4354 = vlaneseq
  %v4355 = vshrl.u32 %v4354, 7
  %v4356 = vsub.s32 %v1973, %v4355
  %v4357 = vrot.slane %v4300, %v4356
  %v4358 = vlaneseq
  %v4359 = vshrl.u32 %v4358, 7
  %v4360 = vsub.s32 %v1973, %v4359
  %v4361 = vrot.slane %v4303, %v4360
  %v4362 = vlaneseq
  %v4363 = vshrl.u32 %v4362, 7
  %v4364 = vsub.s32 %v1973, %v4363
  %v4365 = vrot.slane %v4306, %v4364
  %v4366 = vlaneseq
  %v4367 = vshrl.u32 %v4366, 7
  %v4368 = vsub.s32 %v1973, %v4367
  %v4369 = vrot.slane %v4309, %v4368
  %v4370 = vlaneseq
  %v4371 = vshrl.u32 %v4370, 7
  %v4372 = vsub.s32 %v1973, %v4371
  %v4373 = vrot.slane %v4312, %v4372
  %v4374 = vlaneseq
  %v4375 = vshrl.u32 %v4374, 7
  %v4376 = vsub.s32 %v1973, %v4375
  %v4377 = vrot.slane %v4315, %v4376
  %v4378 = vlaneseq
  %v4379 = vshrl.u32 %v4378, 7
  %v4380 = vsub.s32 %v1973, %v4379
  %v4381 = vrot.slane %v4318, %v4380
  %v4382 = vlaneseq
  %v4383 = vshrl.u32 %v4382, 7
  %v4384 = vsub.s32 %v1973, %v4383
  %v4385 = vrot.slane %v4321, %v4384
  %v4386 = vsel %vm459, %v4329, %v4325
  %v4387 = vsel %vm2286, %v4333, %v4386
  %v4388 = vsel %vm2288, %v4337, %v4387
  %v4389 = vsel %vm2290, %v4341, %v4388
  %v4390 = vsel %vm2292, %v4345, %v4389
  %v4391 = vsel %vm2294, %v4349, %v4390
  %v4392 = vsel %vm2296, %v4353, %v4391
  %v4393 = vsel %vm459, %v4361, %v4357
  %v4394 = vsel %vm2286, %v4365, %v4393
  %v4395 = vsel %vm2288, %v4369, %v4394
  %v4396 = vsel %vm2290, %v4373, %v4395
  %v4397 = vsel %vm2292, %v4377, %v4396
  %v4398 = vsel %vm2294, %v4381, %v4397
  %v4399 = vsel %vm2296, %v4385, %v4398
  %v4400 = vsel %vm2010, %v4392, 2147483647
  %v4401 = vand.u32 %v4400, 65535
  %v4402 = vshra.s32 %v4400, 16
  %v4403 = vcvt.s32.f32 %v4401
  %v4404 = vcvt.s32.f32 %v4402
  %4405 = vmin.xlane.f32.xlu0 %v4404
  %v4406 = vpop.xlane.xlu0 %4405
  %vm4407 = vcmp.eq.f32.partialorder %v4404, %v4406
  %v4408 = vsel %vm4407, %v4403, inf
  %4409 = vmin.xlane.f32.xlu0 %v4408
  %v4410 = vpop.xlane.xlu0 %4409
  %v4411 = vcvt.f32.s32 %v4410
  %v4412 = vcvt.f32.s32 %v4406
  %v4413 = vshll.u32 %v4412, 16
  %v4414 = vadd.s32 %v4413, %v4411
  %v4415 = vsel %vm2010, %v4399, 2147483647
  %v4416 = vand.u32 %v4415, 65535
  %v4417 = vshra.s32 %v4415, 16
  %v4418 = vcvt.s32.f32 %v4416
  %v4419 = vcvt.s32.f32 %v4417
  %4420 = vmin.xlane.f32.xlu0 %v4419
  %v4421 = vpop.xlane.xlu0 %4420
  %vm4422 = vcmp.eq.f32.partialorder %v4419, %v4421
  %v4423 = vsel %vm4422, %v4418, inf
  %4424 = vmin.xlane.f32.xlu0 %v4423
  %v4425 = vpop.xlane.xlu0 %4424
  %v4426 = vcvt.f32.s32 %v4425
  %v4427 = vcvt.f32.s32 %v4421
  %v4428 = vshll.u32 %v4427, 16
  %v4429 = vadd.s32 %v4428, %v4426
  %v4431 = vunpack.c.l.s4 1983009808
  %v4432 = vunpack.c.0.s8 %v4431
  %v4433 = vlaneseq
  %v4434 = vshrl.u32 %v4433, 7
  %v4435 = vsub.s32 %v4432, %v4434
  %v4436 = vrot.slane %v1969, %v4435
  %v4437 = vlaneseq
  %v4438 = vshrl.u32 %v4437, 7
  %v4439 = vsub.s32 0, %v4438
  %v4440 = vrot.slane %v4436, %v4439
  %4442 = vbcast.lane.b32.xlu0 %v4440, 256
  %v4443 = vpop.permute.xlu0 %4442
  %v4444 = vlaneseq
  %v4445 = vshrl.u32 %v4444, 7
  %v4446 = vsub.s32 1, %v4445
  %v4447 = vrot.slane %v4436, %v4446
  %4449 = vbcast.lane.b32.xlu0 %v4447, 256
  %v4450 = vpop.permute.xlu0 %4449
  %v4453 = vadd.f32 %v4156, %v4443
  %v4454 = vadd.f32 %v4159, %v4450
  %v4455 = vadd.f32 %v4453, %v2083
  %v4456 = vadd.f32 %v4453, %v2090
  %v4457 = vadd.f32 %v4453, %v2097
  %v4458 = vadd.f32 %v4453, %v2104
  %v4459 = vadd.f32 %v4453, %v2111
  %v4460 = vadd.f32 %v4453, %v2118
  %v4461 = vadd.f32 %v4453, %v2125
  %v4462 = vadd.f32 %v4453, %v2132
  %v4463 = vadd.f32 %v4454, %v2083
  %v4464 = vadd.f32 %v4454, %v2090
  %v4465 = vadd.f32 %v4454, %v2097
  %v4466 = vadd.f32 %v4454, %v2104
  %v4467 = vadd.f32 %v4454, %v2111
  %v4468 = vadd.f32 %v4454, %v2118
  %v4469 = vadd.f32 %v4454, %v2125
  %v4470 = vadd.f32 %v4454, %v2132
  %4487 = vset.pattern.permute.xlu0 0
  %4488 = vperm.xlu0 %4487, %v4455
  %v4489 = vpop.permute.xlu0 %4488
  %4490 = vset.pattern.permute.xlu0 0
  %4491 = vperm.xlu0 %4490, %v4456
  %v4492 = vpop.permute.xlu0 %4491
  %4493 = vset.pattern.permute.xlu0 0
  %4494 = vperm.xlu0 %4493, %v4457
  %v4495 = vpop.permute.xlu0 %4494
  %4496 = vset.pattern.permute.xlu0 0
  %4497 = vperm.xlu0 %4496, %v4458
  %v4498 = vpop.permute.xlu0 %4497
  %4499 = vset.pattern.permute.xlu0 0
  %4500 = vperm.xlu0 %4499, %v4459
  %v4501 = vpop.permute.xlu0 %4500
  %4502 = vset.pattern.permute.xlu0 0
  %4503 = vperm.xlu0 %4502, %v4460
  %v4504 = vpop.permute.xlu0 %4503
  %4505 = vset.pattern.permute.xlu0 0
  %4506 = vperm.xlu0 %4505, %v4461
  %v4507 = vpop.permute.xlu0 %4506
  %4508 = vset.pattern.permute.xlu0 0
  %4509 = vperm.xlu0 %4508, %v4462
  %v4510 = vpop.permute.xlu0 %4509
  %4511 = vset.pattern.permute.xlu0 0
  %4512 = vperm.xlu0 %4511, %v4463
  %v4513 = vpop.permute.xlu0 %4512
  %4514 = vset.pattern.permute.xlu0 0
  %4515 = vperm.xlu0 %4514, %v4464
  %v4516 = vpop.permute.xlu0 %4515
  %4517 = vset.pattern.permute.xlu0 0
  %4518 = vperm.xlu0 %4517, %v4465
  %v4519 = vpop.permute.xlu0 %4518
  %4520 = vset.pattern.permute.xlu0 0
  %4521 = vperm.xlu0 %4520, %v4466
  %v4522 = vpop.permute.xlu0 %4521
  %4523 = vset.pattern.permute.xlu0 0
  %4524 = vperm.xlu0 %4523, %v4467
  %v4525 = vpop.permute.xlu0 %4524
  %4526 = vset.pattern.permute.xlu0 0
  %4527 = vperm.xlu0 %4526, %v4468
  %v4528 = vpop.permute.xlu0 %4527
  %4529 = vset.pattern.permute.xlu0 0
  %4530 = vperm.xlu0 %4529, %v4469
  %v4531 = vpop.permute.xlu0 %4530
  %4532 = vset.pattern.permute.xlu0 0
  %4533 = vperm.xlu0 %4532, %v4470
  %v4534 = vpop.permute.xlu0 %4533
  %v4535 = vlaneseq
  %v4536 = vshrl.u32 %v4535, 7
  %v4537 = vsub.s32 %v1973, %v4536
  %v4538 = vrot.slane %v4489, %v4537
  %v4539 = vlaneseq
  %v4540 = vshrl.u32 %v4539, 7
  %v4541 = vsub.s32 %v1973, %v4540
  %v4542 = vrot.slane %v4492, %v4541
  %v4543 = vlaneseq
  %v4544 = vshrl.u32 %v4543, 7
  %v4545 = vsub.s32 %v1973, %v4544
  %v4546 = vrot.slane %v4495, %v4545
  %v4547 = vlaneseq
  %v4548 = vshrl.u32 %v4547, 7
  %v4549 = vsub.s32 %v1973, %v4548
  %v4550 = vrot.slane %v4498, %v4549
  %v4551 = vlaneseq
  %v4552 = vshrl.u32 %v4551, 7
  %v4553 = vsub.s32 %v1973, %v4552
  %v4554 = vrot.slane %v4501, %v4553
  %v4555 = vlaneseq
  %v4556 = vshrl.u32 %v4555, 7
  %v4557 = vsub.s32 %v1973, %v4556
  %v4558 = vrot.slane %v4504, %v4557
  %v4559 = vlaneseq
  %v4560 = vshrl.u32 %v4559, 7
  %v4561 = vsub.s32 %v1973, %v4560
  %v4562 = vrot.slane %v4507, %v4561
  %v4563 = vlaneseq
  %v4564 = vshrl.u32 %v4563, 7
  %v4565 = vsub.s32 %v1973, %v4564
  %v4566 = vrot.slane %v4510, %v4565
  %v4567 = vlaneseq
  %v4568 = vshrl.u32 %v4567, 7
  %v4569 = vsub.s32 %v1973, %v4568
  %v4570 = vrot.slane %v4513, %v4569
  %v4571 = vlaneseq
  %v4572 = vshrl.u32 %v4571, 7
  %v4573 = vsub.s32 %v1973, %v4572
  %v4574 = vrot.slane %v4516, %v4573
  %v4575 = vlaneseq
  %v4576 = vshrl.u32 %v4575, 7
  %v4577 = vsub.s32 %v1973, %v4576
  %v4578 = vrot.slane %v4519, %v4577
  %v4579 = vlaneseq
  %v4580 = vshrl.u32 %v4579, 7
  %v4581 = vsub.s32 %v1973, %v4580
  %v4582 = vrot.slane %v4522, %v4581
  %v4583 = vlaneseq
  %v4584 = vshrl.u32 %v4583, 7
  %v4585 = vsub.s32 %v1973, %v4584
  %v4586 = vrot.slane %v4525, %v4585
  %v4587 = vlaneseq
  %v4588 = vshrl.u32 %v4587, 7
  %v4589 = vsub.s32 %v1973, %v4588
  %v4590 = vrot.slane %v4528, %v4589
  %v4591 = vlaneseq
  %v4592 = vshrl.u32 %v4591, 7
  %v4593 = vsub.s32 %v1973, %v4592
  %v4594 = vrot.slane %v4531, %v4593
  %v4595 = vlaneseq
  %v4596 = vshrl.u32 %v4595, 7
  %v4597 = vsub.s32 %v1973, %v4596
  %v4598 = vrot.slane %v4534, %v4597
  %v4599 = vsel %vm459, %v4542, %v4538
  %v4600 = vsel %vm2286, %v4546, %v4599
  %v4601 = vsel %vm2288, %v4550, %v4600
  %v4602 = vsel %vm2290, %v4554, %v4601
  %v4603 = vsel %vm2292, %v4558, %v4602
  %v4604 = vsel %vm2294, %v4562, %v4603
  %v4605 = vsel %vm2296, %v4566, %v4604
  %v4606 = vsel %vm459, %v4574, %v4570
  %v4607 = vsel %vm2286, %v4578, %v4606
  %v4608 = vsel %vm2288, %v4582, %v4607
  %v4609 = vsel %vm2290, %v4586, %v4608
  %v4610 = vsel %vm2292, %v4590, %v4609
  %v4611 = vsel %vm2294, %v4594, %v4610
  %v4612 = vsel %vm2296, %v4598, %v4611
  %v4615 = vsel %vm2010, %v4605, -inf
  %4616 = vmax.xlane.f32.xlu0 %v4615
  %v4617 = vpop.xlane.xlu0 %4616
  %v4618 = vsel %vm2010, %v4612, -inf
  %4619 = vmax.xlane.f32.xlu0 %v4618
  %v4620 = vpop.xlane.xlu0 %4619
  %v4623 = vlaneseq
  %v4624 = vshrl.u32 %v4623, 7
  %v4625 = vsub.s32 0, %v4624
  %v4626 = vrot.slane %v4617, %v4625
  %v4627 = vlaneseq
  %v4628 = vshrl.u32 %v4627, 7
  %v4629 = vsub.s32 1, %v4628
  %v4630 = vrot.slane %v4617, %v4629
  %v4631 = vlaneseq
  %v4632 = vshrl.u32 %v4631, 7
  %v4633 = vsub.s32 2, %v4632
  %v4634 = vrot.slane %v4617, %v4633
  %v4635 = vlaneseq
  %v4636 = vshrl.u32 %v4635, 7
  %v4637 = vsub.s32 3, %v4636
  %v4638 = vrot.slane %v4617, %v4637
  %v4639 = vlaneseq
  %v4640 = vshrl.u32 %v4639, 7
  %v4641 = vsub.s32 4, %v4640
  %v4642 = vrot.slane %v4617, %v4641
  %v4643 = vlaneseq
  %v4644 = vshrl.u32 %v4643, 7
  %v4645 = vsub.s32 5, %v4644
  %v4646 = vrot.slane %v4617, %v4645
  %v4647 = vlaneseq
  %v4648 = vshrl.u32 %v4647, 7
  %v4649 = vsub.s32 6, %v4648
  %v4650 = vrot.slane %v4617, %v4649
  %v4651 = vlaneseq
  %v4652 = vshrl.u32 %v4651, 7
  %v4653 = vsub.s32 7, %v4652
  %v4654 = vrot.slane %v4617, %v4653
  %v4655 = vlaneseq
  %v4656 = vshrl.u32 %v4655, 7
  %v4657 = vsub.s32 0, %v4656
  %v4658 = vrot.slane %v4620, %v4657
  %v4659 = vlaneseq
  %v4660 = vshrl.u32 %v4659, 7
  %v4661 = vsub.s32 1, %v4660
  %v4662 = vrot.slane %v4620, %v4661
  %v4663 = vlaneseq
  %v4664 = vshrl.u32 %v4663, 7
  %v4665 = vsub.s32 2, %v4664
  %v4666 = vrot.slane %v4620, %v4665
  %v4667 = vlaneseq
  %v4668 = vshrl.u32 %v4667, 7
  %v4669 = vsub.s32 3, %v4668
  %v4670 = vrot.slane %v4620, %v4669
  %v4671 = vlaneseq
  %v4672 = vshrl.u32 %v4671, 7
  %v4673 = vsub.s32 4, %v4672
  %v4674 = vrot.slane %v4620, %v4673
  %v4675 = vlaneseq
  %v4676 = vshrl.u32 %v4675, 7
  %v4677 = vsub.s32 5, %v4676
  %v4678 = vrot.slane %v4620, %v4677
  %v4679 = vlaneseq
  %v4680 = vshrl.u32 %v4679, 7
  %v4681 = vsub.s32 6, %v4680
  %v4682 = vrot.slane %v4620, %v4681
  %v4683 = vlaneseq
  %v4684 = vshrl.u32 %v4683, 7
  %v4685 = vsub.s32 7, %v4684
  %v4686 = vrot.slane %v4620, %v4685
  %vm4703 = vcmp.ge.f32.partialorder %v4455, %v4626
  %vm4704 = vcmp.ge.f32.partialorder %v4456, %v4630
  %vm4705 = vcmp.ge.f32.partialorder %v4457, %v4634
  %vm4706 = vcmp.ge.f32.partialorder %v4458, %v4638
  %vm4707 = vcmp.ge.f32.partialorder %v4459, %v4642
  %vm4708 = vcmp.ge.f32.partialorder %v4460, %v4646
  %vm4709 = vcmp.ge.f32.partialorder %v4461, %v4650
  %vm4710 = vcmp.ge.f32.partialorder %v4462, %v4654
  %vm4711 = vcmp.ge.f32.partialorder %v4463, %v4658
  %vm4712 = vcmp.ge.f32.partialorder %v4464, %v4662
  %vm4713 = vcmp.ge.f32.partialorder %v4465, %v4666
  %vm4714 = vcmp.ge.f32.partialorder %v4466, %v4670
  %vm4715 = vcmp.ge.f32.partialorder %v4467, %v4674
  %vm4716 = vcmp.ge.f32.partialorder %v4468, %v4678
  %vm4717 = vcmp.ge.f32.partialorder %v4469, %v4682
  %vm4718 = vcmp.ge.f32.partialorder %v4470, %v4686
  %v4719 = vsel %vm4703, %v2413, 8
  %v4720 = vsel %vm4704, %v2413, 8
  %v4721 = vsel %vm4705, %v2413, 8
  %v4722 = vsel %vm4706, %v2413, 8
  %v4723 = vsel %vm4707, %v2413, 8
  %v4724 = vsel %vm4708, %v2413, 8
  %v4725 = vsel %vm4709, %v2413, 8
  %v4726 = vsel %vm4710, %v2413, 8
  %v4727 = vsel %vm4711, %v2413, 8
  %v4728 = vsel %vm4712, %v2413, 8
  %v4729 = vsel %vm4713, %v2413, 8
  %v4730 = vsel %vm4714, %v2413, 8
  %v4731 = vsel %vm4715, %v2413, 8
  %v4732 = vsel %vm4716, %v2413, 8
  %v4733 = vsel %vm4717, %v2413, 8
  %v4734 = vsel %vm4718, %v2413, 8
  %4735 = vset.pattern.permute.xlu0 0
  %4736 = vperm.xlu0 %4735, %v4719
  %v4737 = vpop.permute.xlu0 %4736
  %4738 = vset.pattern.permute.xlu0 0
  %4739 = vperm.xlu0 %4738, %v4720
  %v4740 = vpop.permute.xlu0 %4739
  %4741 = vset.pattern.permute.xlu0 0
  %4742 = vperm.xlu0 %4741, %v4721
  %v4743 = vpop.permute.xlu0 %4742
  %4744 = vset.pattern.permute.xlu0 0
  %4745 = vperm.xlu0 %4744, %v4722
  %v4746 = vpop.permute.xlu0 %4745
  %4747 = vset.pattern.permute.xlu0 0
  %4748 = vperm.xlu0 %4747, %v4723
  %v4749 = vpop.permute.xlu0 %4748
  %4750 = vset.pattern.permute.xlu0 0
  %4751 = vperm.xlu0 %4750, %v4724
  %v4752 = vpop.permute.xlu0 %4751
  %4753 = vset.pattern.permute.xlu0 0
  %4754 = vperm.xlu0 %4753, %v4725
  %v4755 = vpop.permute.xlu0 %4754
  %4756 = vset.pattern.permute.xlu0 0
  %4757 = vperm.xlu0 %4756, %v4726
  %v4758 = vpop.permute.xlu0 %4757
  %4759 = vset.pattern.permute.xlu0 0
  %4760 = vperm.xlu0 %4759, %v4727
  %v4761 = vpop.permute.xlu0 %4760
  %4762 = vset.pattern.permute.xlu0 0
  %4763 = vperm.xlu0 %4762, %v4728
  %v4764 = vpop.permute.xlu0 %4763
  %4765 = vset.pattern.permute.xlu0 0
  %4766 = vperm.xlu0 %4765, %v4729
  %v4767 = vpop.permute.xlu0 %4766
  %4768 = vset.pattern.permute.xlu0 0
  %4769 = vperm.xlu0 %4768, %v4730
  %v4770 = vpop.permute.xlu0 %4769
  %4771 = vset.pattern.permute.xlu0 0
  %4772 = vperm.xlu0 %4771, %v4731
  %v4773 = vpop.permute.xlu0 %4772
  %4774 = vset.pattern.permute.xlu0 0
  %4775 = vperm.xlu0 %4774, %v4732
  %v4776 = vpop.permute.xlu0 %4775
  %4777 = vset.pattern.permute.xlu0 0
  %4778 = vperm.xlu0 %4777, %v4733
  %v4779 = vpop.permute.xlu0 %4778
  %4780 = vset.pattern.permute.xlu0 0
  %4781 = vperm.xlu0 %4780, %v4734
  %v4782 = vpop.permute.xlu0 %4781
  %v4783 = vlaneseq
  %v4784 = vshrl.u32 %v4783, 7
  %v4785 = vsub.s32 %v1973, %v4784
  %v4786 = vrot.slane %v4737, %v4785
  %v4787 = vlaneseq
  %v4788 = vshrl.u32 %v4787, 7
  %v4789 = vsub.s32 %v1973, %v4788
  %v4790 = vrot.slane %v4740, %v4789
  %v4791 = vlaneseq
  %v4792 = vshrl.u32 %v4791, 7
  %v4793 = vsub.s32 %v1973, %v4792
  %v4794 = vrot.slane %v4743, %v4793
  %v4795 = vlaneseq
  %v4796 = vshrl.u32 %v4795, 7
  %v4797 = vsub.s32 %v1973, %v4796
  %v4798 = vrot.slane %v4746, %v4797
  %v4799 = vlaneseq
  %v4800 = vshrl.u32 %v4799, 7
  %v4801 = vsub.s32 %v1973, %v4800
  %v4802 = vrot.slane %v4749, %v4801
  %v4803 = vlaneseq
  %v4804 = vshrl.u32 %v4803, 7
  %v4805 = vsub.s32 %v1973, %v4804
  %v4806 = vrot.slane %v4752, %v4805
  %v4807 = vlaneseq
  %v4808 = vshrl.u32 %v4807, 7
  %v4809 = vsub.s32 %v1973, %v4808
  %v4810 = vrot.slane %v4755, %v4809
  %v4811 = vlaneseq
  %v4812 = vshrl.u32 %v4811, 7
  %v4813 = vsub.s32 %v1973, %v4812
  %v4814 = vrot.slane %v4758, %v4813
  %v4815 = vlaneseq
  %v4816 = vshrl.u32 %v4815, 7
  %v4817 = vsub.s32 %v1973, %v4816
  %v4818 = vrot.slane %v4761, %v4817
  %v4819 = vlaneseq
  %v4820 = vshrl.u32 %v4819, 7
  %v4821 = vsub.s32 %v1973, %v4820
  %v4822 = vrot.slane %v4764, %v4821
  %v4823 = vlaneseq
  %v4824 = vshrl.u32 %v4823, 7
  %v4825 = vsub.s32 %v1973, %v4824
  %v4826 = vrot.slane %v4767, %v4825
  %v4827 = vlaneseq
  %v4828 = vshrl.u32 %v4827, 7
  %v4829 = vsub.s32 %v1973, %v4828
  %v4830 = vrot.slane %v4770, %v4829
  %v4831 = vlaneseq
  %v4832 = vshrl.u32 %v4831, 7
  %v4833 = vsub.s32 %v1973, %v4832
  %v4834 = vrot.slane %v4773, %v4833
  %v4835 = vlaneseq
  %v4836 = vshrl.u32 %v4835, 7
  %v4837 = vsub.s32 %v1973, %v4836
  %v4838 = vrot.slane %v4776, %v4837
  %v4839 = vlaneseq
  %v4840 = vshrl.u32 %v4839, 7
  %v4841 = vsub.s32 %v1973, %v4840
  %v4842 = vrot.slane %v4779, %v4841
  %v4843 = vlaneseq
  %v4844 = vshrl.u32 %v4843, 7
  %v4845 = vsub.s32 %v1973, %v4844
  %v4846 = vrot.slane %v4782, %v4845
  %v4847 = vsel %vm459, %v4790, %v4786
  %v4848 = vsel %vm2286, %v4794, %v4847
  %v4849 = vsel %vm2288, %v4798, %v4848
  %v4850 = vsel %vm2290, %v4802, %v4849
  %v4851 = vsel %vm2292, %v4806, %v4850
  %v4852 = vsel %vm2294, %v4810, %v4851
  %v4853 = vsel %vm2296, %v4814, %v4852
  %v4854 = vsel %vm459, %v4822, %v4818
  %v4855 = vsel %vm2286, %v4826, %v4854
  %v4856 = vsel %vm2288, %v4830, %v4855
  %v4857 = vsel %vm2290, %v4834, %v4856
  %v4858 = vsel %vm2292, %v4838, %v4857
  %v4859 = vsel %vm2294, %v4842, %v4858
  %v4860 = vsel %vm2296, %v4846, %v4859
  %v4861 = vsel %vm2010, %v4853, 2147483647
  %v4862 = vand.u32 %v4861, 65535
  %v4863 = vshra.s32 %v4861, 16
  %v4864 = vcvt.s32.f32 %v4862
  %v4865 = vcvt.s32.f32 %v4863
  %4866 = vmin.xlane.f32.xlu0 %v4865
  %v4867 = vpop.xlane.xlu0 %4866
  %vm4868 = vcmp.eq.f32.partialorder %v4865, %v4867
  %v4869 = vsel %vm4868, %v4864, inf
  %4870 = vmin.xlane.f32.xlu0 %v4869
  %v4871 = vpop.xlane.xlu0 %4870
  %v4872 = vcvt.f32.s32 %v4871
  %v4873 = vcvt.f32.s32 %v4867
  %v4874 = vshll.u32 %v4873, 16
  %v4875 = vadd.s32 %v4874, %v4872
  %v4876 = vsel %vm2010, %v4860, 2147483647
  %v4877 = vand.u32 %v4876, 65535
  %v4878 = vshra.s32 %v4876, 16
  %v4879 = vcvt.s32.f32 %v4877
  %v4880 = vcvt.s32.f32 %v4878
  %4881 = vmin.xlane.f32.xlu0 %v4880
  %v4882 = vpop.xlane.xlu0 %4881
  %vm4883 = vcmp.eq.f32.partialorder %v4880, %v4882
  %v4884 = vsel %vm4883, %v4879, inf
  %4885 = vmin.xlane.f32.xlu0 %v4884
  %v4886 = vpop.xlane.xlu0 %4885
  %v4887 = vcvt.f32.s32 %v4886
  %v4888 = vcvt.f32.s32 %v4882
  %v4889 = vshll.u32 %v4888, 16
  %v4890 = vadd.s32 %v4889, %v4887
  %v4892 = vunpack.c.l.s4 1983009808
  %v4893 = vunpack.c.0.s8 %v4892
  %v4894 = vlaneseq
  %v4895 = vshrl.u32 %v4894, 7
  %v4896 = vsub.s32 %v4893, %v4895
  %v4897 = vrot.slane %v1968, %v4896
  %v4898 = vlaneseq
  %v4899 = vshrl.u32 %v4898, 7
  %v4900 = vsub.s32 0, %v4899
  %v4901 = vrot.slane %v4897, %v4900
  %4903 = vbcast.lane.b32.xlu0 %v4901, 256
  %v4904 = vpop.permute.xlu0 %4903
  %v4905 = vlaneseq
  %v4906 = vshrl.u32 %v4905, 7
  %v4907 = vsub.s32 1, %v4906
  %v4908 = vrot.slane %v4897, %v4907
  %4910 = vbcast.lane.b32.xlu0 %v4908, 256
  %v4911 = vpop.permute.xlu0 %4910
  %v4914 = vadd.f32 %v4617, %v4904
  %v4915 = vadd.f32 %v4620, %v4911
  %v4916 = vadd.f32 %v4914, %v2083
  %v4917 = vadd.f32 %v4914, %v2090
  %v4918 = vadd.f32 %v4914, %v2097
  %v4919 = vadd.f32 %v4914, %v2104
  %v4920 = vadd.f32 %v4914, %v2111
  %v4921 = vadd.f32 %v4914, %v2118
  %v4922 = vadd.f32 %v4914, %v2125
  %v4923 = vadd.f32 %v4914, %v2132
  %v4924 = vadd.f32 %v4915, %v2083
  %v4925 = vadd.f32 %v4915, %v2090
  %v4926 = vadd.f32 %v4915, %v2097
  %v4927 = vadd.f32 %v4915, %v2104
  %v4928 = vadd.f32 %v4915, %v2111
  %v4929 = vadd.f32 %v4915, %v2118
  %v4930 = vadd.f32 %v4915, %v2125
  %v4931 = vadd.f32 %v4915, %v2132
  %4948 = vset.pattern.permute.xlu0 0
  %4949 = vperm.xlu0 %4948, %v4916
  %v4950 = vpop.permute.xlu0 %4949
  %4951 = vset.pattern.permute.xlu0 0
  %4952 = vperm.xlu0 %4951, %v4917
  %v4953 = vpop.permute.xlu0 %4952
  %4954 = vset.pattern.permute.xlu0 0
  %4955 = vperm.xlu0 %4954, %v4918
  %v4956 = vpop.permute.xlu0 %4955
  %4957 = vset.pattern.permute.xlu0 0
  %4958 = vperm.xlu0 %4957, %v4919
  %v4959 = vpop.permute.xlu0 %4958
  %4960 = vset.pattern.permute.xlu0 0
  %4961 = vperm.xlu0 %4960, %v4920
  %v4962 = vpop.permute.xlu0 %4961
  %4963 = vset.pattern.permute.xlu0 0
  %4964 = vperm.xlu0 %4963, %v4921
  %v4965 = vpop.permute.xlu0 %4964
  %4966 = vset.pattern.permute.xlu0 0
  %4967 = vperm.xlu0 %4966, %v4922
  %v4968 = vpop.permute.xlu0 %4967
  %4969 = vset.pattern.permute.xlu0 0
  %4970 = vperm.xlu0 %4969, %v4923
  %v4971 = vpop.permute.xlu0 %4970
  %4972 = vset.pattern.permute.xlu0 0
  %4973 = vperm.xlu0 %4972, %v4924
  %v4974 = vpop.permute.xlu0 %4973
  %4975 = vset.pattern.permute.xlu0 0
  %4976 = vperm.xlu0 %4975, %v4925
  %v4977 = vpop.permute.xlu0 %4976
  %4978 = vset.pattern.permute.xlu0 0
  %4979 = vperm.xlu0 %4978, %v4926
  %v4980 = vpop.permute.xlu0 %4979
  %4981 = vset.pattern.permute.xlu0 0
  %4982 = vperm.xlu0 %4981, %v4927
  %v4983 = vpop.permute.xlu0 %4982
  %4984 = vset.pattern.permute.xlu0 0
  %4985 = vperm.xlu0 %4984, %v4928
  %v4986 = vpop.permute.xlu0 %4985
  %4987 = vset.pattern.permute.xlu0 0
  %4988 = vperm.xlu0 %4987, %v4929
  %v4989 = vpop.permute.xlu0 %4988
  %4990 = vset.pattern.permute.xlu0 0
  %4991 = vperm.xlu0 %4990, %v4930
  %v4992 = vpop.permute.xlu0 %4991
  %4993 = vset.pattern.permute.xlu0 0
  %4994 = vperm.xlu0 %4993, %v4931
  %v4995 = vpop.permute.xlu0 %4994
  %v4996 = vlaneseq
  %v4997 = vshrl.u32 %v4996, 7
  %v4998 = vsub.s32 %v1973, %v4997
  %v4999 = vrot.slane %v4950, %v4998
  %v5000 = vlaneseq
  %v5001 = vshrl.u32 %v5000, 7
  %v5002 = vsub.s32 %v1973, %v5001
  %v5003 = vrot.slane %v4953, %v5002
  %v5004 = vlaneseq
  %v5005 = vshrl.u32 %v5004, 7
  %v5006 = vsub.s32 %v1973, %v5005
  %v5007 = vrot.slane %v4956, %v5006
  %v5008 = vlaneseq
  %v5009 = vshrl.u32 %v5008, 7
  %v5010 = vsub.s32 %v1973, %v5009
  %v5011 = vrot.slane %v4959, %v5010
  %v5012 = vlaneseq
  %v5013 = vshrl.u32 %v5012, 7
  %v5014 = vsub.s32 %v1973, %v5013
  %v5015 = vrot.slane %v4962, %v5014
  %v5016 = vlaneseq
  %v5017 = vshrl.u32 %v5016, 7
  %v5018 = vsub.s32 %v1973, %v5017
  %v5019 = vrot.slane %v4965, %v5018
  %v5020 = vlaneseq
  %v5021 = vshrl.u32 %v5020, 7
  %v5022 = vsub.s32 %v1973, %v5021
  %v5023 = vrot.slane %v4968, %v5022
  %v5024 = vlaneseq
  %v5025 = vshrl.u32 %v5024, 7
  %v5026 = vsub.s32 %v1973, %v5025
  %v5027 = vrot.slane %v4971, %v5026
  %v5028 = vlaneseq
  %v5029 = vshrl.u32 %v5028, 7
  %v5030 = vsub.s32 %v1973, %v5029
  %v5031 = vrot.slane %v4974, %v5030
  %v5032 = vlaneseq
  %v5033 = vshrl.u32 %v5032, 7
  %v5034 = vsub.s32 %v1973, %v5033
  %v5035 = vrot.slane %v4977, %v5034
  %v5036 = vlaneseq
  %v5037 = vshrl.u32 %v5036, 7
  %v5038 = vsub.s32 %v1973, %v5037
  %v5039 = vrot.slane %v4980, %v5038
  %v5040 = vlaneseq
  %v5041 = vshrl.u32 %v5040, 7
  %v5042 = vsub.s32 %v1973, %v5041
  %v5043 = vrot.slane %v4983, %v5042
  %v5044 = vlaneseq
  %v5045 = vshrl.u32 %v5044, 7
  %v5046 = vsub.s32 %v1973, %v5045
  %v5047 = vrot.slane %v4986, %v5046
  %v5048 = vlaneseq
  %v5049 = vshrl.u32 %v5048, 7
  %v5050 = vsub.s32 %v1973, %v5049
  %v5051 = vrot.slane %v4989, %v5050
  %v5052 = vlaneseq
  %v5053 = vshrl.u32 %v5052, 7
  %v5054 = vsub.s32 %v1973, %v5053
  %v5055 = vrot.slane %v4992, %v5054
  %v5056 = vlaneseq
  %v5057 = vshrl.u32 %v5056, 7
  %v5058 = vsub.s32 %v1973, %v5057
  %v5059 = vrot.slane %v4995, %v5058
  %v5060 = vsel %vm459, %v5003, %v4999
  %v5061 = vsel %vm2286, %v5007, %v5060
  %v5062 = vsel %vm2288, %v5011, %v5061
  %v5063 = vsel %vm2290, %v5015, %v5062
  %v5064 = vsel %vm2292, %v5019, %v5063
  %v5065 = vsel %vm2294, %v5023, %v5064
  %v5066 = vsel %vm2296, %v5027, %v5065
  %v5067 = vsel %vm459, %v5035, %v5031
  %v5068 = vsel %vm2286, %v5039, %v5067
  %v5069 = vsel %vm2288, %v5043, %v5068
  %v5070 = vsel %vm2290, %v5047, %v5069
  %v5071 = vsel %vm2292, %v5051, %v5070
  %v5072 = vsel %vm2294, %v5055, %v5071
  %v5073 = vsel %vm2296, %v5059, %v5072
  %v5076 = vsel %vm2010, %v5066, -inf
  %5077 = vmax.xlane.f32.xlu0 %v5076
  %v5078 = vpop.xlane.xlu0 %5077
  %v5079 = vsel %vm2010, %v5073, -inf
  %5080 = vmax.xlane.f32.xlu0 %v5079
  %v5081 = vpop.xlane.xlu0 %5080
  %v5084 = vlaneseq
  %v5085 = vshrl.u32 %v5084, 7
  %v5086 = vsub.s32 0, %v5085
  %v5087 = vrot.slane %v5078, %v5086
  %v5088 = vlaneseq
  %v5089 = vshrl.u32 %v5088, 7
  %v5090 = vsub.s32 1, %v5089
  %v5091 = vrot.slane %v5078, %v5090
  %v5092 = vlaneseq
  %v5093 = vshrl.u32 %v5092, 7
  %v5094 = vsub.s32 2, %v5093
  %v5095 = vrot.slane %v5078, %v5094
  %v5096 = vlaneseq
  %v5097 = vshrl.u32 %v5096, 7
  %v5098 = vsub.s32 3, %v5097
  %v5099 = vrot.slane %v5078, %v5098
  %v5100 = vlaneseq
  %v5101 = vshrl.u32 %v5100, 7
  %v5102 = vsub.s32 4, %v5101
  %v5103 = vrot.slane %v5078, %v5102
  %v5104 = vlaneseq
  %v5105 = vshrl.u32 %v5104, 7
  %v5106 = vsub.s32 5, %v5105
  %v5107 = vrot.slane %v5078, %v5106
  %v5108 = vlaneseq
  %v5109 = vshrl.u32 %v5108, 7
  %v5110 = vsub.s32 6, %v5109
  %v5111 = vrot.slane %v5078, %v5110
  %v5112 = vlaneseq
  %v5113 = vshrl.u32 %v5112, 7
  %v5114 = vsub.s32 7, %v5113
  %v5115 = vrot.slane %v5078, %v5114
  %v5116 = vlaneseq
  %v5117 = vshrl.u32 %v5116, 7
  %v5118 = vsub.s32 0, %v5117
  %v5119 = vrot.slane %v5081, %v5118
  %v5120 = vlaneseq
  %v5121 = vshrl.u32 %v5120, 7
  %v5122 = vsub.s32 1, %v5121
  %v5123 = vrot.slane %v5081, %v5122
  %v5124 = vlaneseq
  %v5125 = vshrl.u32 %v5124, 7
  %v5126 = vsub.s32 2, %v5125
  %v5127 = vrot.slane %v5081, %v5126
  %v5128 = vlaneseq
  %v5129 = vshrl.u32 %v5128, 7
  %v5130 = vsub.s32 3, %v5129
  %v5131 = vrot.slane %v5081, %v5130
  %v5132 = vlaneseq
  %v5133 = vshrl.u32 %v5132, 7
  %v5134 = vsub.s32 4, %v5133
  %v5135 = vrot.slane %v5081, %v5134
  %v5136 = vlaneseq
  %v5137 = vshrl.u32 %v5136, 7
  %v5138 = vsub.s32 5, %v5137
  %v5139 = vrot.slane %v5081, %v5138
  %v5140 = vlaneseq
  %v5141 = vshrl.u32 %v5140, 7
  %v5142 = vsub.s32 6, %v5141
  %v5143 = vrot.slane %v5081, %v5142
  %v5144 = vlaneseq
  %v5145 = vshrl.u32 %v5144, 7
  %v5146 = vsub.s32 7, %v5145
  %v5147 = vrot.slane %v5081, %v5146
  %vm5164 = vcmp.ge.f32.partialorder %v4916, %v5087
  %vm5165 = vcmp.ge.f32.partialorder %v4917, %v5091
  %vm5166 = vcmp.ge.f32.partialorder %v4918, %v5095
  %vm5167 = vcmp.ge.f32.partialorder %v4919, %v5099
  %vm5168 = vcmp.ge.f32.partialorder %v4920, %v5103
  %vm5169 = vcmp.ge.f32.partialorder %v4921, %v5107
  %vm5170 = vcmp.ge.f32.partialorder %v4922, %v5111
  %vm5171 = vcmp.ge.f32.partialorder %v4923, %v5115
  %vm5172 = vcmp.ge.f32.partialorder %v4924, %v5119
  %vm5173 = vcmp.ge.f32.partialorder %v4925, %v5123
  %vm5174 = vcmp.ge.f32.partialorder %v4926, %v5127
  %vm5175 = vcmp.ge.f32.partialorder %v4927, %v5131
  %vm5176 = vcmp.ge.f32.partialorder %v4928, %v5135
  %vm5177 = vcmp.ge.f32.partialorder %v4929, %v5139
  %vm5178 = vcmp.ge.f32.partialorder %v4930, %v5143
  %vm5179 = vcmp.ge.f32.partialorder %v4931, %v5147
  %v5180 = vsel %vm5164, %v2413, 8
  %v5181 = vsel %vm5165, %v2413, 8
  %v5182 = vsel %vm5166, %v2413, 8
  %v5183 = vsel %vm5167, %v2413, 8
  %v5184 = vsel %vm5168, %v2413, 8
  %v5185 = vsel %vm5169, %v2413, 8
  %v5186 = vsel %vm5170, %v2413, 8
  %v5187 = vsel %vm5171, %v2413, 8
  %v5188 = vsel %vm5172, %v2413, 8
  %v5189 = vsel %vm5173, %v2413, 8
  %v5190 = vsel %vm5174, %v2413, 8
  %v5191 = vsel %vm5175, %v2413, 8
  %v5192 = vsel %vm5176, %v2413, 8
  %v5193 = vsel %vm5177, %v2413, 8
  %v5194 = vsel %vm5178, %v2413, 8
  %v5195 = vsel %vm5179, %v2413, 8
  %5196 = vset.pattern.permute.xlu0 0
  %5197 = vperm.xlu0 %5196, %v5180
  %v5198 = vpop.permute.xlu0 %5197
  %5199 = vset.pattern.permute.xlu0 0
  %5200 = vperm.xlu0 %5199, %v5181
  %v5201 = vpop.permute.xlu0 %5200
  %5202 = vset.pattern.permute.xlu0 0
  %5203 = vperm.xlu0 %5202, %v5182
  %v5204 = vpop.permute.xlu0 %5203
  %5205 = vset.pattern.permute.xlu0 0
  %5206 = vperm.xlu0 %5205, %v5183
  %v5207 = vpop.permute.xlu0 %5206
  %5208 = vset.pattern.permute.xlu0 0
  %5209 = vperm.xlu0 %5208, %v5184
  %v5210 = vpop.permute.xlu0 %5209
  %5211 = vset.pattern.permute.xlu0 0
  %5212 = vperm.xlu0 %5211, %v5185
  %v5213 = vpop.permute.xlu0 %5212
  %5214 = vset.pattern.permute.xlu0 0
  %5215 = vperm.xlu0 %5214, %v5186
  %v5216 = vpop.permute.xlu0 %5215
  %5217 = vset.pattern.permute.xlu0 0
  %5218 = vperm.xlu0 %5217, %v5187
  %v5219 = vpop.permute.xlu0 %5218
  %5220 = vset.pattern.permute.xlu0 0
  %5221 = vperm.xlu0 %5220, %v5188
  %v5222 = vpop.permute.xlu0 %5221
  %5223 = vset.pattern.permute.xlu0 0
  %5224 = vperm.xlu0 %5223, %v5189
  %v5225 = vpop.permute.xlu0 %5224
  %5226 = vset.pattern.permute.xlu0 0
  %5227 = vperm.xlu0 %5226, %v5190
  %v5228 = vpop.permute.xlu0 %5227
  %5229 = vset.pattern.permute.xlu0 0
  %5230 = vperm.xlu0 %5229, %v5191
  %v5231 = vpop.permute.xlu0 %5230
  %5232 = vset.pattern.permute.xlu0 0
  %5233 = vperm.xlu0 %5232, %v5192
  %v5234 = vpop.permute.xlu0 %5233
  %5235 = vset.pattern.permute.xlu0 0
  %5236 = vperm.xlu0 %5235, %v5193
  %v5237 = vpop.permute.xlu0 %5236
  %5238 = vset.pattern.permute.xlu0 0
  %5239 = vperm.xlu0 %5238, %v5194
  %v5240 = vpop.permute.xlu0 %5239
  %5241 = vset.pattern.permute.xlu0 0
  %5242 = vperm.xlu0 %5241, %v5195
  %v5243 = vpop.permute.xlu0 %5242
  %v5244 = vlaneseq
  %v5245 = vshrl.u32 %v5244, 7
  %v5246 = vsub.s32 %v1973, %v5245
  %v5247 = vrot.slane %v5198, %v5246
  %v5248 = vlaneseq
  %v5249 = vshrl.u32 %v5248, 7
  %v5250 = vsub.s32 %v1973, %v5249
  %v5251 = vrot.slane %v5201, %v5250
  %v5252 = vlaneseq
  %v5253 = vshrl.u32 %v5252, 7
  %v5254 = vsub.s32 %v1973, %v5253
  %v5255 = vrot.slane %v5204, %v5254
  %v5256 = vlaneseq
  %v5257 = vshrl.u32 %v5256, 7
  %v5258 = vsub.s32 %v1973, %v5257
  %v5259 = vrot.slane %v5207, %v5258
  %v5260 = vlaneseq
  %v5261 = vshrl.u32 %v5260, 7
  %v5262 = vsub.s32 %v1973, %v5261
  %v5263 = vrot.slane %v5210, %v5262
  %v5264 = vlaneseq
  %v5265 = vshrl.u32 %v5264, 7
  %v5266 = vsub.s32 %v1973, %v5265
  %v5267 = vrot.slane %v5213, %v5266
  %v5268 = vlaneseq
  %v5269 = vshrl.u32 %v5268, 7
  %v5270 = vsub.s32 %v1973, %v5269
  %v5271 = vrot.slane %v5216, %v5270
  %v5272 = vlaneseq
  %v5273 = vshrl.u32 %v5272, 7
  %v5274 = vsub.s32 %v1973, %v5273
  %v5275 = vrot.slane %v5219, %v5274
  %v5276 = vlaneseq
  %v5277 = vshrl.u32 %v5276, 7
  %v5278 = vsub.s32 %v1973, %v5277
  %v5279 = vrot.slane %v5222, %v5278
  %v5280 = vlaneseq
  %v5281 = vshrl.u32 %v5280, 7
  %v5282 = vsub.s32 %v1973, %v5281
  %v5283 = vrot.slane %v5225, %v5282
  %v5284 = vlaneseq
  %v5285 = vshrl.u32 %v5284, 7
  %v5286 = vsub.s32 %v1973, %v5285
  %v5287 = vrot.slane %v5228, %v5286
  %v5288 = vlaneseq
  %v5289 = vshrl.u32 %v5288, 7
  %v5290 = vsub.s32 %v1973, %v5289
  %v5291 = vrot.slane %v5231, %v5290
  %v5292 = vlaneseq
  %v5293 = vshrl.u32 %v5292, 7
  %v5294 = vsub.s32 %v1973, %v5293
  %v5295 = vrot.slane %v5234, %v5294
  %v5296 = vlaneseq
  %v5297 = vshrl.u32 %v5296, 7
  %v5298 = vsub.s32 %v1973, %v5297
  %v5299 = vrot.slane %v5237, %v5298
  %v5300 = vlaneseq
  %v5301 = vshrl.u32 %v5300, 7
  %v5302 = vsub.s32 %v1973, %v5301
  %v5303 = vrot.slane %v5240, %v5302
  %v5304 = vlaneseq
  %v5305 = vshrl.u32 %v5304, 7
  %v5306 = vsub.s32 %v1973, %v5305
  %v5307 = vrot.slane %v5243, %v5306
  %v5308 = vsel %vm459, %v5251, %v5247
  %v5309 = vsel %vm2286, %v5255, %v5308
  %v5310 = vsel %vm2288, %v5259, %v5309
  %v5311 = vsel %vm2290, %v5263, %v5310
  %v5312 = vsel %vm2292, %v5267, %v5311
  %v5313 = vsel %vm2294, %v5271, %v5312
  %v5314 = vsel %vm2296, %v5275, %v5313
  %v5315 = vsel %vm459, %v5283, %v5279
  %v5316 = vsel %vm2286, %v5287, %v5315
  %v5317 = vsel %vm2288, %v5291, %v5316
  %v5318 = vsel %vm2290, %v5295, %v5317
  %v5319 = vsel %vm2292, %v5299, %v5318
  %v5320 = vsel %vm2294, %v5303, %v5319
  %v5321 = vsel %vm2296, %v5307, %v5320
  %v5322 = vsel %vm2010, %v5314, 2147483647
  %v5323 = vand.u32 %v5322, 65535
  %v5324 = vshra.s32 %v5322, 16
  %v5325 = vcvt.s32.f32 %v5323
  %v5326 = vcvt.s32.f32 %v5324
  %5327 = vmin.xlane.f32.xlu0 %v5326
  %v5328 = vpop.xlane.xlu0 %5327
  %vm5329 = vcmp.eq.f32.partialorder %v5326, %v5328
  %v5330 = vsel %vm5329, %v5325, inf
  %5331 = vmin.xlane.f32.xlu0 %v5330
  %v5332 = vpop.xlane.xlu0 %5331
  %v5333 = vcvt.f32.s32 %v5332
  %v5334 = vcvt.f32.s32 %v5328
  %v5335 = vshll.u32 %v5334, 16
  %v5336 = vadd.s32 %v5335, %v5333
  %v5337 = vsel %vm2010, %v5321, 2147483647
  %v5338 = vand.u32 %v5337, 65535
  %v5339 = vshra.s32 %v5337, 16
  %v5340 = vcvt.s32.f32 %v5338
  %v5341 = vcvt.s32.f32 %v5339
  %5342 = vmin.xlane.f32.xlu0 %v5341
  %v5343 = vpop.xlane.xlu0 %5342
  %vm5344 = vcmp.eq.f32.partialorder %v5341, %v5343
  %v5345 = vsel %vm5344, %v5340, inf
  %5346 = vmin.xlane.f32.xlu0 %v5345
  %v5347 = vpop.xlane.xlu0 %5346
  %v5348 = vcvt.f32.s32 %v5347
  %v5349 = vcvt.f32.s32 %v5343
  %v5350 = vshll.u32 %v5349, 16
  %v5351 = vadd.s32 %v5350, %v5348
  %v5353 = vunpack.c.l.s4 1983009808
  %v5354 = vunpack.c.0.s8 %v5353
  %v5355 = vlaneseq
  %v5356 = vshrl.u32 %v5355, 7
  %v5357 = vsub.s32 %v5354, %v5356
  %v5358 = vrot.slane %v1970, %v5357
  %v5359 = vlaneseq
  %v5360 = vshrl.u32 %v5359, 7
  %v5361 = vsub.s32 0, %v5360
  %v5362 = vrot.slane %v5358, %v5361
  %5364 = vbcast.lane.b32.xlu0 %v5362, 256
  %v5365 = vpop.permute.xlu0 %5364
  %v5366 = vlaneseq
  %v5367 = vshrl.u32 %v5366, 7
  %v5368 = vsub.s32 1, %v5367
  %v5369 = vrot.slane %v5358, %v5368
  %5371 = vbcast.lane.b32.xlu0 %v5369, 256
  %v5372 = vpop.permute.xlu0 %5371
  %v5375 = vadd.f32 %v5078, %v5365
  %v5376 = vadd.f32 %v5081, %v5372
  %v5377 = vld [vmem:[%s13] sm:$0x1]
  %v5379 = vlaneseq
  %v5380 = vshrl.u32 %v5379, 7
  %v5381 = vsub.s32 0, %v5380
  %v5382 = vrot.slane %v5377, %v5381
  %5384 = vbcast.lane.b32.xlu0 %v5382, 256
  %v5385 = vpop.permute.xlu0 %5384
  %v5387 = vadd.f32 %v5375, %v5385
  %v5388 = vadd.f32 %v5376, %v5385
  %5391 = vset.pattern.permute.xlu0 0
  %5392 = vperm.xlu0 %5391, %v5387
  %v5393 = vpop.permute.xlu0 %5392
  %5394 = vset.pattern.permute.xlu0 0
  %5395 = vperm.xlu0 %5394, %v5388
  %v5396 = vpop.permute.xlu0 %5395
  %v5397 = vlaneseq
  %v5398 = vshrl.u32 %v5397, 7
  %v5399 = vsub.s32 %v1973, %v5398
  %v5400 = vrot.slane %v5393, %v5399
  %v5401 = vlaneseq
  %v5402 = vshrl.u32 %v5401, 7
  %v5403 = vsub.s32 %v1973, %v5402
  %v5404 = vrot.slane %v5396, %v5403
  %v5405 = vsel %vm459, %v5404, %v5400
  %vm5407 = vcmask 58368
  %5408 = vst.msk [vmem:[%s14] sm:$0x3] %vm5407, %v5405
  %v5409 = vsel %vm5407, %v5405, -inf
  %5410 = vmax.xlane.f32.xlu0 %v5409
  %v5411 = vpop.xlane.xlu0 %5410
  %v5413 = vlaneseq
  %v5414 = vshrl.u32 %v5413, 7
  %v5415 = vsub.s32 0, %v5414
  %v5416 = vrot.slane %v5411, %v5415
  %v5417 = vlaneseq
  %v5418 = vshrl.u32 %v5417, 7
  %v5419 = vsub.s32 1, %v5418
  %v5420 = vrot.slane %v5411, %v5419
  %vm5423 = vcmp.ge.f32.partialorder %v5387, %v5416
  %vm5424 = vcmp.ge.f32.partialorder %v5388, %v5420
  %v5425 = vsel %vm5423, %v2413, 8
  %v5426 = vsel %vm5424, %v2413, 8
  %5427 = vset.pattern.permute.xlu0 0
  %5428 = vperm.xlu0 %5427, %v5425
  %v5429 = vpop.permute.xlu0 %5428
  %5430 = vset.pattern.permute.xlu0 0
  %5431 = vperm.xlu0 %5430, %v5426
  %v5432 = vpop.permute.xlu0 %5431
  %v5433 = vlaneseq
  %v5434 = vshrl.u32 %v5433, 7
  %v5435 = vsub.s32 %v1973, %v5434
  %v5436 = vrot.slane %v5429, %v5435
  %v5437 = vlaneseq
  %v5438 = vshrl.u32 %v5437, 7
  %v5439 = vsub.s32 %v1973, %v5438
  %v5440 = vrot.slane %v5432, %v5439
  %v5441 = vsel %vm459, %v5440, %v5436
  %v5442 = vsel %vm5407, %v5441, 2147483647
  %v5443 = vand.u32 %v5442, 65535
  %v5444 = vshra.s32 %v5442, 16
  %v5445 = vcvt.s32.f32 %v5443
  %v5446 = vcvt.s32.f32 %v5444
  %5447 = vmin.xlane.f32.xlu0 %v5446
  %v5448 = vpop.xlane.xlu0 %5447
  %vm5449 = vcmp.eq.f32.partialorder %v5446, %v5448
  %v5450 = vsel %vm5449, %v5445, inf
  %5451 = vmin.xlane.f32.xlu0 %v5450
  %v5452 = vpop.xlane.xlu0 %5451
  %v5453 = vcvt.f32.s32 %v5452
  %v5454 = vcvt.f32.s32 %v5448
  %v5455 = vshll.u32 %v5454, 16
  %v5456 = vadd.s32 %v5455, %v5453
  %vm5457 = vcmp.eq.s32.totalorder %v1973, %v5456
  %v5458 = vlaneseq
  %v5459 = vshrl.u32 %v5458, 7
  %v5460 = vsub.s32 %v1973, %v5459
  %v5461 = vrot.slane %v5336, %v5460
  %v5462 = vlaneseq
  %v5463 = vshrl.u32 %v5462, 7
  %v5464 = vsub.s32 %v1973, %v5463
  %v5465 = vrot.slane %v5351, %v5464
  %v5466 = vsel %vm459, %v5465, %v5461
  %v5467 = vsel %vm5457, %v5466, 0
  %v5468 = vsel %vm5407, %v5467, 0
  %v5469 = vand.u32 %v5468, 65535
  %v5470 = vshrl.u32 %v5468, 16
  %v5471 = vcvt.s32.f32 %v5469
  %v5472 = vcvt.s32.f32 %v5470
  %5473 = vadd.xlane.f32.xlu0 %v5471
  %v5474 = vpop.xlane.xlu0 %5473
  %5475 = vadd.xlane.f32.xlu0 %v5472
  %v5476 = vpop.xlane.xlu0 %5475
  %v5477 = vcvt.f32.s32 %v5474
  %v5478 = vcvt.f32.s32 %v5476
  %v5479 = vshll.u32 %v5478, 16
  %v5480 = vadd.s32 %v5479, %v5477
  %vm5481 = vcmp.eq.s32.totalorder %v1973, %v5480
  %v5482 = vlaneseq
  %v5483 = vshrl.u32 %v5482, 7
  %v5484 = vsub.s32 %v1973, %v5483
  %v5485 = vrot.slane %v4875, %v5484
  %v5486 = vlaneseq
  %v5487 = vshrl.u32 %v5486, 7
  %v5488 = vsub.s32 %v1973, %v5487
  %v5489 = vrot.slane %v4890, %v5488
  %v5490 = vsel %vm459, %v5489, %v5485
  %v5491 = vsel %vm5481, %v5490, 0
  %v5492 = vsel %vm5407, %v5491, 0
  %v5493 = vand.u32 %v5492, 65535
  %v5494 = vshrl.u32 %v5492, 16
  %v5495 = vcvt.s32.f32 %v5493
  %v5496 = vcvt.s32.f32 %v5494
  %5497 = vadd.xlane.f32.xlu0 %v5495
  %v5498 = vpop.xlane.xlu0 %5497
  %5499 = vadd.xlane.f32.xlu0 %v5496
  %v5500 = vpop.xlane.xlu0 %5499
  %v5501 = vcvt.f32.s32 %v5498
  %v5502 = vcvt.f32.s32 %v5500
  %v5503 = vshll.u32 %v5502, 16
  %v5504 = vadd.s32 %v5503, %v5501
  %vm5505 = vcmp.eq.s32.totalorder %v1973, %v5504
  %v5506 = vlaneseq
  %v5507 = vshrl.u32 %v5506, 7
  %v5508 = vsub.s32 %v1973, %v5507
  %v5509 = vrot.slane %v4414, %v5508
  %v5510 = vlaneseq
  %v5511 = vshrl.u32 %v5510, 7
  %v5512 = vsub.s32 %v1973, %v5511
  %v5513 = vrot.slane %v4429, %v5512
  %v5514 = vsel %vm459, %v5513, %v5509
  %v5515 = vsel %vm5505, %v5514, 0
  %v5516 = vsel %vm5407, %v5515, 0
  %v5517 = vand.u32 %v5516, 65535
  %v5518 = vshrl.u32 %v5516, 16
  %v5519 = vcvt.s32.f32 %v5517
  %v5520 = vcvt.s32.f32 %v5518
  %5521 = vadd.xlane.f32.xlu0 %v5519
  %v5522 = vpop.xlane.xlu0 %5521
  %5523 = vadd.xlane.f32.xlu0 %v5520
  %v5524 = vpop.xlane.xlu0 %5523
  %v5525 = vcvt.f32.s32 %v5522
  %v5526 = vcvt.f32.s32 %v5524
  %v5527 = vshll.u32 %v5526, 16
  %v5528 = vadd.s32 %v5527, %v5525
  %vm5529 = vcmp.eq.s32.totalorder %v1973, %v5528
  %v5530 = vlaneseq
  %v5531 = vshrl.u32 %v5530, 7
  %v5532 = vsub.s32 %v1973, %v5531
  %v5533 = vrot.slane %v3953, %v5532
  %v5534 = vlaneseq
  %v5535 = vshrl.u32 %v5534, 7
  %v5536 = vsub.s32 %v1973, %v5535
  %v5537 = vrot.slane %v3968, %v5536
  %v5538 = vsel %vm459, %v5537, %v5533
  %v5539 = vsel %vm5529, %v5538, 0
  %v5540 = vsel %vm5407, %v5539, 0
  %v5541 = vand.u32 %v5540, 65535
  %v5542 = vshrl.u32 %v5540, 16
  %v5543 = vcvt.s32.f32 %v5541
  %v5544 = vcvt.s32.f32 %v5542
  %5545 = vadd.xlane.f32.xlu0 %v5543
  %v5546 = vpop.xlane.xlu0 %5545
  %5547 = vadd.xlane.f32.xlu0 %v5544
  %v5548 = vpop.xlane.xlu0 %5547
  %v5549 = vcvt.f32.s32 %v5546
  %v5550 = vcvt.f32.s32 %v5548
  %v5551 = vshll.u32 %v5550, 16
  %v5552 = vadd.s32 %v5551, %v5549
  %vm5553 = vcmp.eq.s32.totalorder %v1973, %v5552
  %v5554 = vlaneseq
  %v5555 = vshrl.u32 %v5554, 7
  %v5556 = vsub.s32 %v1973, %v5555
  %v5557 = vrot.slane %v3492, %v5556
  %v5558 = vlaneseq
  %v5559 = vshrl.u32 %v5558, 7
  %v5560 = vsub.s32 %v1973, %v5559
  %v5561 = vrot.slane %v3507, %v5560
  %v5562 = vsel %vm459, %v5561, %v5557
  %v5563 = vsel %vm5553, %v5562, 0
  %v5564 = vsel %vm5407, %v5563, 0
  %v5565 = vand.u32 %v5564, 65535
  %v5566 = vshrl.u32 %v5564, 16
  %v5567 = vcvt.s32.f32 %v5565
  %v5568 = vcvt.s32.f32 %v5566
  %5569 = vadd.xlane.f32.xlu0 %v5567
  %v5570 = vpop.xlane.xlu0 %5569
  %5571 = vadd.xlane.f32.xlu0 %v5568
  %v5572 = vpop.xlane.xlu0 %5571
  %v5573 = vcvt.f32.s32 %v5570
  %v5574 = vcvt.f32.s32 %v5572
  %v5575 = vshll.u32 %v5574, 16
  %v5576 = vadd.s32 %v5575, %v5573
  %vm5577 = vcmp.eq.s32.totalorder %v1973, %v5576
  %v5578 = vlaneseq
  %v5579 = vshrl.u32 %v5578, 7
  %v5580 = vsub.s32 %v1973, %v5579
  %v5581 = vrot.slane %v3031, %v5580
  %v5582 = vlaneseq
  %v5583 = vshrl.u32 %v5582, 7
  %v5584 = vsub.s32 %v1973, %v5583
  %v5585 = vrot.slane %v3046, %v5584
  %v5586 = vsel %vm459, %v5585, %v5581
  %v5587 = vsel %vm5577, %v5586, 0
  %v5588 = vsel %vm5407, %v5587, 0
  %v5589 = vand.u32 %v5588, 65535
  %v5590 = vshrl.u32 %v5588, 16
  %v5591 = vcvt.s32.f32 %v5589
  %v5592 = vcvt.s32.f32 %v5590
  %5593 = vadd.xlane.f32.xlu0 %v5591
  %v5594 = vpop.xlane.xlu0 %5593
  %5595 = vadd.xlane.f32.xlu0 %v5592
  %v5596 = vpop.xlane.xlu0 %5595
  %v5597 = vcvt.f32.s32 %v5594
  %v5598 = vcvt.f32.s32 %v5596
  %v5599 = vshll.u32 %v5598, 16
  %v5600 = vadd.s32 %v5599, %v5597
  %vm5601 = vcmp.eq.s32.totalorder %v1973, %v5600
  %v5602 = vlaneseq
  %v5603 = vshrl.u32 %v5602, 7
  %v5604 = vsub.s32 %v1973, %v5603
  %v5605 = vrot.slane %v2570, %v5604
  %v5606 = vlaneseq
  %v5607 = vshrl.u32 %v5606, 7
  %v5608 = vsub.s32 %v1973, %v5607
  %v5609 = vrot.slane %v2585, %v5608
  %v5610 = vsel %vm459, %v5609, %v5605
  %v5611 = vsel %vm5601, %v5610, 0
  %v5612 = vsel %vm5407, %v5611, 0
  %v5613 = vand.u32 %v5612, 65535
  %v5614 = vshrl.u32 %v5612, 16
  %v5615 = vcvt.s32.f32 %v5613
  %v5616 = vcvt.s32.f32 %v5614
  %5617 = vadd.xlane.f32.xlu0 %v5615
  %v5618 = vpop.xlane.xlu0 %5617
  %5619 = vadd.xlane.f32.xlu0 %v5616
  %v5620 = vpop.xlane.xlu0 %5619
  %v5621 = vcvt.f32.s32 %v5618
  %v5622 = vcvt.f32.s32 %v5620
  %v5623 = vshll.u32 %v5622, 16
  %v5624 = vadd.s32 %v5623, %v5621
  %vm5625 = vcmp.eq.s32.totalorder %v1973, %v5624
  %v5626 = vlaneseq
  %v5627 = vshrl.u32 %v5626, 7
  %v5628 = vsub.s32 %v1973, %v5627
  %v5629 = vrot.slane %v2035, %v5628
  %v5630 = vlaneseq
  %v5631 = vshrl.u32 %v5630, 7
  %v5632 = vsub.s32 %v1973, %v5631
  %v5633 = vrot.slane %v2050, %v5632
  %v5634 = vsel %vm459, %v5633, %v5629
  %v5635 = vsel %vm5625, %v5634, 0
  %v5636 = vsel %vm5407, %v5635, 0
  %v5637 = vand.u32 %v5636, 65535
  %v5638 = vshrl.u32 %v5636, 16
  %v5639 = vcvt.s32.f32 %v5637
  %v5640 = vcvt.s32.f32 %v5638
  %5641 = vadd.xlane.f32.xlu0 %v5639
  %v5642 = vpop.xlane.xlu0 %5641
  %5643 = vadd.xlane.f32.xlu0 %v5640
  %v5644 = vpop.xlane.xlu0 %5643
  %v5645 = vcvt.f32.s32 %v5642
  %v5646 = vcvt.f32.s32 %v5644
  %v5647 = vshll.u32 %v5646, 16
  %v5648 = vadd.s32 %v5647, %v5645
  %vm5649 = vcmask 7168
  %v5650 = vsel %vm5649, %v5648, %v5624
  %vm5651 = vcmask 15360
  %v5652 = vsel %vm5651, %v5650, %v5600
  %vm5653 = vcmask 23552
  %v5654 = vsel %vm5653, %v5652, %v5576
  %vm5655 = vcmask 31744
  %v5656 = vsel %vm5655, %v5654, %v5552
  %vm5657 = vcmask 39936
  %v5658 = vsel %vm5657, %v5656, %v5528
  %vm5659 = vcmask 48128
  %v5660 = vsel %vm5659, %v5658, %v5504
  %vm5661 = vcmask 56320
  %v5662 = vsel %vm5661, %v5660, %v5480
  %v5663 = vsel %vm2010, %v5662, %v5456
  %vm5664 = vcmask 66560
  %5665 = vst.msk [vmem:[%s15] sm:$0x3] %vm5664, %v5663
  // Predicated region
  $region58: #{bilstm_crf_forward.1} parent=0 // pred_check
    _
  $region59: #{bilstm_crf_forward.1} parent=0 // pred_check_branch
    %5667 = sbr.rel (0) target = $region61
  $region60: #{bilstm_crf_forward.1} parent=0 // pred_region
    _
  $region61: #{bilstm_crf_forward.1} parent=0 // pred_fallthru
    _
  // Predicated region
  $region62: #{bilstm_crf_forward.1} parent=0 // pred_check
    _
  $region63: #{bilstm_crf_forward.1} parent=0 // pred_check_branch
    %5669 = sbr.rel (0) target = $region65
  $region64: #{bilstm_crf_forward.1} parent=0 // pred_region
    _
  $region65: #{bilstm_crf_forward.1} parent=0 // pred_fallthru
    _
  // Predicated region
  $region66: #{bilstm_crf_forward.1} parent=0 // pred_check
    _
  $region67: #{bilstm_crf_forward.1} parent=0 // pred_check_branch
    %5671 = sbr.rel (0) target = $region69
  $region68: #{bilstm_crf_forward.1} parent=0 // pred_region
    _
  $region69: #{bilstm_crf_forward.1} parent=0 // pred_fallthru
    _
  // Predicated region
  $region70: #{bilstm_crf_forward.1} parent=0 // pred_check
    _
  $region71: #{bilstm_crf_forward.1} parent=0 // pred_check_branch
    %5673 = sbr.rel (0) target = $region73
  $region72: #{bilstm_crf_forward.1} parent=0 // pred_region
    _
  $region73: #{bilstm_crf_forward.1} parent=0 // pred_fallthru
    _

</llo_original>
